<compile_context>
chip_gen: v7x
topology: tpu7x:2x2x1
jax: 0.10.0
libtpu: 0.0.40
codegen_flags: <defaults>
</compile_context>

<pallas_src>
import functools

import jax
import jax.numpy as jnp
import numpy as np
from jax import lax
from jax.experimental import pallas as pl
from jax.experimental.pallas import tpu as pltpu

_TM = 256                              # output-row tile (tiled / streaming path)
_TK = 512                              # source-node (reduction) tile for streaming A
_VMEM_LIMIT = 48 * 1024 * 1024         # scoped-VMEM limit, safe on v5e/v6e/v7x
_FUSED_VMEM_BUDGET = 24 * 1024 * 1024  # below this footprint -> single fused kernel


def _round_up(v, m):
    return (v + m - 1) // m * m


def _pad_to(x, shape):
    return jnp.pad(x, [(0, s - d) for d, s in zip(x.shape, shape)])


# ----------------------------------------------------------------------------
# Fused single-call kernel (small / medium graphs: everything lives in VMEM)
# ----------------------------------------------------------------------------
def fused_kernel(x_ref, a1_ref, a2_ref, w1_ref, b1_ref,
                 wf1_ref, bk1_ref, wf2_ref, bk2_ref, wf3_ref, bk3_ref,
                 wh0_ref, wh1_ref, wh2_ref, wh3_ref, bsum_ref, out_ref, *, hp):
    f32 = jnp.float32

    # R0 = relu(X @ W1 + b1)
    r0 = jnp.maximum(
        jnp.dot(x_ref[...], w1_ref[...], preferred_element_type=f32)
        + b1_ref[...], 0.0)

    def hop(r_prev, wf_ref, bk_ref):
        # one wide fused feature transform, then one propagation per graph
        t = jnp.dot(r_prev, wf_ref[...], preferred_element_type=f32)
        t1 = t[:, :hp].astype(a1_ref.dtype)
        t2 = t[:, hp:].astype(a2_ref.dtype)
        p1 = jnp.dot(a1_ref[...], t1, preferred_element_type=f32)
        p2 = jnp.dot(a2_ref[...], t2, preferred_element_type=f32)
        return jnp.concatenate([p1, p2], axis=-1) + bk_ref[...]

    r1 = hop(r0, wf1_ref, bk1_ref)
    r2 = hop(r1, wf2_ref, bk2_ref)
    r3 = hop(r2, wf3_ref, bk3_ref)

    # residual heads: wmix and head biases folded into (8, D) weights (row 0 real),
    # computed as W x R^T so the output is a lane-dense (1, N) row.
    nt = (((1,), (1,)), ((), ()))
    acc = (lax.dot_general(wh0_ref[...], r0, nt, preferred_element_type=f32)
           + lax.dot_general(wh1_ref[...], r1, nt, preferred_element_type=f32)
           + lax.dot_general(wh2_ref[...], r2, nt, preferred_element_type=f32)
           + lax.dot_general(wh3_ref[...], r3, nt, preferred_element_type=f32))
    out_ref[...] = acc[0:1, :] + bsum_ref[...]


# ----------------------------------------------------------------------------
# Tiled / streaming kernels (large graphs)
# ----------------------------------------------------------------------------
def linear_relu_kernel(x_ref, w_ref, b_ref, out_ref):
    # R0 = relu(x @ W1 + b1) for one row tile.
    out_ref[...] = jnp.maximum(
        jnp.dot(x_ref[...], w_ref[...], preferred_element_type=jnp.float32)
        + b_ref[...], 0.0)


def transform_kernel(h_ref, w_ref, t1_ref, t2_ref, *, hp):
    # Fused per-hop feature transform: ONE wide (Dprev, 2*HP) matmul; the two
    # halves are emitted as bf16 operands for the A @ T propagations.
    t = jnp.dot(h_ref[...], w_ref[...], preferred_element_type=jnp.float32)
    t1_ref[...] = t[:, :hp].astype(t1_ref.dtype)
    t2_ref[...] = t[:, hp:].astype(t2_ref.dtype)


def propagate_kernel(a1_ref, a2_ref, t1_ref, t2_ref, b1_ref, b2_ref,
                     out_ref, acc1_ref, acc2_ref, *, hp, tk):
    # H[i] = [ A1[i,:] @ T1 | A2[i,:] @ T2 ] + bias, accumulated over source
    # tiles (grid axis 1).  A tiles stream from HBM in bf16; T1/T2 are
    # VMEM-resident (constant-index BlockSpec) and sliced per k; acc is f32.
    k = pl.program_id(1)

    @pl.when(k == 0)
    def _():
        acc1_ref[...] = jnp.zeros_like(acc1_ref)
        acc2_ref[...] = jnp.zeros_like(acc2_ref)

    off = pl.multiple_of(k * tk, tk)
    acc1_ref[...] += jnp.dot(a1_ref[...], t1_ref[pl.ds(off, tk), :],
                             preferred_element_type=jnp.float32)
    acc2_ref[...] += jnp.dot(a2_ref[...], t2_ref[pl.ds(off, tk), :],
                             preferred_element_type=jnp.float32)

    @pl.when(k == pl.num_programs(1) - 1)
    def _():
        # two half-writes instead of a lane concat
        out_ref[:, :hp] = acc1_ref[...] + b1_ref[...]
        out_ref[:, hp:] = acc2_ref[...] + b2_ref[...]


def heads_kernel(r0_ref, r1_ref, r2_ref, r3_ref,
                 wh0_ref, wh1_ref, wh2_ref, wh3_ref, bsum_ref, out_ref):
    # out = sum_k wmix_k * (R_k @ wr_k + br_k), with wmix/biases pre-folded into
    # the weights.  Computed as (8, D) x (TM, D)^T (row 0 holds the real
    # weights) so the result is written lane-dense as a (1, TM) row block.
    nt_dims = (((1,), (1,)), ((), ()))

    def head(w_ref, r_ref):
        return lax.dot_general(w_ref[...], r_ref[...], nt_dims,
                               preferred_element_type=jnp.float32)

    acc = (head(wh0_ref, r0_ref) + head(wh1_ref, r1_ref)
           + head(wh2_ref, r2_ref) + head(wh3_ref, r3_ref))
    out_ref[...] = acc[0:1, :] + bsum_ref[...]


# ----------------------------------------------------------------------------
# Glue: dense GCN normalization (torch_geometric gcn_norm, add_self_loops=False)
# ----------------------------------------------------------------------------
def dense_gcn_adj(edge_index, num_nodes):
    row, col = edge_index[0], edge_index[1]                     # (source, target)
    a = jnp.zeros((num_nodes, num_nodes), jnp.float32).at[col, row].add(1.0)
    deg = a.sum(axis=1)                                         # in-degree at tgt
    dinv = jnp.where(deg > 0, lax.rsqrt(deg), 0.0)
    return dinv[:, None] * a * dinv[None, :]                    # A_hat[tgt, src]


# ----------------------------------------------------------------------------
# Forward wrapper: weight fusion / padding + path selection
# ----------------------------------------------------------------------------
@functools.partial(jax.jit, static_argnames=("hid", "force_tiled"))
def hgdc_forward(x, a1, a2, p, *, hid, force_tiled=False):
    f32, bf16 = jnp.float32, jnp.bfloat16
    n, f = x.shape
    h = hid
    hp = _round_up(hid, 64)            # pad hidden so 2*HP is a multiple of 128

    # ---- path selection (static at trace time) ------------------------------
    npad_fused = _round_up(n, 128)
    fused_bytes = (4 * npad_fused * npad_fused          # A1 + A2 in bf16
                   + 40 * npad_fused * hp               # R0..R3, T intermediates
                   + 8 * npad_fused * max(f, 1))        # X + slack
    use_fused = (not force_tiled) and fused_bytes <= _FUSED_VMEM_BUDGET
    npad = npad_fused if use_fused else _round_up(n, _TK)

    # ---- fold / pad parameters (wrapper-side, exact: padding is all-zero) ----
    w1p = _pad_to(p["w1"], (f, hp))
    b1p = _pad_to(p["b1"], (1, hp))

    wf1 = jnp.zeros((hp, 2 * hp), f32)
    wf1 = wf1.at[:h, :h].set(p["wk11"]).at[:h, hp:hp + h].set(p["wk12"])

    def fuse2(wa, wb):
        # two GCNConv(2H->H) weights acting on cat(Ra, Rb) -> one (2HP,2HP) block weight
        w = jnp.zeros((2 * hp, 2 * hp), f32)
        w = w.at[:h, :h].set(wa[:h]).at[hp:hp + h, :h].set(wa[h:])
        w = w.at[:h, hp:hp + h].set(wb[:h]).at[hp:hp + h, hp:hp + h].set(wb[h:])
        return w

    wf2 = fuse2(p["wk21"], p["wk22"])
    wf3 = fuse2(p["wk31"], p["wk32"])

    bk1a, bk1b = _pad_to(p["bk11"], (1, hp)), _pad_to(p["bk12"], (1, hp))
    bk2a, bk2b = _pad_to(p["bk21"], (1, hp)), _pad_to(p["bk22"], (1, hp))
    bk3a, bk3b = _pad_to(p["bk31"], (1, hp)), _pad_to(p["bk32"], (1, hp))

    wmix = p["wmix"]

    def head_w(wr, m, split):
        w = jnp.zeros((8, 2 * hp if split else hp), f32)
        if split:
            w = w.at[0, :h].set(wr[:h, 0] * m).at[0, hp:hp + h].set(wr[h:, 0] * m)
        else:
            w = w.at[0, :h].set(wr[:, 0] * m)
        return w

    wh0 = head_w(p["wr0"], wmix[0], False)
    wh1 = head_w(p["wr1"], wmix[1], True)
    wh2 = head_w(p["wr2"], wmix[2], True)
    wh3 = head_w(p["wr3"], wmix[3], True)
    bsum = (wmix[0] * p["br0"][0, 0] + wmix[1] * p["br1"][0, 0]
            + wmix[2] * p["br2"][0, 0] + wmix[3] * p["br3"][0, 0]).reshape(1, 1)

    # ---- pad node dim; cast dense adjacencies to bf16 (f32 accumulation) ----
    xp = _pad_to(x, (npad, f))
    a1p = _pad_to(a1, (npad, npad)).astype(bf16)
    a2p = _pad_to(a2, (npad, npad)).astype(bf16)

    # ---------------------------- fused path ---------------------------------
    if use_fused:
        bk1 = jnp.concatenate([bk1a, bk1b], axis=1)
        bk2 = jnp.concatenate([bk2a, bk2b], axis=1)
        bk3 = jnp.concatenate([bk3a, bk3b], axis=1)
        vmem = pl.BlockSpec(memory_space=pltpu.MemorySpace.VMEM)
        out_row = pl.pallas_call(
            functools.partial(fused_kernel, hp=hp),
            out_shape=jax.ShapeDtypeStruct((1, npad), f32),
            in_specs=[vmem] * 16,
            out_specs=vmem,
            compiler_params=pltpu.CompilerParams(vmem_limit_bytes=_VMEM_LIMIT),
        )(xp, a1p, a2p, w1p, b1p, wf1, bk1, wf2, bk2, wf3, bk3,
          wh0, wh1, wh2, wh3, bsum)
        return out_row[0, :n].reshape(n, 1)

    # ---------------------------- tiled path ---------------------------------
    tm, tk = _TM, _TK
    ntiles_m = npad // tm
    ntiles_k = npad // tk

    cp_rows = pltpu.CompilerParams(dimension_semantics=("parallel",),
                                   vmem_limit_bytes=_VMEM_LIMIT)
    cp_prop = pltpu.CompilerParams(dimension_semantics=("parallel", "arbitrary"),
                                   vmem_limit_bytes=_VMEM_LIMIT)

    row = lambda i: (i, 0)
    rep = lambda i: (0, 0)

    # 1) R0 = relu(x @ W1 + b1)
    r0 = pl.pallas_call(
        linear_relu_kernel,
        out_shape=jax.ShapeDtypeStruct((npad, hp), f32),
        grid=(ntiles_m,),
        in_specs=[pl.BlockSpec((tm, f), row),
                  pl.BlockSpec((f, hp), rep),
                  pl.BlockSpec((1, hp), rep)],
        out_specs=pl.BlockSpec((tm, hp), row),
        compiler_params=cp_rows,
    )(xp, w1p, b1p)

    def transform(h_prev, w_fused):
        d_prev = h_prev.shape[1]
        return pl.pallas_call(
            functools.partial(transform_kernel, hp=hp),
            out_shape=(jax.ShapeDtypeStruct((npad, hp), bf16),
                       jax.ShapeDtypeStruct((npad, hp), bf16)),
            grid=(ntiles_m,),
            in_specs=[pl.BlockSpec((tm, d_prev), row),
                      pl.BlockSpec((d_prev, 2 * hp), rep)],
            out_specs=(pl.BlockSpec((tm, hp), row),
                       pl.BlockSpec((tm, hp), row)),
            compiler_params=cp_rows,
        )(h_prev, w_fused)

    def propagate(t1, t2, ba, bb):
        return pl.pallas_call(
            functools.partial(propagate_kernel, hp=hp, tk=tk),
            out_shape=jax.ShapeDtypeStruct((npad, 2 * hp), f32),
            grid=(ntiles_m, ntiles_k),
            in_specs=[pl.BlockSpec((tm, tk), lambda i, k: (i, k)),
                      pl.BlockSpec((tm, tk), lambda i, k: (i, k)),
                      # T1/T2 VMEM-resident: constant block index -> DMA'd once
                      pl.BlockSpec((npad, hp), lambda i, k: (0, 0)),
                      pl.BlockSpec((npad, hp), lambda i, k: (0, 0)),
                      pl.BlockSpec((1, hp), lambda i, k: (0, 0)),
                      pl.BlockSpec((1, hp), lambda i, k: (0, 0))],
            out_specs=pl.BlockSpec((tm, 2 * hp), lambda i, k: (i, 0)),
            scratch_shapes=[pltpu.VMEM((tm, hp), f32),
                            pltpu.VMEM((tm, hp), f32)],
            compiler_params=cp_prop,
        )(a1p, a2p, t1, t2, ba, bb)

    # hops 1..3: GCNConv on each graph, with cat() folded into fused weights
    t1a, t1b = transform(r0, wf1)
    r1 = propagate(t1a, t1b, bk1a, bk1b)        # [ R_k1_1 | pad | R_k1_2 | pad ]
    t2a, t2b = transform(r1, wf2)
    r2 = propagate(t2a, t2b, bk2a, bk2b)
    t3a, t3b = transform(r2, wf3)
    r3 = propagate(t3a, t3b, bk3a, bk3b)

    # residual heads (wmix + biases folded into weights), lane-dense (1, N) output
    out_row = pl.pallas_call(
        heads_kernel,
        out_shape=jax.ShapeDtypeStruct((1, npad), f32),
        grid=(ntiles_m,),
        in_specs=[pl.BlockSpec((tm, hp), row),
                  pl.BlockSpec((tm, 2 * hp), row),
                  pl.BlockSpec((tm, 2 * hp), row),
                  pl.BlockSpec((tm, 2 * hp), row),
                  pl.BlockSpec((8, hp), rep),
                  pl.BlockSpec((8, 2 * hp), rep),
                  pl.BlockSpec((8, 2 * hp), rep),
                  pl.BlockSpec((8, 2 * hp), rep),
                  pl.BlockSpec((1, 1), rep)],
        out_specs=pl.BlockSpec((1, tm), lambda i: (0, i)),
        compiler_params=cp_rows,
    )(r0, r1, r2, r3, wh0, wh1, wh2, wh3, bsum)

    return out_row[0, :n].reshape(n, 1)


# ----------------------------------------------------------------------------
# Pure-JAX f32 reference (mirrors the PyTorch forward, eval mode)
# ----------------------------------------------------------------------------
def ref_forward(x, a1, a2, p):
    def gcn(a, hfeat, w, b):
        return a @ (hfeat @ w) + b

    r0 = jnp.maximum(x @ p["w1"] + p["b1"], 0.0)
    rk11 = gcn(a1, r0, p["wk11"], p["bk11"])
    rk12 = gcn(a2, r0, p["wk12"], p["bk12"])
    r1 = jnp.concatenate([rk11, rk12], axis=1)
    rk21 = gcn(a1, r1, p["wk21"], p["bk21"])
    rk22 = gcn(a2, r1, p["wk22"], p["bk22"])
    r2 = jnp.concatenate([rk21, rk22], axis=1)
    rk31 = gcn(a1, r2, p["wk31"], p["bk31"])
    rk32 = gcn(a2, r2, p["wk32"], p["bk32"])
    r3 = jnp.concatenate([rk31, rk32], axis=1)
    res0 = r0 @ p["wr0"] + p["br0"]
    res1 = r1 @ p["wr1"] + p["br1"]
    res2 = r2 @ p["wr2"] + p["br2"]
    res3 = r3 @ p["wr3"] + p["br3"]
    w = p["wmix"]
    return res0 * w[0] + res1 * w[1] + res2 * w[2] + res3 * w[3]


def init_linear(key, fan_in, fan_out):
    k1, k2 = jax.random.split(key)
    w = jax.random.normal(k1, (fan_in, fan_out), jnp.float32) / jnp.sqrt(float(fan_in))
    b = jax.random.normal(k2, (1, fan_out), jnp.float32) * 0.01
    return w, b


if __name__ == "__main__":
    # small shapes consistent with HGDCNet(input_dim=16, hid_dim=32); N is
    # deliberately NOT a multiple of the 128 tile to exercise node padding.
    N, IN_DIM, HID = 200, 16, 32
    E1, E2 = 800, 600

    key = jax.random.PRNGKey(0)
    keys = jax.random.split(key, 20)

    x = jax.random.normal(keys[0], (N, IN_DIM), jnp.float32)
    edge_index_1 = jax.random.randint(keys[1], (2, E1), 0, N)
    edge_index_2 = jax.random.randint(keys[2], (2, E2), 0, N)
    a1 = dense_gcn_adj(edge_index_1, N)
    a2 = dense_gcn_adj(edge_index_2, N)

    p = {}
    p["w1"], p["b1"] = init_linear(keys[3], IN_DIM, HID)        # linear1
    p["wk11"], p["bk11"] = init_linear(keys[4], HID, HID)       # conv_k1_1
    p["wk12"], p["bk12"] = init_linear(keys[5], HID, HID)       # conv_k1_2
    p["wk21"], p["bk21"] = init_linear(keys[6], 2 * HID, HID)   # conv_k2_1
    p["wk22"], p["bk22"] = init_linear(keys[7], 2 * HID, HID)   # conv_k2_2
    p["wk31"], p["bk31"] = init_linear(keys[8], 2 * HID, HID)   # conv_k3_1
    p["wk32"], p["bk32"] = init_linear(keys[9], 2 * HID, HID)   # conv_k3_2
    p["wr0"], p["br0"] = init_linear(keys[10], HID, 1)          # linear_r0
    p["wr1"], p["br1"] = init_linear(keys[11], 2 * HID, 1)      # linear_r1
    p["wr2"], p["br2"] = init_linear(keys[12], 2 * HID, 1)      # linear_r2
    p["wr3"], p["br3"] = init_linear(keys[13], 2 * HID, 1)      # linear_r3
    p["wmix"] = jnp.array([0.95, 0.9, 0.15, 0.1], jnp.float32)  # weight_r0..r3

    ref = ref_forward(x, a1, a2, p)

    # Fused single-kernel path (selected automatically at this small shape).
    out = hgdc_forward(x, a1, a2, p, hid=HID)
    out = jax.block_until_ready(out)
    assert out.shape == (N, 1)
    # bf16 adjacencies / propagation operands (f32 accumulation) => compare with
    # a tolerance that covers the intentional mixed precision.
    np.testing.assert_allclose(np.asarray(out), np.asarray(ref), rtol=5e-2, atol=5e-2)

    # Tiled / streaming path (used for large graphs) exercised at the same shape.
    out_t = hgdc_forward(x, a1, a2, p, hid=HID, force_tiled=True)
    out_t = jax.block_until_ready(out_t)
    assert out_t.shape == (N, 1)
    np.testing.assert_allclose(np.asarray(out_t), np.asarray(ref), rtol=5e-2, atol=5e-2)

    print("KERNEL_OK")
</pallas_src>

<mosaic_0001>
module attributes {stable_mosaic.version = 11 : i64} {
  func.func @fused_kernel(%arg0: memref<256x16xf32, #tpu.memory_space<vmem>>, %arg1: memref<256x256xbf16, #tpu.memory_space<vmem>>, %arg2: memref<256x256xbf16, #tpu.memory_space<vmem>>, %arg3: memref<16x64xf32, #tpu.memory_space<vmem>>, %arg4: memref<1x64xf32, #tpu.memory_space<vmem>>, %arg5: memref<64x128xf32, #tpu.memory_space<vmem>>, %arg6: memref<1x128xf32, #tpu.memory_space<vmem>>, %arg7: memref<128x128xf32, #tpu.memory_space<vmem>>, %arg8: memref<1x128xf32, #tpu.memory_space<vmem>>, %arg9: memref<128x128xf32, #tpu.memory_space<vmem>>, %arg10: memref<1x128xf32, #tpu.memory_space<vmem>>, %arg11: memref<8x64xf32, #tpu.memory_space<vmem>>, %arg12: memref<8x128xf32, #tpu.memory_space<vmem>>, %arg13: memref<8x128xf32, #tpu.memory_space<vmem>>, %arg14: memref<8x128xf32, #tpu.memory_space<vmem>>, %arg15: memref<1x1xf32, #tpu.memory_space<vmem>>, %arg16: memref<1x256xf32, #tpu.memory_space<vmem>>) attributes {dimension_semantics = [], scalar_prefetch = 0 : i64, scratch_operands = 0 : i64, tpu.core_type = #tpu.core_type<tc>} {
    %c0 = arith.constant 0 : index
    %c0_0 = arith.constant 0 : index
    %0 = vector.load %arg0[%c0, %c0_0] : memref<256x16xf32, #tpu.memory_space<vmem>>, vector<256x16xf32>
    %c0_1 = arith.constant 0 : index
    %c0_2 = arith.constant 0 : index
    %1 = vector.load %arg3[%c0_1, %c0_2] : memref<16x64xf32, #tpu.memory_space<vmem>>, vector<16x64xf32>
    %cst = arith.constant dense<0.000000e+00> : vector<256x64xf32>
    %2 = tpu.matmul %0, %1, %cst {dimension_numbers = #tpu.dot_dimension_numbers<[1], [0], [0], [1], [0, 0, 1, 1], [], []>} : vector<256x16xf32>, vector<16x64xf32>, vector<256x64xf32> -> vector<256x64xf32>
    %c0_3 = arith.constant 0 : index
    %c0_4 = arith.constant 0 : index
    %3 = vector.load %arg4[%c0_3, %c0_4] : memref<1x64xf32, #tpu.memory_space<vmem>>, vector<1x64xf32>
    %4 = vector.broadcast %3 : vector<1x64xf32> to vector<256x64xf32>
    %5 = arith.addf %2, %4 : vector<256x64xf32>
    %cst_5 = arith.constant 0.000000e+00 : f32
    %6 = vector.broadcast %cst_5 : f32 to vector<256x64xf32>
    %7 = arith.maximumf %5, %6 : vector<256x64xf32>
    %c0_6 = arith.constant 0 : index
    %c0_7 = arith.constant 0 : index
    %8 = vector.load %arg5[%c0_6, %c0_7] : memref<64x128xf32, #tpu.memory_space<vmem>>, vector<64x128xf32>
    %cst_8 = arith.constant dense<0.000000e+00> : vector<256x128xf32>
    %9 = tpu.matmul %7, %8, %cst_8 {dimension_numbers = #tpu.dot_dimension_numbers<[1], [0], [0], [1], [0, 0, 1, 1], [], []>} : vector<256x64xf32>, vector<64x128xf32>, vector<256x128xf32> -> vector<256x128xf32>
    %10 = vector.extract_strided_slice %9 {offsets = [0, 0], sizes = [256, 64], strides = [1, 1]} : vector<256x128xf32> to vector<256x64xf32>
    %11 = arith.truncf %10 : vector<256x64xf32> to vector<256x64xbf16>
    %12 = vector.extract_strided_slice %9 {offsets = [0, 64], sizes = [256, 64], strides = [1, 1]} : vector<256x128xf32> to vector<256x64xf32>
    %13 = arith.truncf %12 : vector<256x64xf32> to vector<256x64xbf16>
    %c0_9 = arith.constant 0 : index
    %c0_10 = arith.constant 0 : index
    %14 = vector.load %arg1[%c0_9, %c0_10] : memref<256x256xbf16, #tpu.memory_space<vmem>>, vector<256x256xbf16>
    %cst_11 = arith.constant dense<0.000000e+00> : vector<256x64xf32>
    %15 = tpu.matmul %14, %11, %cst_11 {dimension_numbers = #tpu.dot_dimension_numbers<[1], [0], [0], [1], [0, 0, 1, 1], [], []>} : vector<256x256xbf16>, vector<256x64xbf16>, vector<256x64xf32> -> vector<256x64xf32>
    %c0_12 = arith.constant 0 : index
    %c0_13 = arith.constant 0 : index
    %16 = vector.load %arg2[%c0_12, %c0_13] : memref<256x256xbf16, #tpu.memory_space<vmem>>, vector<256x256xbf16>
    %cst_14 = arith.constant dense<0.000000e+00> : vector<256x64xf32>
    %17 = tpu.matmul %16, %13, %cst_14 {dimension_numbers = #tpu.dot_dimension_numbers<[1], [0], [0], [1], [0, 0, 1, 1], [], []>} : vector<256x256xbf16>, vector<256x64xbf16>, vector<256x64xf32> -> vector<256x64xf32>
    %18 = tpu.concatenate %15, %17 in 1 : vector<256x64xf32>, vector<256x64xf32> -> vector<256x128xf32>
    %c0_15 = arith.constant 0 : index
    %c0_16 = arith.constant 0 : index
    %19 = vector.load %arg6[%c0_15, %c0_16] : memref<1x128xf32, #tpu.memory_space<vmem>>, vector<1x128xf32>
    %20 = vector.broadcast %19 : vector<1x128xf32> to vector<256x128xf32>
    %21 = arith.addf %18, %20 : vector<256x128xf32>
    %c0_17 = arith.constant 0 : index
    %c0_18 = arith.constant 0 : index
    %22 = vector.load %arg7[%c0_17, %c0_18] : memref<128x128xf32, #tpu.memory_space<vmem>>, vector<128x128xf32>
    %cst_19 = arith.constant dense<0.000000e+00> : vector<256x128xf32>
    %23 = tpu.matmul %21, %22, %cst_19 {dimension_numbers = #tpu.dot_dimension_numbers<[1], [0], [0], [1], [0, 0, 1, 1], [], []>} : vector<256x128xf32>, vector<128x128xf32>, vector<256x128xf32> -> vector<256x128xf32>
    %24 = vector.extract_strided_slice %23 {offsets = [0, 0], sizes = [256, 64], strides = [1, 1]} : vector<256x128xf32> to vector<256x64xf32>
    %25 = arith.truncf %24 : vector<256x64xf32> to vector<256x64xbf16>
    %26 = vector.extract_strided_slice %23 {offsets = [0, 64], sizes = [256, 64], strides = [1, 1]} : vector<256x128xf32> to vector<256x64xf32>
    %27 = arith.truncf %26 : vector<256x64xf32> to vector<256x64xbf16>
    %c0_20 = arith.constant 0 : index
    %c0_21 = arith.constant 0 : index
    %28 = vector.load %arg1[%c0_20, %c0_21] : memref<256x256xbf16, #tpu.memory_space<vmem>>, vector<256x256xbf16>
    %cst_22 = arith.constant dense<0.000000e+00> : vector<256x64xf32>
    %29 = tpu.matmul %28, %25, %cst_22 {dimension_numbers = #tpu.dot_dimension_numbers<[1], [0], [0], [1], [0, 0, 1, 1], [], []>} : vector<256x256xbf16>, vector<256x64xbf16>, vector<256x64xf32> -> vector<256x64xf32>
    %c0_23 = arith.constant 0 : index
    %c0_24 = arith.constant 0 : index
    %30 = vector.load %arg2[%c0_23, %c0_24] : memref<256x256xbf16, #tpu.memory_space<vmem>>, vector<256x256xbf16>
    %cst_25 = arith.constant dense<0.000000e+00> : vector<256x64xf32>
    %31 = tpu.matmul %30, %27, %cst_25 {dimension_numbers = #tpu.dot_dimension_numbers<[1], [0], [0], [1], [0, 0, 1, 1], [], []>} : vector<256x256xbf16>, vector<256x64xbf16>, vector<256x64xf32> -> vector<256x64xf32>
    %32 = tpu.concatenate %29, %31 in 1 : vector<256x64xf32>, vector<256x64xf32> -> vector<256x128xf32>
    %c0_26 = arith.constant 0 : index
    %c0_27 = arith.constant 0 : index
    %33 = vector.load %arg8[%c0_26, %c0_27] : memref<1x128xf32, #tpu.memory_space<vmem>>, vector<1x128xf32>
    %34 = vector.broadcast %33 : vector<1x128xf32> to vector<256x128xf32>
    %35 = arith.addf %32, %34 : vector<256x128xf32>
    %c0_28 = arith.constant 0 : index
    %c0_29 = arith.constant 0 : index
    %36 = vector.load %arg9[%c0_28, %c0_29] : memref<128x128xf32, #tpu.memory_space<vmem>>, vector<128x128xf32>
    %cst_30 = arith.constant dense<0.000000e+00> : vector<256x128xf32>
    %37 = tpu.matmul %35, %36, %cst_30 {dimension_numbers = #tpu.dot_dimension_numbers<[1], [0], [0], [1], [0, 0, 1, 1], [], []>} : vector<256x128xf32>, vector<128x128xf32>, vector<256x128xf32> -> vector<256x128xf32>
    %38 = vector.extract_strided_slice %37 {offsets = [0, 0], sizes = [256, 64], strides = [1, 1]} : vector<256x128xf32> to vector<256x64xf32>
    %39 = arith.truncf %38 : vector<256x64xf32> to vector<256x64xbf16>
    %40 = vector.extract_strided_slice %37 {offsets = [0, 64], sizes = [256, 64], strides = [1, 1]} : vector<256x128xf32> to vector<256x64xf32>
    %41 = arith.truncf %40 : vector<256x64xf32> to vector<256x64xbf16>
    %c0_31 = arith.constant 0 : index
    %c0_32 = arith.constant 0 : index
    %42 = vector.load %arg1[%c0_31, %c0_32] : memref<256x256xbf16, #tpu.memory_space<vmem>>, vector<256x256xbf16>
    %cst_33 = arith.constant dense<0.000000e+00> : vector<256x64xf32>
    %43 = tpu.matmul %42, %39, %cst_33 {dimension_numbers = #tpu.dot_dimension_numbers<[1], [0], [0], [1], [0, 0, 1, 1], [], []>} : vector<256x256xbf16>, vector<256x64xbf16>, vector<256x64xf32> -> vector<256x64xf32>
    %c0_34 = arith.constant 0 : index
    %c0_35 = arith.constant 0 : index
    %44 = vector.load %arg2[%c0_34, %c0_35] : memref<256x256xbf16, #tpu.memory_space<vmem>>, vector<256x256xbf16>
    %cst_36 = arith.constant dense<0.000000e+00> : vector<256x64xf32>
    %45 = tpu.matmul %44, %41, %cst_36 {dimension_numbers = #tpu.dot_dimension_numbers<[1], [0], [0], [1], [0, 0, 1, 1], [], []>} : vector<256x256xbf16>, vector<256x64xbf16>, vector<256x64xf32> -> vector<256x64xf32>
    %46 = tpu.concatenate %43, %45 in 1 : vector<256x64xf32>, vector<256x64xf32> -> vector<256x128xf32>
    %c0_37 = arith.constant 0 : index
    %c0_38 = arith.constant 0 : index
    %47 = vector.load %arg10[%c0_37, %c0_38] : memref<1x128xf32, #tpu.memory_space<vmem>>, vector<1x128xf32>
    %48 = vector.broadcast %47 : vector<1x128xf32> to vector<256x128xf32>
    %49 = arith.addf %46, %48 : vector<256x128xf32>
    %c0_39 = arith.constant 0 : index
    %c0_40 = arith.constant 0 : index
    %50 = vector.load %arg11[%c0_39, %c0_40] : memref<8x64xf32, #tpu.memory_space<vmem>>, vector<8x64xf32>
    %cst_41 = arith.constant dense<0.000000e+00> : vector<8x256xf32>
    %51 = tpu.matmul %50, %7, %cst_41 {dimension_numbers = #tpu.dot_dimension_numbers<[1], [1], [0], [0], [0, 0, 1, 0], [], []>} : vector<8x64xf32>, vector<256x64xf32>, vector<8x256xf32> -> vector<8x256xf32>
    %c0_42 = arith.constant 0 : index
    %c0_43 = arith.constant 0 : index
    %52 = vector.load %arg12[%c0_42, %c0_43] : memref<8x128xf32, #tpu.memory_space<vmem>>, vector<8x128xf32>
    %cst_44 = arith.constant dense<0.000000e+00> : vector<8x256xf32>
    %53 = tpu.matmul %52, %21, %cst_44 {dimension_numbers = #tpu.dot_dimension_numbers<[1], [1], [0], [0], [0, 0, 1, 0], [], []>} : vector<8x128xf32>, vector<256x128xf32>, vector<8x256xf32> -> vector<8x256xf32>
    %54 = arith.addf %51, %53 : vector<8x256xf32>
    %c0_45 = arith.constant 0 : index
    %c0_46 = arith.constant 0 : index
    %55 = vector.load %arg13[%c0_45, %c0_46] : memref<8x128xf32, #tpu.memory_space<vmem>>, vector<8x128xf32>
    %cst_47 = arith.constant dense<0.000000e+00> : vector<8x256xf32>
    %56 = tpu.matmul %55, %35, %cst_47 {dimension_numbers = #tpu.dot_dimension_numbers<[1], [1], [0], [0], [0, 0, 1, 0], [], []>} : vector<8x128xf32>, vector<256x128xf32>, vector<8x256xf32> -> vector<8x256xf32>
    %57 = arith.addf %54, %56 : vector<8x256xf32>
    %c0_48 = arith.constant 0 : index
    %c0_49 = arith.constant 0 : index
    %58 = vector.load %arg14[%c0_48, %c0_49] : memref<8x128xf32, #tpu.memory_space<vmem>>, vector<8x128xf32>
    %cst_50 = arith.constant dense<0.000000e+00> : vector<8x256xf32>
    %59 = tpu.matmul %58, %49, %cst_50 {dimension_numbers = #tpu.dot_dimension_numbers<[1], [1], [0], [0], [0, 0, 1, 0], [], []>} : vector<8x128xf32>, vector<256x128xf32>, vector<8x256xf32> -> vector<8x256xf32>
    %60 = arith.addf %57, %59 : vector<8x256xf32>
    %61 = vector.extract_strided_slice %60 {offsets = [0, 0], sizes = [1, 256], strides = [1, 1]} : vector<8x256xf32> to vector<1x256xf32>
    %c0_51 = arith.constant 0 : index
    %c0_52 = arith.constant 0 : index
    %62 = vector.load %arg15[%c0_51, %c0_52] : memref<1x1xf32, #tpu.memory_space<vmem>>, vector<1x1xf32>
    %63 = vector.broadcast %62 : vector<1x1xf32> to vector<1x256xf32>
    %64 = arith.addf %61, %63 : vector<1x256xf32>
    %c0_53 = arith.constant 0 : index
    %c0_54 = arith.constant 0 : index
    %65 = vector.load %arg16[%c0_53, %c0_54] : memref<1x256xf32, #tpu.memory_space<vmem>>, vector<1x256xf32>
    tpu.vector_store %arg16[%c0_53, %c0_54], %64 {strides = array<i32>} : memref<1x256xf32, #tpu.memory_space<vmem>>, vector<1x256xf32>,
    return
  }
}

</mosaic_0001>

<llo_original>
// kernel: hgdc_forward.1
$region0: #{hgdc_forward.1}
  #allocation0 [shape = 'u32[]', space=smem, size = 0x4, offset = 0x4, fixed_abs, tag = 'smem constant byte address 0x4 - core index']
  #allocation1 [shape = 'u32[144,128]{1,0:T(1,128)}', space=vmem, size = 0x12000, scoped, tag = 'internal scratch']
  #allocation2 [shape = 'f32[1,1]{1,0:T(1,128)S(1)}', space=vmem, size = 0x200, scoped, tag = 'scoped memory for hgdc_forward.1']
  %s0 = inlined_call_operand.vmem [shape: f32[256,16], index: 0, kind: input, shape index: {}]
  %s1 = inlined_call_operand.vmem [shape: bf16[256,256], index: 1, kind: input, shape index: {}]
  %s2 = inlined_call_operand.vmem [shape: bf16[256,256], index: 2, kind: input, shape index: {}]
  %s3 = inlined_call_operand.vmem [shape: f32[16,64], index: 3, kind: input, shape index: {}]
  %s4 = inlined_call_operand.vmem [shape: f32[1,64], index: 4, kind: input, shape index: {}]
  %s5 = inlined_call_operand.vmem [shape: f32[64,128], index: 5, kind: input, shape index: {}]
  %s6 = inlined_call_operand.vmem [shape: f32[1,128], index: 6, kind: input, shape index: {}]
  %s7 = inlined_call_operand.vmem [shape: f32[128,128], index: 7, kind: input, shape index: {}]
  %s8 = inlined_call_operand.vmem [shape: f32[1,128], index: 8, kind: input, shape index: {}]
  %s9 = inlined_call_operand.vmem [shape: f32[128,128], index: 9, kind: input, shape index: {}]
  %s10 = inlined_call_operand.vmem [shape: f32[1,128], index: 10, kind: input, shape index: {}]
  %s11 = inlined_call_operand.vmem [shape: f32[8,64], index: 11, kind: input, shape index: {}]
  %s12 = inlined_call_operand.vmem [shape: f32[8,128], index: 12, kind: input, shape index: {}]
  %s13 = inlined_call_operand.vmem [shape: f32[8,128], index: 13, kind: input, shape index: {}]
  %s14 = inlined_call_operand.vmem [shape: f32[8,128], index: 14, kind: input, shape index: {}]
  %s15 = inlined_call_operand.<no memory space> [shape: f32[1,1], index: 15, kind: input, shape index: {}]
  %s16 = inlined_call_operand.vmem [shape: f32[1,256], index: 16, kind: output, shape index: {}]
  %s17 = sld [smem:[#allocation0]]
  $region74: #{hgdc_forward.1} parent=0
    _
  %s19 = ssub.s32 1, %s17
  %s20 = scalar_select 0, %s19, %s17
  %v21 = vstv %s15
  %22 = vst [vmem:[#allocation2] sm:$0x1] %v21
  // Predicated region
  $region2: #{hgdc_forward.1} parent=0 // pred_check
    _
  $region3: #{hgdc_forward.1} parent=0 // pred_check_branch
    %24 = sbr.rel (0) target = $region5
  $region4: #{hgdc_forward.1} parent=0 // pred_region
    _
  $region5: #{hgdc_forward.1} parent=0 // pred_fallthru
    _
  // Predicated region
  $region6: #{hgdc_forward.1} parent=0 // pred_check
    _
  $region7: #{hgdc_forward.1} parent=0 // pred_check_branch
    %26 = sbr.rel (0) target = $region9
  $region8: #{hgdc_forward.1} parent=0 // pred_region
    _
  $region9: #{hgdc_forward.1} parent=0 // pred_fallthru
    _
  // Predicated region
  $region10: #{hgdc_forward.1} parent=0 // pred_check
    _
  $region11: #{hgdc_forward.1} parent=0 // pred_check_branch
    %28 = sbr.rel (0) target = $region13
  $region12: #{hgdc_forward.1} parent=0 // pred_region
    _
  $region13: #{hgdc_forward.1} parent=0 // pred_fallthru
    _
  // Predicated region
  $region14: #{hgdc_forward.1} parent=0 // pred_check
    _
  $region15: #{hgdc_forward.1} parent=0 // pred_check_branch
    %30 = sbr.rel (0) target = $region17
  $region16: #{hgdc_forward.1} parent=0 // pred_region
    _
  $region17: #{hgdc_forward.1} parent=0 // pred_fallthru
    _
  // Predicated region
  $region18: #{hgdc_forward.1} parent=0 // pred_check
    _
  $region19: #{hgdc_forward.1} parent=0 // pred_check_branch
    %32 = sbr.rel (0) target = $region21
  $region20: #{hgdc_forward.1} parent=0 // pred_region
    _
  $region21: #{hgdc_forward.1} parent=0 // pred_fallthru
    _
  // Predicated region
  $region22: #{hgdc_forward.1} parent=0 // pred_check
    _
  $region23: #{hgdc_forward.1} parent=0 // pred_check_branch
    %34 = sbr.rel (0) target = $region25
  $region24: #{hgdc_forward.1} parent=0 // pred_region
    _
  $region25: #{hgdc_forward.1} parent=0 // pred_fallthru
    _
  // Predicated region
  $region26: #{hgdc_forward.1} parent=0 // pred_check
    _
  $region27: #{hgdc_forward.1} parent=0 // pred_check_branch
    %36 = sbr.rel (0) target = $region29
  $region28: #{hgdc_forward.1} parent=0 // pred_region
    _
  $region29: #{hgdc_forward.1} parent=0 // pred_fallthru
    _
  // Predicated region
  $region30: #{hgdc_forward.1} parent=0 // pred_check
    _
  $region31: #{hgdc_forward.1} parent=0 // pred_check_branch
    %38 = sbr.rel (0) target = $region33
  $region32: #{hgdc_forward.1} parent=0 // pred_region
    _
  $region33: #{hgdc_forward.1} parent=0 // pred_fallthru
    _
  // Predicated region
  $region34: #{hgdc_forward.1} parent=0 // pred_check
    _
  $region35: #{hgdc_forward.1} parent=0 // pred_check_branch
    %40 = sbr.rel (0) target = $region37
  $region36: #{hgdc_forward.1} parent=0 // pred_region
    _
  $region37: #{hgdc_forward.1} parent=0 // pred_fallthru
    _
  // Predicated region
  $region38: #{hgdc_forward.1} parent=0 // pred_check
    _
  $region39: #{hgdc_forward.1} parent=0 // pred_check_branch
    %42 = sbr.rel (0) target = $region41
  $region40: #{hgdc_forward.1} parent=0 // pred_region
    _
  $region41: #{hgdc_forward.1} parent=0 // pred_fallthru
    _
  // Predicated region
  $region42: #{hgdc_forward.1} parent=0 // pred_check
    _
  $region43: #{hgdc_forward.1} parent=0 // pred_check_branch
    %44 = sbr.rel (0) target = $region45
  $region44: #{hgdc_forward.1} parent=0 // pred_region
    _
  $region45: #{hgdc_forward.1} parent=0 // pred_fallthru
    _
  // Predicated region
  $region46: #{hgdc_forward.1} parent=0 // pred_check
    _
  $region47: #{hgdc_forward.1} parent=0 // pred_check_branch
    %46 = sbr.rel (0) target = $region49
  $region48: #{hgdc_forward.1} parent=0 // pred_region
    _
  $region49: #{hgdc_forward.1} parent=0 // pred_fallthru
    _
  // Predicated region
  $region50: #{hgdc_forward.1} parent=0 // pred_check
    _
  $region51: #{hgdc_forward.1} parent=0 // pred_check_branch
    %48 = sbr.rel (0) target = $region53
  $region52: #{hgdc_forward.1} parent=0 // pred_region
    _
  $region53: #{hgdc_forward.1} parent=0 // pred_fallthru
    _
  // Predicated region
  $region54: #{hgdc_forward.1} parent=0 // pred_check
    _
  $region55: #{hgdc_forward.1} parent=0 // pred_check_branch
    %50 = sbr.rel (0) target = $region57
  $region56: #{hgdc_forward.1} parent=0 // pred_region
    _
  $region57: #{hgdc_forward.1} parent=0 // pred_fallthru
    _
  // Predicated region
  $region58: #{hgdc_forward.1} parent=0 // pred_check
    _
  $region59: #{hgdc_forward.1} parent=0 // pred_check_branch
    %52 = sbr.rel (0) target = $region61
  $region60: #{hgdc_forward.1} parent=0 // pred_region
    _
  $region61: #{hgdc_forward.1} parent=0 // pred_fallthru
    _
  // Predicated region
  $region62: #{hgdc_forward.1} parent=0 // pred_check
    _
  $region63: #{hgdc_forward.1} parent=0 // pred_check_branch
    %54 = sbr.rel (0) target = $region65
  $region64: #{hgdc_forward.1} parent=0 // pred_region
    _
  $region65: #{hgdc_forward.1} parent=0 // pred_fallthru
    _
  %v56 = vld [vmem:[%s0] sm:$0xff]
  %v57 = vld [vmem:[%s0 + $0x8] sm:$0xff]
  %v58 = vld [vmem:[%s0 + $0x10] sm:$0xff]
  %v59 = vld [vmem:[%s0 + $0x18] sm:$0xff]
  %v60 = vld [vmem:[%s0 + $0x20] sm:$0xff]
  %v61 = vld [vmem:[%s0 + $0x28] sm:$0xff]
  %v62 = vld [vmem:[%s0 + $0x30] sm:$0xff]
  %v63 = vld [vmem:[%s0 + $0x38] sm:$0xff]
  %v64 = vld [vmem:[%s0 + $0x40] sm:$0xff]
  %v65 = vld [vmem:[%s0 + $0x48] sm:$0xff]
  %v66 = vld [vmem:[%s0 + $0x50] sm:$0xff]
  %v67 = vld [vmem:[%s0 + $0x58] sm:$0xff]
  %v68 = vld [vmem:[%s0 + $0x60] sm:$0xff]
  %v69 = vld [vmem:[%s0 + $0x68] sm:$0xff]
  %v70 = vld [vmem:[%s0 + $0x70] sm:$0xff]
  %v71 = vld [vmem:[%s0 + $0x78] sm:$0xff]
  %v72 = vld [vmem:[%s0 + $0x80] sm:$0xff]
  %v73 = vld [vmem:[%s0 + $0x88] sm:$0xff]
  %v74 = vld [vmem:[%s0 + $0x90] sm:$0xff]
  %v75 = vld [vmem:[%s0 + $0x98] sm:$0xff]
  %v76 = vld [vmem:[%s0 + $0xa0] sm:$0xff]
  %v77 = vld [vmem:[%s0 + $0xa8] sm:$0xff]
  %v78 = vld [vmem:[%s0 + $0xb0] sm:$0xff]
  %v79 = vld [vmem:[%s0 + $0xb8] sm:$0xff]
  %v80 = vld [vmem:[%s0 + $0xc0] sm:$0xff]
  %v81 = vld [vmem:[%s0 + $0xc8] sm:$0xff]
  %v82 = vld [vmem:[%s0 + $0xd0] sm:$0xff]
  %v83 = vld [vmem:[%s0 + $0xd8] sm:$0xff]
  %v84 = vld [vmem:[%s0 + $0xe0] sm:$0xff]
  %v85 = vld [vmem:[%s0 + $0xe8] sm:$0xff]
  %v86 = vld [vmem:[%s0 + $0xf0] sm:$0xff]
  %v87 = vld [vmem:[%s0 + $0xf8] sm:$0xff]
  %v88 = vld [vmem:[%s3] sm:$0xff]
  %v89 = vld [vmem:[%s3 + $0x8] sm:$0xff]
  %v90 = vld [vmem:[%s4] sm:$0x1]
  %v92 = vlaneseq
  %v93 = vshrl.u32 %v92, 7
  %v94 = vsub.s32 0, %v93
  %v95 = vrot.slane %v90, %v94
  %vm97 = vcmask 130048
  %v99 = vsel %vm97, %v56, 0
  %v102 = vsel %vm97, %v57, 0
  %v105 = vsel %vm97, %v58, 0
  %v108 = vsel %vm97, %v59, 0
  %v111 = vsel %vm97, %v60, 0
  %v114 = vsel %vm97, %v61, 0
  %v117 = vsel %vm97, %v62, 0
  %v120 = vsel %vm97, %v63, 0
  %v123 = vsel %vm97, %v64, 0
  %v126 = vsel %vm97, %v65, 0
  %v129 = vsel %vm97, %v66, 0
  %v132 = vsel %vm97, %v67, 0
  %v135 = vsel %vm97, %v68, 0
  %v138 = vsel %vm97, %v69, 0
  %v141 = vsel %vm97, %v70, 0
  %v144 = vsel %vm97, %v71, 0
  %v147 = vsel %vm97, %v72, 0
  %v150 = vsel %vm97, %v73, 0
  %v153 = vsel %vm97, %v74, 0
  %v156 = vsel %vm97, %v75, 0
  %v159 = vsel %vm97, %v76, 0
  %v162 = vsel %vm97, %v77, 0
  %v165 = vsel %vm97, %v78, 0
  %v168 = vsel %vm97, %v79, 0
  %v171 = vsel %vm97, %v80, 0
  %v174 = vsel %vm97, %v81, 0
  %v177 = vsel %vm97, %v82, 0
  %v180 = vsel %vm97, %v83, 0
  %v183 = vsel %vm97, %v84, 0
  %v186 = vsel %vm97, %v85, 0
  %v189 = vsel %vm97, %v86, 0
  %v192 = vsel %vm97, %v87, 0
  %194 = vmatprep.subr.mxu0 0.0
  %195 = vmatpush1.msra.mxu0 %v88
  %196 = vmatprep.subr.mxu0 0.0
  %197 = vmatpush1.msra.mxu0 %v89
  %198 = vmatprep.subr.mxu0 0.0
  %199 = vmatpush1.msra.mxu0 0.0
  %200 = vmatprep.subr.mxu0 0.0
  %201 = vmatpush1.msra.mxu0 0.0
  %202 = vmatprep.subr.mxu0 0.0
  %203 = vmatpush1.msra.mxu0 0.0
  %204 = vmatprep.subr.mxu0 0.0
  %205 = vmatpush1.msra.mxu0 0.0
  %206 = vmatprep.subr.mxu0 0.0
  %207 = vmatpush1.msra.mxu0 0.0
  %208 = vmatprep.subr.mxu0 0.0
  %209 = vmatpush1.msra.mxu0 0.0
  %210 = vmatprep.subr.mxu0 0.0
  %211 = vmatpush1.msra.mxu0 0.0
  %212 = vmatprep.subr.mxu0 0.0
  %213 = vmatpush1.msra.mxu0 0.0
  %214 = vmatprep.subr.mxu0 0.0
  %215 = vmatpush1.msra.mxu0 0.0
  %216 = vmatprep.subr.mxu0 0.0
  %217 = vmatpush1.msra.mxu0 0.0
  %218 = vmatprep.subr.mxu0 0.0
  %219 = vmatpush1.msra.mxu0 0.0
  %220 = vmatprep.subr.mxu0 0.0
  %221 = vmatpush1.msra.mxu0 0.0
  %222 = vmatprep.subr.mxu0 0.0
  %223 = vmatpush1.msra.mxu0 0.0
  %224 = vmatprep.subr.mxu0 0.0
  %225 = vmatpush1.msra.mxu0 0.0
  %226 = vmatprep.subr.mxu0 0.0
  %227 = vmatpush1.msra.mxu0 0.0
  %228 = vmatprep.subr.mxu0 0.0
  %229 = vmatpush1.msra.mxu0 0.0
  %230 = vmatprep.subr.mxu0 0.0
  %231 = vmatpush1.msra.mxu0 0.0
  %232 = vmatprep.subr.mxu0 0.0
  %233 = vmatpush1.msra.mxu0 0.0
  %234 = vmatprep.subr.mxu0 0.0
  %235 = vmatpush1.msra.mxu0 0.0
  %236 = vmatprep.subr.mxu0 0.0
  %237 = vmatpush1.msra.mxu0 0.0
  %238 = vmatprep.subr.mxu0 0.0
  %239 = vmatpush1.msra.mxu0 0.0
  %240 = vmatprep.subr.mxu0 0.0
  %241 = vmatpush1.msra.mxu0 0.0
  %242 = vmatprep.subr.mxu0 0.0
  %243 = vmatpush1.msra.mxu0 0.0
  %244 = vmatprep.subr.mxu0 0.0
  %245 = vmatpush1.msra.mxu0 0.0
  %246 = vmatprep.subr.mxu0 0.0
  %247 = vmatpush1.msra.mxu0 0.0
  %248 = vmatprep.subr.mxu0 0.0
  %249 = vmatpush1.msra.mxu0 0.0
  %250 = vmatprep.subr.mxu0 0.0
  %251 = vmatpush1.msra.mxu0 0.0
  %252 = vmatprep.subr.mxu0 0.0
  %253 = vmatpush1.msra.mxu0 0.0
  %254 = vmatprep.subr.mxu0 0.0
  %255 = vmatpush1.msra.mxu0 0.0
  %256 = vmatprep.subr.mxu0 0.0
  %257 = vmatpush1.msra.mxu0 0.0
  %258 = vmatprep.mubr.f32.mxu0 0.0
  %259 = vmatmul.mubr.f32.gmra.mrb[0].mxu0 %v99
  %v260 = vpop.f32.mrb[0].mxu0
  %v261 = vadd.f32 %v95, %v260
  %v262 = vpop.f32.mrb[0].mxu0
  %263 = vmatprep.mubr.f32.mxu0 0.0
  %264 = vmatmul.mubr.f32.gmra.mrb[0].mxu0 %v102
  %v265 = vpop.f32.mrb[0].mxu0
  %v266 = vadd.f32 %v95, %v265
  %v267 = vpop.f32.mrb[0].mxu0
  %268 = vmatprep.mubr.f32.mxu0 0.0
  %269 = vmatmul.mubr.f32.gmra.mrb[0].mxu0 %v105
  %v270 = vpop.f32.mrb[0].mxu0
  %v271 = vadd.f32 %v95, %v270
  %v272 = vpop.f32.mrb[0].mxu0
  %273 = vmatprep.mubr.f32.mxu0 0.0
  %274 = vmatmul.mubr.f32.gmra.mrb[0].mxu0 %v108
  %v275 = vpop.f32.mrb[0].mxu0
  %v276 = vadd.f32 %v95, %v275
  %v277 = vpop.f32.mrb[0].mxu0
  %278 = vmatprep.mubr.f32.mxu0 0.0
  %279 = vmatmul.mubr.f32.gmra.mrb[0].mxu0 %v111
  %v280 = vpop.f32.mrb[0].mxu0
  %v281 = vadd.f32 %v95, %v280
  %v282 = vpop.f32.mrb[0].mxu0
  %283 = vmatprep.mubr.f32.mxu0 0.0
  %284 = vmatmul.mubr.f32.gmra.mrb[0].mxu0 %v114
  %v285 = vpop.f32.mrb[0].mxu0
  %v286 = vadd.f32 %v95, %v285
  %v287 = vpop.f32.mrb[0].mxu0
  %288 = vmatprep.mubr.f32.mxu0 0.0
  %289 = vmatmul.mubr.f32.gmra.mrb[0].mxu0 %v117
  %v290 = vpop.f32.mrb[0].mxu0
  %v291 = vadd.f32 %v95, %v290
  %v292 = vpop.f32.mrb[0].mxu0
  %293 = vmatprep.mubr.f32.mxu0 0.0
  %294 = vmatmul.mubr.f32.gmra.mrb[0].mxu0 %v120
  %v295 = vpop.f32.mrb[0].mxu0
  %v296 = vadd.f32 %v95, %v295
  %v297 = vpop.f32.mrb[0].mxu0
  %298 = vmatprep.mubr.f32.mxu0 0.0
  %299 = vmatmul.mubr.f32.gmra.mrb[0].mxu0 %v123
  %v300 = vpop.f32.mrb[0].mxu0
  %v301 = vadd.f32 %v95, %v300
  %v302 = vpop.f32.mrb[0].mxu0
  %303 = vmatprep.mubr.f32.mxu0 0.0
  %304 = vmatmul.mubr.f32.gmra.mrb[0].mxu0 %v126
  %v305 = vpop.f32.mrb[0].mxu0
  %v306 = vadd.f32 %v95, %v305
  %v307 = vpop.f32.mrb[0].mxu0
  %308 = vmatprep.mubr.f32.mxu0 0.0
  %309 = vmatmul.mubr.f32.gmra.mrb[0].mxu0 %v129
  %v310 = vpop.f32.mrb[0].mxu0
  %v311 = vadd.f32 %v95, %v310
  %v312 = vpop.f32.mrb[0].mxu0
  %313 = vmatprep.mubr.f32.mxu0 0.0
  %314 = vmatmul.mubr.f32.gmra.mrb[0].mxu0 %v132
  %v315 = vpop.f32.mrb[0].mxu0
  %v316 = vadd.f32 %v95, %v315
  %v317 = vpop.f32.mrb[0].mxu0
  %318 = vmatprep.mubr.f32.mxu0 0.0
  %319 = vmatmul.mubr.f32.gmra.mrb[0].mxu0 %v135
  %v320 = vpop.f32.mrb[0].mxu0
  %v321 = vadd.f32 %v95, %v320
  %v322 = vpop.f32.mrb[0].mxu0
  %323 = vmatprep.mubr.f32.mxu0 0.0
  %324 = vmatmul.mubr.f32.gmra.mrb[0].mxu0 %v138
  %v325 = vpop.f32.mrb[0].mxu0
  %v326 = vadd.f32 %v95, %v325
  %v327 = vpop.f32.mrb[0].mxu0
  %328 = vmatprep.mubr.f32.mxu0 0.0
  %329 = vmatmul.mubr.f32.gmra.mrb[0].mxu0 %v141
  %v330 = vpop.f32.mrb[0].mxu0
  %v331 = vadd.f32 %v95, %v330
  %v332 = vpop.f32.mrb[0].mxu0
  %333 = vmatprep.mubr.f32.mxu0 0.0
  %334 = vmatmul.mubr.f32.gmra.mrb[0].mxu0 %v144
  %v335 = vpop.f32.mrb[0].mxu0
  %v336 = vadd.f32 %v95, %v335
  %v337 = vpop.f32.mrb[0].mxu0
  %338 = vmatprep.mubr.f32.mxu0 0.0
  %339 = vmatmul.mubr.f32.gmra.mrb[0].mxu0 %v147
  %v340 = vpop.f32.mrb[0].mxu0
  %v341 = vadd.f32 %v95, %v340
  %v342 = vpop.f32.mrb[0].mxu0
  %343 = vmatprep.mubr.f32.mxu0 0.0
  %344 = vmatmul.mubr.f32.gmra.mrb[0].mxu0 %v150
  %v345 = vpop.f32.mrb[0].mxu0
  %v346 = vadd.f32 %v95, %v345
  %v347 = vpop.f32.mrb[0].mxu0
  %348 = vmatprep.mubr.f32.mxu0 0.0
  %349 = vmatmul.mubr.f32.gmra.mrb[0].mxu0 %v153
  %v350 = vpop.f32.mrb[0].mxu0
  %v351 = vadd.f32 %v95, %v350
  %v352 = vpop.f32.mrb[0].mxu0
  %353 = vmatprep.mubr.f32.mxu0 0.0
  %354 = vmatmul.mubr.f32.gmra.mrb[0].mxu0 %v156
  %v355 = vpop.f32.mrb[0].mxu0
  %v356 = vadd.f32 %v95, %v355
  %v357 = vpop.f32.mrb[0].mxu0
  %358 = vmatprep.mubr.f32.mxu0 0.0
  %359 = vmatmul.mubr.f32.gmra.mrb[0].mxu0 %v159
  %v360 = vpop.f32.mrb[0].mxu0
  %v361 = vadd.f32 %v95, %v360
  %v362 = vpop.f32.mrb[0].mxu0
  %363 = vmatprep.mubr.f32.mxu0 0.0
  %364 = vmatmul.mubr.f32.gmra.mrb[0].mxu0 %v162
  %v365 = vpop.f32.mrb[0].mxu0
  %v366 = vadd.f32 %v95, %v365
  %v367 = vpop.f32.mrb[0].mxu0
  %368 = vmatprep.mubr.f32.mxu0 0.0
  %369 = vmatmul.mubr.f32.gmra.mrb[0].mxu0 %v165
  %v370 = vpop.f32.mrb[0].mxu0
  %v371 = vadd.f32 %v95, %v370
  %v372 = vpop.f32.mrb[0].mxu0
  %373 = vmatprep.mubr.f32.mxu0 0.0
  %374 = vmatmul.mubr.f32.gmra.mrb[0].mxu0 %v168
  %v375 = vpop.f32.mrb[0].mxu0
  %v376 = vadd.f32 %v95, %v375
  %v377 = vpop.f32.mrb[0].mxu0
  %378 = vmatprep.mubr.f32.mxu0 0.0
  %379 = vmatmul.mubr.f32.gmra.mrb[0].mxu0 %v171
  %v380 = vpop.f32.mrb[0].mxu0
  %v381 = vadd.f32 %v95, %v380
  %v382 = vpop.f32.mrb[0].mxu0
  %383 = vmatprep.mubr.f32.mxu0 0.0
  %384 = vmatmul.mubr.f32.gmra.mrb[0].mxu0 %v174
  %v385 = vpop.f32.mrb[0].mxu0
  %v386 = vadd.f32 %v95, %v385
  %v387 = vpop.f32.mrb[0].mxu0
  %388 = vmatprep.mubr.f32.mxu0 0.0
  %389 = vmatmul.mubr.f32.gmra.mrb[0].mxu0 %v177
  %v390 = vpop.f32.mrb[0].mxu0
  %v391 = vadd.f32 %v95, %v390
  %v392 = vpop.f32.mrb[0].mxu0
  %393 = vmatprep.mubr.f32.mxu0 0.0
  %394 = vmatmul.mubr.f32.gmra.mrb[0].mxu0 %v180
  %v395 = vpop.f32.mrb[0].mxu0
  %v396 = vadd.f32 %v95, %v395
  %v397 = vpop.f32.mrb[0].mxu0
  %398 = vmatprep.mubr.f32.mxu0 0.0
  %399 = vmatmul.mubr.f32.gmra.mrb[0].mxu0 %v183
  %v400 = vpop.f32.mrb[0].mxu0
  %v401 = vadd.f32 %v95, %v400
  %v402 = vpop.f32.mrb[0].mxu0
  %403 = vmatprep.mubr.f32.mxu0 0.0
  %404 = vmatmul.mubr.f32.gmra.mrb[0].mxu0 %v186
  %v405 = vpop.f32.mrb[0].mxu0
  %v406 = vadd.f32 %v95, %v405
  %v407 = vpop.f32.mrb[0].mxu0
  %408 = vmatprep.mubr.f32.mxu0 0.0
  %409 = vmatmul.mubr.f32.gmra.mrb[0].mxu0 %v189
  %v410 = vpop.f32.mrb[0].mxu0
  %v411 = vadd.f32 %v95, %v410
  %v412 = vpop.f32.mrb[0].mxu0
  %413 = vmatprep.mubr.f32.mxu0 0.0
  %414 = vmatmul.mubr.f32.gmra.mrb[0].mxu0 %v192
  %v415 = vpop.f32.mrb[0].mxu0
  %v416 = vadd.f32 %v95, %v415
  %v417 = vpop.f32.mrb[0].mxu0
  %418 = vdwg.mxu0
  %v419 = vmax.f32 %v261, 0.0
  %v420 = vmax.f32 %v266, 0.0
  %v421 = vmax.f32 %v271, 0.0
  %v422 = vmax.f32 %v276, 0.0
  %v423 = vmax.f32 %v281, 0.0
  %v424 = vmax.f32 %v286, 0.0
  %v425 = vmax.f32 %v291, 0.0
  %v426 = vmax.f32 %v296, 0.0
  %v427 = vmax.f32 %v301, 0.0
  %v428 = vmax.f32 %v306, 0.0
  %v429 = vmax.f32 %v311, 0.0
  %v430 = vmax.f32 %v316, 0.0
  %v431 = vmax.f32 %v321, 0.0
  %v432 = vmax.f32 %v326, 0.0
  %v433 = vmax.f32 %v331, 0.0
  %v434 = vmax.f32 %v336, 0.0
  %v435 = vmax.f32 %v341, 0.0
  %v436 = vmax.f32 %v346, 0.0
  %v437 = vmax.f32 %v351, 0.0
  %v438 = vmax.f32 %v356, 0.0
  %v439 = vmax.f32 %v361, 0.0
  %v440 = vmax.f32 %v366, 0.0
  %v441 = vmax.f32 %v371, 0.0
  %v442 = vmax.f32 %v376, 0.0
  %v443 = vmax.f32 %v381, 0.0
  %v444 = vmax.f32 %v386, 0.0
  %v445 = vmax.f32 %v391, 0.0
  %v446 = vmax.f32 %v396, 0.0
  %v447 = vmax.f32 %v401, 0.0
  %v448 = vmax.f32 %v406, 0.0
  %v449 = vmax.f32 %v411, 0.0
  %v450 = vmax.f32 %v416, 0.0
  %v451 = vld [vmem:[%s5] sm:$0xff]
  %v452 = vld [vmem:[%s5 + $0x8] sm:$0xff]
  %v453 = vld [vmem:[%s5 + $0x10] sm:$0xff]
  %v454 = vld [vmem:[%s5 + $0x18] sm:$0xff]
  %v455 = vld [vmem:[%s5 + $0x20] sm:$0xff]
  %v456 = vld [vmem:[%s5 + $0x28] sm:$0xff]
  %v457 = vld [vmem:[%s5 + $0x30] sm:$0xff]
  %v458 = vld [vmem:[%s5 + $0x38] sm:$0xff]
  %vm459 = vcmask 523264
  %v461 = vsel %vm459, %v419, 0
  %v464 = vsel %vm459, %v420, 0
  %v467 = vsel %vm459, %v421, 0
  %v470 = vsel %vm459, %v422, 0
  %v473 = vsel %vm459, %v423, 0
  %v476 = vsel %vm459, %v424, 0
  %v479 = vsel %vm459, %v425, 0
  %v482 = vsel %vm459, %v426, 0
  %v485 = vsel %vm459, %v427, 0
  %v488 = vsel %vm459, %v428, 0
  %v491 = vsel %vm459, %v429, 0
  %v494 = vsel %vm459, %v430, 0
  %v497 = vsel %vm459, %v431, 0
  %v500 = vsel %vm459, %v432, 0
  %v503 = vsel %vm459, %v433, 0
  %v506 = vsel %vm459, %v434, 0
  %v509 = vsel %vm459, %v435, 0
  %v512 = vsel %vm459, %v436, 0
  %v515 = vsel %vm459, %v437, 0
  %v518 = vsel %vm459, %v438, 0
  %v521 = vsel %vm459, %v439, 0
  %v524 = vsel %vm459, %v440, 0
  %v527 = vsel %vm459, %v441, 0
  %v530 = vsel %vm459, %v442, 0
  %v533 = vsel %vm459, %v443, 0
  %v536 = vsel %vm459, %v444, 0
  %v539 = vsel %vm459, %v445, 0
  %v542 = vsel %vm459, %v446, 0
  %v545 = vsel %vm459, %v447, 0
  %v548 = vsel %vm459, %v448, 0
  %v551 = vsel %vm459, %v449, 0
  %v554 = vsel %vm459, %v450, 0
  %556 = vmatprep.subr.mxu0 0.0
  %557 = vmatpush1.msra.mxu0 %v451
  %558 = vmatprep.subr.mxu0 0.0
  %559 = vmatpush1.msra.mxu0 %v452
  %560 = vmatprep.subr.mxu0 0.0
  %561 = vmatpush1.msra.mxu0 %v453
  %562 = vmatprep.subr.mxu0 0.0
  %563 = vmatpush1.msra.mxu0 %v454
  %564 = vmatprep.subr.mxu0 0.0
  %565 = vmatpush1.msra.mxu0 %v455
  %566 = vmatprep.subr.mxu0 0.0
  %567 = vmatpush1.msra.mxu0 %v456
  %568 = vmatprep.subr.mxu0 0.0
  %569 = vmatpush1.msra.mxu0 %v457
  %570 = vmatprep.subr.mxu0 0.0
  %571 = vmatpush1.msra.mxu0 %v458
  %572 = vmatprep.subr.mxu0 0.0
  %573 = vmatpush1.msra.mxu0 0.0
  %574 = vmatprep.subr.mxu0 0.0
  %575 = vmatpush1.msra.mxu0 0.0
  %576 = vmatprep.subr.mxu0 0.0
  %577 = vmatpush1.msra.mxu0 0.0
  %578 = vmatprep.subr.mxu0 0.0
  %579 = vmatpush1.msra.mxu0 0.0
  %580 = vmatprep.subr.mxu0 0.0
  %581 = vmatpush1.msra.mxu0 0.0
  %582 = vmatprep.subr.mxu0 0.0
  %583 = vmatpush1.msra.mxu0 0.0
  %584 = vmatprep.subr.mxu0 0.0
  %585 = vmatpush1.msra.mxu0 0.0
  %586 = vmatprep.subr.mxu0 0.0
  %587 = vmatpush1.msra.mxu0 0.0
  %588 = vmatprep.subr.mxu0 0.0
  %589 = vmatpush1.msra.mxu0 0.0
  %590 = vmatprep.subr.mxu0 0.0
  %591 = vmatpush1.msra.mxu0 0.0
  %592 = vmatprep.subr.mxu0 0.0
  %593 = vmatpush1.msra.mxu0 0.0
  %594 = vmatprep.subr.mxu0 0.0
  %595 = vmatpush1.msra.mxu0 0.0
  %596 = vmatprep.subr.mxu0 0.0
  %597 = vmatpush1.msra.mxu0 0.0
  %598 = vmatprep.subr.mxu0 0.0
  %599 = vmatpush1.msra.mxu0 0.0
  %600 = vmatprep.subr.mxu0 0.0
  %601 = vmatpush1.msra.mxu0 0.0
  %602 = vmatprep.subr.mxu0 0.0
  %603 = vmatpush1.msra.mxu0 0.0
  %604 = vmatprep.subr.mxu0 0.0
  %605 = vmatpush1.msra.mxu0 0.0
  %606 = vmatprep.subr.mxu0 0.0
  %607 = vmatpush1.msra.mxu0 0.0
  %608 = vmatprep.subr.mxu0 0.0
  %609 = vmatpush1.msra.mxu0 0.0
  %610 = vmatprep.subr.mxu0 0.0
  %611 = vmatpush1.msra.mxu0 0.0
  %612 = vmatprep.subr.mxu0 0.0
  %613 = vmatpush1.msra.mxu0 0.0
  %614 = vmatprep.subr.mxu0 0.0
  %615 = vmatpush1.msra.mxu0 0.0
  %616 = vmatprep.subr.mxu0 0.0
  %617 = vmatpush1.msra.mxu0 0.0
  %618 = vmatprep.subr.mxu0 0.0
  %619 = vmatpush1.msra.mxu0 0.0
  %620 = vmatprep.mubr.f32.mxu0 0.0
  %621 = vmatmul.mubr.f32.gmra.mrb[0].mxu0 %v461
  %v622 = vpop.f32.mrb[0].mxu0
  %v623 = vadd.f32 0.0, %v622
  %v624 = vpop.f32.mrb[0].mxu0
  %625 = vmatprep.mubr.f32.mxu0 0.0
  %626 = vmatmul.mubr.f32.gmra.mrb[0].mxu0 %v464
  %v627 = vpop.f32.mrb[0].mxu0
  %v628 = vadd.f32 0.0, %v627
  %v629 = vpop.f32.mrb[0].mxu0
  %630 = vmatprep.mubr.f32.mxu0 0.0
  %631 = vmatmul.mubr.f32.gmra.mrb[0].mxu0 %v467
  %v632 = vpop.f32.mrb[0].mxu0
  %v633 = vadd.f32 0.0, %v632
  %v634 = vpop.f32.mrb[0].mxu0
  %635 = vmatprep.mubr.f32.mxu0 0.0
  %636 = vmatmul.mubr.f32.gmra.mrb[0].mxu0 %v470
  %v637 = vpop.f32.mrb[0].mxu0
  %v638 = vadd.f32 0.0, %v637
  %v639 = vpop.f32.mrb[0].mxu0
  %640 = vmatprep.mubr.f32.mxu0 0.0
  %641 = vmatmul.mubr.f32.gmra.mrb[0].mxu0 %v473
  %v642 = vpop.f32.mrb[0].mxu0
  %v643 = vadd.f32 0.0, %v642
  %v644 = vpop.f32.mrb[0].mxu0
  %645 = vmatprep.mubr.f32.mxu0 0.0
  %646 = vmatmul.mubr.f32.gmra.mrb[0].mxu0 %v476
  %v647 = vpop.f32.mrb[0].mxu0
  %v648 = vadd.f32 0.0, %v647
  %v649 = vpop.f32.mrb[0].mxu0
  %650 = vmatprep.mubr.f32.mxu0 0.0
  %651 = vmatmul.mubr.f32.gmra.mrb[0].mxu0 %v479
  %v652 = vpop.f32.mrb[0].mxu0
  %v653 = vadd.f32 0.0, %v652
  %v654 = vpop.f32.mrb[0].mxu0
  %655 = vmatprep.mubr.f32.mxu0 0.0
  %656 = vmatmul.mubr.f32.gmra.mrb[0].mxu0 %v482
  %v657 = vpop.f32.mrb[0].mxu0
  %v658 = vadd.f32 0.0, %v657
  %v659 = vpop.f32.mrb[0].mxu0
  %660 = vmatprep.mubr.f32.mxu0 0.0
  %661 = vmatmul.mubr.f32.gmra.mrb[0].mxu0 %v485
  %v662 = vpop.f32.mrb[0].mxu0
  %v663 = vadd.f32 0.0, %v662
  %v664 = vpop.f32.mrb[0].mxu0
  %665 = vmatprep.mubr.f32.mxu0 0.0
  %666 = vmatmul.mubr.f32.gmra.mrb[0].mxu0 %v488
  %v667 = vpop.f32.mrb[0].mxu0
  %v668 = vadd.f32 0.0, %v667
  %v669 = vpop.f32.mrb[0].mxu0
  %670 = vmatprep.mubr.f32.mxu0 0.0
  %671 = vmatmul.mubr.f32.gmra.mrb[0].mxu0 %v491
  %v672 = vpop.f32.mrb[0].mxu0
  %v673 = vadd.f32 0.0, %v672
  %v674 = vpop.f32.mrb[0].mxu0
  %675 = vmatprep.mubr.f32.mxu0 0.0
  %676 = vmatmul.mubr.f32.gmra.mrb[0].mxu0 %v494
  %v677 = vpop.f32.mrb[0].mxu0
  %v678 = vadd.f32 0.0, %v677
  %v679 = vpop.f32.mrb[0].mxu0
  %680 = vmatprep.mubr.f32.mxu0 0.0
  %681 = vmatmul.mubr.f32.gmra.mrb[0].mxu0 %v497
  %v682 = vpop.f32.mrb[0].mxu0
  %v683 = vadd.f32 0.0, %v682
  %v684 = vpop.f32.mrb[0].mxu0
  %685 = vmatprep.mubr.f32.mxu0 0.0
  %686 = vmatmul.mubr.f32.gmra.mrb[0].mxu0 %v500
  %v687 = vpop.f32.mrb[0].mxu0
  %v688 = vadd.f32 0.0, %v687
  %v689 = vpop.f32.mrb[0].mxu0
  %690 = vmatprep.mubr.f32.mxu0 0.0
  %691 = vmatmul.mubr.f32.gmra.mrb[0].mxu0 %v503
  %v692 = vpop.f32.mrb[0].mxu0
  %v693 = vadd.f32 0.0, %v692
  %v694 = vpop.f32.mrb[0].mxu0
  %695 = vmatprep.mubr.f32.mxu0 0.0
  %696 = vmatmul.mubr.f32.gmra.mrb[0].mxu0 %v506
  %v697 = vpop.f32.mrb[0].mxu0
  %v698 = vadd.f32 0.0, %v697
  %v699 = vpop.f32.mrb[0].mxu0
  %700 = vmatprep.mubr.f32.mxu0 0.0
  %701 = vmatmul.mubr.f32.gmra.mrb[0].mxu0 %v509
  %v702 = vpop.f32.mrb[0].mxu0
  %v703 = vadd.f32 0.0, %v702
  %v704 = vpop.f32.mrb[0].mxu0
  %705 = vmatprep.mubr.f32.mxu0 0.0
  %706 = vmatmul.mubr.f32.gmra.mrb[0].mxu0 %v512
  %v707 = vpop.f32.mrb[0].mxu0
  %v708 = vadd.f32 0.0, %v707
  %v709 = vpop.f32.mrb[0].mxu0
  %710 = vmatprep.mubr.f32.mxu0 0.0
  %711 = vmatmul.mubr.f32.gmra.mrb[0].mxu0 %v515
  %v712 = vpop.f32.mrb[0].mxu0
  %v713 = vadd.f32 0.0, %v712
  %v714 = vpop.f32.mrb[0].mxu0
  %715 = vmatprep.mubr.f32.mxu0 0.0
  %716 = vmatmul.mubr.f32.gmra.mrb[0].mxu0 %v518
  %v717 = vpop.f32.mrb[0].mxu0
  %v718 = vadd.f32 0.0, %v717
  %v719 = vpop.f32.mrb[0].mxu0
  %720 = vmatprep.mubr.f32.mxu0 0.0
  %721 = vmatmul.mubr.f32.gmra.mrb[0].mxu0 %v521
  %v722 = vpop.f32.mrb[0].mxu0
  %v723 = vadd.f32 0.0, %v722
  %v724 = vpop.f32.mrb[0].mxu0
  %725 = vmatprep.mubr.f32.mxu0 0.0
  %726 = vmatmul.mubr.f32.gmra.mrb[0].mxu0 %v524
  %v727 = vpop.f32.mrb[0].mxu0
  %v728 = vadd.f32 0.0, %v727
  %v729 = vpop.f32.mrb[0].mxu0
  %730 = vmatprep.mubr.f32.mxu0 0.0
  %731 = vmatmul.mubr.f32.gmra.mrb[0].mxu0 %v527
  %v732 = vpop.f32.mrb[0].mxu0
  %v733 = vadd.f32 0.0, %v732
  %v734 = vpop.f32.mrb[0].mxu0
  %735 = vmatprep.mubr.f32.mxu0 0.0
  %736 = vmatmul.mubr.f32.gmra.mrb[0].mxu0 %v530
  %v737 = vpop.f32.mrb[0].mxu0
  %v738 = vadd.f32 0.0, %v737
  %v739 = vpop.f32.mrb[0].mxu0
  %740 = vmatprep.mubr.f32.mxu0 0.0
  %741 = vmatmul.mubr.f32.gmra.mrb[0].mxu0 %v533
  %v742 = vpop.f32.mrb[0].mxu0
  %v743 = vadd.f32 0.0, %v742
  %v744 = vpop.f32.mrb[0].mxu0
  %745 = vmatprep.mubr.f32.mxu0 0.0
  %746 = vmatmul.mubr.f32.gmra.mrb[0].mxu0 %v536
  %v747 = vpop.f32.mrb[0].mxu0
  %v748 = vadd.f32 0.0, %v747
  %v749 = vpop.f32.mrb[0].mxu0
  %750 = vmatprep.mubr.f32.mxu0 0.0
  %751 = vmatmul.mubr.f32.gmra.mrb[0].mxu0 %v539
  %v752 = vpop.f32.mrb[0].mxu0
  %v753 = vadd.f32 0.0, %v752
  %v754 = vpop.f32.mrb[0].mxu0
  %755 = vmatprep.mubr.f32.mxu0 0.0
  %756 = vmatmul.mubr.f32.gmra.mrb[0].mxu0 %v542
  %v757 = vpop.f32.mrb[0].mxu0
  %v758 = vadd.f32 0.0, %v757
  %v759 = vpop.f32.mrb[0].mxu0
  %760 = vmatprep.mubr.f32.mxu0 0.0
  %761 = vmatmul.mubr.f32.gmra.mrb[0].mxu0 %v545
  %v762 = vpop.f32.mrb[0].mxu0
  %v763 = vadd.f32 0.0, %v762
  %v764 = vpop.f32.mrb[0].mxu0
  %765 = vmatprep.mubr.f32.mxu0 0.0
  %766 = vmatmul.mubr.f32.gmra.mrb[0].mxu0 %v548
  %v767 = vpop.f32.mrb[0].mxu0
  %v768 = vadd.f32 0.0, %v767
  %v769 = vpop.f32.mrb[0].mxu0
  %770 = vmatprep.mubr.f32.mxu0 0.0
  %771 = vmatmul.mubr.f32.gmra.mrb[0].mxu0 %v551
  %v772 = vpop.f32.mrb[0].mxu0
  %v773 = vadd.f32 0.0, %v772
  %v774 = vpop.f32.mrb[0].mxu0
  %775 = vmatprep.mubr.f32.mxu0 0.0
  %776 = vmatmul.mubr.f32.gmra.mrb[0].mxu0 %v554
  %v777 = vpop.f32.mrb[0].mxu0
  %v778 = vadd.f32 0.0, %v777
  %v779 = vpop.f32.mrb[0].mxu0
  %780 = vdwg.mxu0
  %v781 = vpack.c.bf16 %v628, %v623
  %v782 = vpack.c.bf16 %v638, %v633
  %v783 = vpack.c.bf16 %v648, %v643
  %v784 = vpack.c.bf16 %v658, %v653
  %v785 = vpack.c.bf16 %v668, %v663
  %v786 = vpack.c.bf16 %v678, %v673
  %v787 = vpack.c.bf16 %v688, %v683
  %v788 = vpack.c.bf16 %v698, %v693
  %v789 = vpack.c.bf16 %v708, %v703
  %v790 = vpack.c.bf16 %v718, %v713
  %v791 = vpack.c.bf16 %v728, %v723
  %v792 = vpack.c.bf16 %v738, %v733
  %v793 = vpack.c.bf16 %v748, %v743
  %v794 = vpack.c.bf16 %v758, %v753
  %v795 = vpack.c.bf16 %v768, %v763
  %v796 = vpack.c.bf16 %v778, %v773
  %v797 = vld [vmem:[%s1] sm:$0xff]
  %v798 = vld [vmem:[%s1 + $0x8] sm:$0xff]
  %v799 = vld [vmem:[%s1 + $0x10] sm:$0xff]
  %v800 = vld [vmem:[%s1 + $0x18] sm:$0xff]
  %v801 = vld [vmem:[%s1 + $0x20] sm:$0xff]
  %v802 = vld [vmem:[%s1 + $0x28] sm:$0xff]
  %v803 = vld [vmem:[%s1 + $0x30] sm:$0xff]
  %v804 = vld [vmem:[%s1 + $0x38] sm:$0xff]
  %v805 = vld [vmem:[%s1 + $0x40] sm:$0xff]
  %v806 = vld [vmem:[%s1 + $0x48] sm:$0xff]
  %v807 = vld [vmem:[%s1 + $0x50] sm:$0xff]
  %v808 = vld [vmem:[%s1 + $0x58] sm:$0xff]
  %v809 = vld [vmem:[%s1 + $0x60] sm:$0xff]
  %v810 = vld [vmem:[%s1 + $0x68] sm:$0xff]
  %v811 = vld [vmem:[%s1 + $0x70] sm:$0xff]
  %v812 = vld [vmem:[%s1 + $0x78] sm:$0xff]
  %v813 = vld [vmem:[%s1 + $0x80] sm:$0xff]
  %v814 = vld [vmem:[%s1 + $0x88] sm:$0xff]
  %v815 = vld [vmem:[%s1 + $0x90] sm:$0xff]
  %v816 = vld [vmem:[%s1 + $0x98] sm:$0xff]
  %v817 = vld [vmem:[%s1 + $0xa0] sm:$0xff]
  %v818 = vld [vmem:[%s1 + $0xa8] sm:$0xff]
  %v819 = vld [vmem:[%s1 + $0xb0] sm:$0xff]
  %v820 = vld [vmem:[%s1 + $0xb8] sm:$0xff]
  %v821 = vld [vmem:[%s1 + $0xc0] sm:$0xff]
  %v822 = vld [vmem:[%s1 + $0xc8] sm:$0xff]
  %v823 = vld [vmem:[%s1 + $0xd0] sm:$0xff]
  %v824 = vld [vmem:[%s1 + $0xd8] sm:$0xff]
  %v825 = vld [vmem:[%s1 + $0xe0] sm:$0xff]
  %v826 = vld [vmem:[%s1 + $0xe8] sm:$0xff]
  %v827 = vld [vmem:[%s1 + $0xf0] sm:$0xff]
  %v828 = vld [vmem:[%s1 + $0xf8] sm:$0xff]
  %v861 = vunpack.c.l.b16 %v797
  %v862 = vunpack.c.h.b16 %v797
  %v863 = vunpack.c.l.b16 %v798
  %v864 = vunpack.c.h.b16 %v798
  %v865 = vunpack.c.l.b16 %v799
  %v866 = vunpack.c.h.b16 %v799
  %v867 = vunpack.c.l.b16 %v800
  %v868 = vunpack.c.h.b16 %v800
  %v869 = vunpack.c.l.b16 %v801
  %v870 = vunpack.c.h.b16 %v801
  %v871 = vunpack.c.l.b16 %v802
  %v872 = vunpack.c.h.b16 %v802
  %v873 = vunpack.c.l.b16 %v803
  %v874 = vunpack.c.h.b16 %v803
  %v875 = vunpack.c.l.b16 %v804
  %v876 = vunpack.c.h.b16 %v804
  %v877 = vunpack.c.l.b16 %v805
  %v878 = vunpack.c.h.b16 %v805
  %v879 = vunpack.c.l.b16 %v806
  %v880 = vunpack.c.h.b16 %v806
  %v881 = vunpack.c.l.b16 %v807
  %v882 = vunpack.c.h.b16 %v807
  %v883 = vunpack.c.l.b16 %v808
  %v884 = vunpack.c.h.b16 %v808
  %v885 = vunpack.c.l.b16 %v809
  %v886 = vunpack.c.h.b16 %v809
  %v887 = vunpack.c.l.b16 %v810
  %v888 = vunpack.c.h.b16 %v810
  %v889 = vunpack.c.l.b16 %v811
  %v890 = vunpack.c.h.b16 %v811
  %v891 = vunpack.c.l.b16 %v812
  %v892 = vunpack.c.h.b16 %v812
  %v893 = vunpack.c.l.b16 %v813
  %v894 = vunpack.c.h.b16 %v813
  %v895 = vunpack.c.l.b16 %v814
  %v896 = vunpack.c.h.b16 %v814
  %v897 = vunpack.c.l.b16 %v815
  %v898 = vunpack.c.h.b16 %v815
  %v899 = vunpack.c.l.b16 %v816
  %v900 = vunpack.c.h.b16 %v816
  %v901 = vunpack.c.l.b16 %v817
  %v902 = vunpack.c.h.b16 %v817
  %v903 = vunpack.c.l.b16 %v818
  %v904 = vunpack.c.h.b16 %v818
  %v905 = vunpack.c.l.b16 %v819
  %v906 = vunpack.c.h.b16 %v819
  %v907 = vunpack.c.l.b16 %v820
  %v908 = vunpack.c.h.b16 %v820
  %v909 = vunpack.c.l.b16 %v821
  %v910 = vunpack.c.h.b16 %v821
  %v911 = vunpack.c.l.b16 %v822
  %v912 = vunpack.c.h.b16 %v822
  %v913 = vunpack.c.l.b16 %v823
  %v914 = vunpack.c.h.b16 %v823
  %v915 = vunpack.c.l.b16 %v824
  %v916 = vunpack.c.h.b16 %v824
  %v917 = vunpack.c.l.b16 %v825
  %v918 = vunpack.c.h.b16 %v825
  %v919 = vunpack.c.l.b16 %v826
  %v920 = vunpack.c.h.b16 %v826
  %v921 = vunpack.c.l.b16 %v827
  %v922 = vunpack.c.h.b16 %v827
  %v923 = vunpack.c.l.b16 %v828
  %v924 = vunpack.c.h.b16 %v828
  %v925 = vpack.c.b16 %v863, %v861
  %v926 = vpack.c.b16 %v864, %v862
  %v927 = vpack.c.b16 %v867, %v865
  %v928 = vpack.c.b16 %v868, %v866
  %v929 = vpack.c.b16 %v871, %v869
  %v930 = vpack.c.b16 %v872, %v870
  %v931 = vpack.c.b16 %v875, %v873
  %v932 = vpack.c.b16 %v876, %v874
  %v933 = vpack.c.b16 %v879, %v877
  %v934 = vpack.c.b16 %v880, %v878
  %v935 = vpack.c.b16 %v883, %v881
  %v936 = vpack.c.b16 %v884, %v882
  %v937 = vpack.c.b16 %v887, %v885
  %v938 = vpack.c.b16 %v888, %v886
  %v939 = vpack.c.b16 %v891, %v889
  %v940 = vpack.c.b16 %v892, %v890
  %v941 = vpack.c.b16 %v895, %v893
  %v942 = vpack.c.b16 %v896, %v894
  %v943 = vpack.c.b16 %v899, %v897
  %v944 = vpack.c.b16 %v900, %v898
  %v945 = vpack.c.b16 %v903, %v901
  %v946 = vpack.c.b16 %v904, %v902
  %v947 = vpack.c.b16 %v907, %v905
  %v948 = vpack.c.b16 %v908, %v906
  %v949 = vpack.c.b16 %v911, %v909
  %v950 = vpack.c.b16 %v912, %v910
  %v951 = vpack.c.b16 %v915, %v913
  %v952 = vpack.c.b16 %v916, %v914
  %v953 = vpack.c.b16 %v919, %v917
  %v954 = vpack.c.b16 %v920, %v918
  %v955 = vpack.c.b16 %v923, %v921
  %v956 = vpack.c.b16 %v924, %v922
  %989 = vmatprep.subr.bf16.mxu0 0
  %990 = vmatpush1.bf16.msra.mxu0 %v781
  %991 = vmatprep.subr.bf16.mxu0 0
  %992 = vmatpush1.bf16.msra.mxu0 %v782
  %993 = vmatprep.subr.bf16.mxu0 0
  %994 = vmatpush1.bf16.msra.mxu0 %v783
  %995 = vmatprep.subr.bf16.mxu0 0
  %996 = vmatpush1.bf16.msra.mxu0 %v784
  %997 = vmatprep.subr.bf16.mxu0 0
  %998 = vmatpush1.bf16.msra.mxu0 %v785
  %999 = vmatprep.subr.bf16.mxu0 0
  %1000 = vmatpush1.bf16.msra.mxu0 %v786
  %1001 = vmatprep.subr.bf16.mxu0 0
  %1002 = vmatpush1.bf16.msra.mxu0 %v787
  %1003 = vmatprep.subr.bf16.mxu0 0
  %1004 = vmatpush1.bf16.msra.mxu0 %v788
  %1005 = vmatprep.subr.bf16.mxu0 0
  %1006 = vmatpush1.bf16.msra.mxu0 %v789
  %1007 = vmatprep.subr.bf16.mxu0 0
  %1008 = vmatpush1.bf16.msra.mxu0 %v790
  %1009 = vmatprep.subr.bf16.mxu0 0
  %1010 = vmatpush1.bf16.msra.mxu0 %v791
  %1011 = vmatprep.subr.bf16.mxu0 0
  %1012 = vmatpush1.bf16.msra.mxu0 %v792
  %1013 = vmatprep.subr.bf16.mxu0 0
  %1014 = vmatpush1.bf16.msra.mxu0 %v793
  %1015 = vmatprep.subr.bf16.mxu0 0
  %1016 = vmatpush1.bf16.msra.mxu0 %v794
  %1017 = vmatprep.subr.bf16.mxu0 0
  %1018 = vmatpush1.bf16.msra.mxu0 %v795
  %1019 = vmatprep.subr.bf16.mxu0 0
  %1020 = vmatpush1.bf16.msra.mxu0 %v796
  %1021 = vmatprep.mubr.bf16.mxu0 %v926
  %1022 = vmatmul.mubr.bf16.gmra.mrb[0].mxu0 %v925
  %v1023 = vpop.f32.mrb[0].mxu0
  %v1024 = vadd.f32 0.0, %v1023
  %v1025 = vpop.f32.mrb[0].mxu0
  %v1026 = vpop.f32.mrb[0].mxu0
  %v1027 = vadd.f32 0.0, %v1026
  %v1028 = vpop.f32.mrb[0].mxu0
  %1029 = vmatprep.mubr.bf16.mxu0 %v928
  %1030 = vmatmul.mubr.bf16.gmra.mrb[0].mxu0 %v927
  %v1031 = vpop.f32.mrb[0].mxu0
  %v1032 = vadd.f32 0.0, %v1031
  %v1033 = vpop.f32.mrb[0].mxu0
  %v1034 = vpop.f32.mrb[0].mxu0
  %v1035 = vadd.f32 0.0, %v1034
  %v1036 = vpop.f32.mrb[0].mxu0
  %1037 = vmatprep.mubr.bf16.mxu0 %v930
  %1038 = vmatmul.mubr.bf16.gmra.mrb[0].mxu0 %v929
  %v1039 = vpop.f32.mrb[0].mxu0
  %v1040 = vadd.f32 0.0, %v1039
  %v1041 = vpop.f32.mrb[0].mxu0
  %v1042 = vpop.f32.mrb[0].mxu0
  %v1043 = vadd.f32 0.0, %v1042
  %v1044 = vpop.f32.mrb[0].mxu0
  %1045 = vmatprep.mubr.bf16.mxu0 %v932
  %1046 = vmatmul.mubr.bf16.gmra.mrb[0].mxu0 %v931
  %v1047 = vpop.f32.mrb[0].mxu0
  %v1048 = vadd.f32 0.0, %v1047
  %v1049 = vpop.f32.mrb[0].mxu0
  %v1050 = vpop.f32.mrb[0].mxu0
  %v1051 = vadd.f32 0.0, %v1050
  %v1052 = vpop.f32.mrb[0].mxu0
  %1053 = vmatprep.mubr.bf16.mxu0 %v934
  %1054 = vmatmul.mubr.bf16.gmra.mrb[0].mxu0 %v933
  %v1055 = vpop.f32.mrb[0].mxu0
  %v1056 = vadd.f32 0.0, %v1055
  %v1057 = vpop.f32.mrb[0].mxu0
  %v1058 = vpop.f32.mrb[0].mxu0
  %v1059 = vadd.f32 0.0, %v1058
  %v1060 = vpop.f32.mrb[0].mxu0
  %1061 = vmatprep.mubr.bf16.mxu0 %v936
  %1062 = vmatmul.mubr.bf16.gmra.mrb[0].mxu0 %v935
  %v1063 = vpop.f32.mrb[0].mxu0
  %v1064 = vadd.f32 0.0, %v1063
  %v1065 = vpop.f32.mrb[0].mxu0
  %v1066 = vpop.f32.mrb[0].mxu0
  %v1067 = vadd.f32 0.0, %v1066
  %v1068 = vpop.f32.mrb[0].mxu0
  %1069 = vmatprep.mubr.bf16.mxu0 %v938
  %1070 = vmatmul.mubr.bf16.gmra.mrb[0].mxu0 %v937
  %v1071 = vpop.f32.mrb[0].mxu0
  %v1072 = vadd.f32 0.0, %v1071
  %v1073 = vpop.f32.mrb[0].mxu0
  %v1074 = vpop.f32.mrb[0].mxu0
  %v1075 = vadd.f32 0.0, %v1074
  %v1076 = vpop.f32.mrb[0].mxu0
  %1077 = vmatprep.mubr.bf16.mxu0 %v940
  %1078 = vmatmul.mubr.bf16.gmra.mrb[0].mxu0 %v939
  %v1079 = vpop.f32.mrb[0].mxu0
  %v1080 = vadd.f32 0.0, %v1079
  %v1081 = vpop.f32.mrb[0].mxu0
  %v1082 = vpop.f32.mrb[0].mxu0
  %v1083 = vadd.f32 0.0, %v1082
  %v1084 = vpop.f32.mrb[0].mxu0
  %1085 = vmatprep.mubr.bf16.mxu0 %v942
  %1086 = vmatmul.mubr.bf16.gmra.mrb[0].mxu0 %v941
  %v1087 = vpop.f32.mrb[0].mxu0
  %v1088 = vadd.f32 0.0, %v1087
  %v1089 = vpop.f32.mrb[0].mxu0
  %v1090 = vpop.f32.mrb[0].mxu0
  %v1091 = vadd.f32 0.0, %v1090
  %v1092 = vpop.f32.mrb[0].mxu0
  %1093 = vmatprep.mubr.bf16.mxu0 %v944
  %1094 = vmatmul.mubr.bf16.gmra.mrb[0].mxu0 %v943
  %v1095 = vpop.f32.mrb[0].mxu0
  %v1096 = vadd.f32 0.0, %v1095
  %v1097 = vpop.f32.mrb[0].mxu0
  %v1098 = vpop.f32.mrb[0].mxu0
  %v1099 = vadd.f32 0.0, %v1098
  %v1100 = vpop.f32.mrb[0].mxu0
  %1101 = vmatprep.mubr.bf16.mxu0 %v946
  %1102 = vmatmul.mubr.bf16.gmra.mrb[0].mxu0 %v945
  %v1103 = vpop.f32.mrb[0].mxu0
  %v1104 = vadd.f32 0.0, %v1103
  %v1105 = vpop.f32.mrb[0].mxu0
  %v1106 = vpop.f32.mrb[0].mxu0
  %v1107 = vadd.f32 0.0, %v1106
  %v1108 = vpop.f32.mrb[0].mxu0
  %1109 = vmatprep.mubr.bf16.mxu0 %v948
  %1110 = vmatmul.mubr.bf16.gmra.mrb[0].mxu0 %v947
  %v1111 = vpop.f32.mrb[0].mxu0
  %v1112 = vadd.f32 0.0, %v1111
  %v1113 = vpop.f32.mrb[0].mxu0
  %v1114 = vpop.f32.mrb[0].mxu0
  %v1115 = vadd.f32 0.0, %v1114
  %v1116 = vpop.f32.mrb[0].mxu0
  %1117 = vmatprep.mubr.bf16.mxu0 %v950
  %1118 = vmatmul.mubr.bf16.gmra.mrb[0].mxu0 %v949
  %v1119 = vpop.f32.mrb[0].mxu0
  %v1120 = vadd.f32 0.0, %v1119
  %v1121 = vpop.f32.mrb[0].mxu0
  %v1122 = vpop.f32.mrb[0].mxu0
  %v1123 = vadd.f32 0.0, %v1122
  %v1124 = vpop.f32.mrb[0].mxu0
  %1125 = vmatprep.mubr.bf16.mxu0 %v952
  %1126 = vmatmul.mubr.bf16.gmra.mrb[0].mxu0 %v951
  %v1127 = vpop.f32.mrb[0].mxu0
  %v1128 = vadd.f32 0.0, %v1127
  %v1129 = vpop.f32.mrb[0].mxu0
  %v1130 = vpop.f32.mrb[0].mxu0
  %v1131 = vadd.f32 0.0, %v1130
  %v1132 = vpop.f32.mrb[0].mxu0
  %1133 = vmatprep.mubr.bf16.mxu0 %v954
  %1134 = vmatmul.mubr.bf16.gmra.mrb[0].mxu0 %v953
  %v1135 = vpop.f32.mrb[0].mxu0
  %v1136 = vadd.f32 0.0, %v1135
  %v1137 = vpop.f32.mrb[0].mxu0
  %v1138 = vpop.f32.mrb[0].mxu0
  %v1139 = vadd.f32 0.0, %v1138
  %v1140 = vpop.f32.mrb[0].mxu0
  %1141 = vmatprep.mubr.bf16.mxu0 %v956
  %1142 = vmatmul.mubr.bf16.gmra.mrb[0].mxu0 %v955
  %v1143 = vpop.f32.mrb[0].mxu0
  %v1144 = vadd.f32 0.0, %v1143
  %v1145 = vpop.f32.mrb[0].mxu0
  %v1146 = vpop.f32.mrb[0].mxu0
  %v1147 = vadd.f32 0.0, %v1146
  %v1148 = vpop.f32.mrb[0].mxu0
  %1149 = vdwg.mxu0
  %v1150 = vld [vmem:[%s2] sm:$0xff]
  %v1151 = vld [vmem:[%s2 + $0x8] sm:$0xff]
  %v1152 = vld [vmem:[%s2 + $0x10] sm:$0xff]
  %v1153 = vld [vmem:[%s2 + $0x18] sm:$0xff]
  %v1154 = vld [vmem:[%s2 + $0x20] sm:$0xff]
  %v1155 = vld [vmem:[%s2 + $0x28] sm:$0xff]
  %v1156 = vld [vmem:[%s2 + $0x30] sm:$0xff]
  %v1157 = vld [vmem:[%s2 + $0x38] sm:$0xff]
  %v1158 = vld [vmem:[%s2 + $0x40] sm:$0xff]
  %v1159 = vld [vmem:[%s2 + $0x48] sm:$0xff]
  %v1160 = vld [vmem:[%s2 + $0x50] sm:$0xff]
  %v1161 = vld [vmem:[%s2 + $0x58] sm:$0xff]
  %v1162 = vld [vmem:[%s2 + $0x60] sm:$0xff]
  %v1163 = vld [vmem:[%s2 + $0x68] sm:$0xff]
  %v1164 = vld [vmem:[%s2 + $0x70] sm:$0xff]
  %v1165 = vld [vmem:[%s2 + $0x78] sm:$0xff]
  %v1166 = vld [vmem:[%s2 + $0x80] sm:$0xff]
  %v1167 = vld [vmem:[%s2 + $0x88] sm:$0xff]
  %v1168 = vld [vmem:[%s2 + $0x90] sm:$0xff]
  %v1169 = vld [vmem:[%s2 + $0x98] sm:$0xff]
  %v1170 = vld [vmem:[%s2 + $0xa0] sm:$0xff]
  %v1171 = vld [vmem:[%s2 + $0xa8] sm:$0xff]
  %v1172 = vld [vmem:[%s2 + $0xb0] sm:$0xff]
  %v1173 = vld [vmem:[%s2 + $0xb8] sm:$0xff]
  %v1174 = vld [vmem:[%s2 + $0xc0] sm:$0xff]
  %v1175 = vld [vmem:[%s2 + $0xc8] sm:$0xff]
  %v1176 = vld [vmem:[%s2 + $0xd0] sm:$0xff]
  %v1177 = vld [vmem:[%s2 + $0xd8] sm:$0xff]
  %v1178 = vld [vmem:[%s2 + $0xe0] sm:$0xff]
  %v1179 = vld [vmem:[%s2 + $0xe8] sm:$0xff]
  %v1180 = vld [vmem:[%s2 + $0xf0] sm:$0xff]
  %v1181 = vld [vmem:[%s2 + $0xf8] sm:$0xff]
  %v1214 = vunpack.c.l.b16 %v1150
  %v1215 = vunpack.c.h.b16 %v1150
  %v1216 = vunpack.c.l.b16 %v1151
  %v1217 = vunpack.c.h.b16 %v1151
  %v1218 = vunpack.c.l.b16 %v1152
  %v1219 = vunpack.c.h.b16 %v1152
  %v1220 = vunpack.c.l.b16 %v1153
  %v1221 = vunpack.c.h.b16 %v1153
  %v1222 = vunpack.c.l.b16 %v1154
  %v1223 = vunpack.c.h.b16 %v1154
  %v1224 = vunpack.c.l.b16 %v1155
  %v1225 = vunpack.c.h.b16 %v1155
  %v1226 = vunpack.c.l.b16 %v1156
  %v1227 = vunpack.c.h.b16 %v1156
  %v1228 = vunpack.c.l.b16 %v1157
  %v1229 = vunpack.c.h.b16 %v1157
  %v1230 = vunpack.c.l.b16 %v1158
  %v1231 = vunpack.c.h.b16 %v1158
  %v1232 = vunpack.c.l.b16 %v1159
  %v1233 = vunpack.c.h.b16 %v1159
  %v1234 = vunpack.c.l.b16 %v1160
  %v1235 = vunpack.c.h.b16 %v1160
  %v1236 = vunpack.c.l.b16 %v1161
  %v1237 = vunpack.c.h.b16 %v1161
  %v1238 = vunpack.c.l.b16 %v1162
  %v1239 = vunpack.c.h.b16 %v1162
  %v1240 = vunpack.c.l.b16 %v1163
  %v1241 = vunpack.c.h.b16 %v1163
  %v1242 = vunpack.c.l.b16 %v1164
  %v1243 = vunpack.c.h.b16 %v1164
  %v1244 = vunpack.c.l.b16 %v1165
  %v1245 = vunpack.c.h.b16 %v1165
  %v1246 = vunpack.c.l.b16 %v1166
  %v1247 = vunpack.c.h.b16 %v1166
  %v1248 = vunpack.c.l.b16 %v1167
  %v1249 = vunpack.c.h.b16 %v1167
  %v1250 = vunpack.c.l.b16 %v1168
  %v1251 = vunpack.c.h.b16 %v1168
  %v1252 = vunpack.c.l.b16 %v1169
  %v1253 = vunpack.c.h.b16 %v1169
  %v1254 = vunpack.c.l.b16 %v1170
  %v1255 = vunpack.c.h.b16 %v1170
  %v1256 = vunpack.c.l.b16 %v1171
  %v1257 = vunpack.c.h.b16 %v1171
  %v1258 = vunpack.c.l.b16 %v1172
  %v1259 = vunpack.c.h.b16 %v1172
  %v1260 = vunpack.c.l.b16 %v1173
  %v1261 = vunpack.c.h.b16 %v1173
  %v1262 = vunpack.c.l.b16 %v1174
  %v1263 = vunpack.c.h.b16 %v1174
  %v1264 = vunpack.c.l.b16 %v1175
  %v1265 = vunpack.c.h.b16 %v1175
  %v1266 = vunpack.c.l.b16 %v1176
  %v1267 = vunpack.c.h.b16 %v1176
  %v1268 = vunpack.c.l.b16 %v1177
  %v1269 = vunpack.c.h.b16 %v1177
  %v1270 = vunpack.c.l.b16 %v1178
  %v1271 = vunpack.c.h.b16 %v1178
  %v1272 = vunpack.c.l.b16 %v1179
  %v1273 = vunpack.c.h.b16 %v1179
  %v1274 = vunpack.c.l.b16 %v1180
  %v1275 = vunpack.c.h.b16 %v1180
  %v1276 = vunpack.c.l.b16 %v1181
  %v1277 = vunpack.c.h.b16 %v1181
  %v1278 = vpack.c.b16 %v1216, %v1214
  %v1279 = vpack.c.b16 %v1217, %v1215
  %v1280 = vpack.c.b16 %v1220, %v1218
  %v1281 = vpack.c.b16 %v1221, %v1219
  %v1282 = vpack.c.b16 %v1224, %v1222
  %v1283 = vpack.c.b16 %v1225, %v1223
  %v1284 = vpack.c.b16 %v1228, %v1226
  %v1285 = vpack.c.b16 %v1229, %v1227
  %v1286 = vpack.c.b16 %v1232, %v1230
  %v1287 = vpack.c.b16 %v1233, %v1231
  %v1288 = vpack.c.b16 %v1236, %v1234
  %v1289 = vpack.c.b16 %v1237, %v1235
  %v1290 = vpack.c.b16 %v1240, %v1238
  %v1291 = vpack.c.b16 %v1241, %v1239
  %v1292 = vpack.c.b16 %v1244, %v1242
  %v1293 = vpack.c.b16 %v1245, %v1243
  %v1294 = vpack.c.b16 %v1248, %v1246
  %v1295 = vpack.c.b16 %v1249, %v1247
  %v1296 = vpack.c.b16 %v1252, %v1250
  %v1297 = vpack.c.b16 %v1253, %v1251
  %v1298 = vpack.c.b16 %v1256, %v1254
  %v1299 = vpack.c.b16 %v1257, %v1255
  %v1300 = vpack.c.b16 %v1260, %v1258
  %v1301 = vpack.c.b16 %v1261, %v1259
  %v1302 = vpack.c.b16 %v1264, %v1262
  %v1303 = vpack.c.b16 %v1265, %v1263
  %v1304 = vpack.c.b16 %v1268, %v1266
  %v1305 = vpack.c.b16 %v1269, %v1267
  %v1306 = vpack.c.b16 %v1272, %v1270
  %v1307 = vpack.c.b16 %v1273, %v1271
  %v1308 = vpack.c.b16 %v1276, %v1274
  %v1309 = vpack.c.b16 %v1277, %v1275
  %1358 = vrot.lane.b32.xlu0 %v781, 64
  %v1359 = vpop.permute.xlu0 %1358
  %1360 = vrot.lane.b32.xlu0 %v782, 64
  %v1361 = vpop.permute.xlu0 %1360
  %1362 = vrot.lane.b32.xlu0 %v783, 64
  %v1363 = vpop.permute.xlu0 %1362
  %1364 = vrot.lane.b32.xlu0 %v784, 64
  %v1365 = vpop.permute.xlu0 %1364
  %1366 = vrot.lane.b32.xlu0 %v785, 64
  %v1367 = vpop.permute.xlu0 %1366
  %1368 = vrot.lane.b32.xlu0 %v786, 64
  %v1369 = vpop.permute.xlu0 %1368
  %1370 = vrot.lane.b32.xlu0 %v787, 64
  %v1371 = vpop.permute.xlu0 %1370
  %1372 = vrot.lane.b32.xlu0 %v788, 64
  %v1373 = vpop.permute.xlu0 %1372
  %1374 = vrot.lane.b32.xlu0 %v789, 64
  %v1375 = vpop.permute.xlu0 %1374
  %1376 = vrot.lane.b32.xlu0 %v790, 64
  %v1377 = vpop.permute.xlu0 %1376
  %1378 = vrot.lane.b32.xlu0 %v791, 64
  %v1379 = vpop.permute.xlu0 %1378
  %1380 = vrot.lane.b32.xlu0 %v792, 64
  %v1381 = vpop.permute.xlu0 %1380
  %1382 = vrot.lane.b32.xlu0 %v793, 64
  %v1383 = vpop.permute.xlu0 %1382
  %1384 = vrot.lane.b32.xlu0 %v794, 64
  %v1385 = vpop.permute.xlu0 %1384
  %1386 = vrot.lane.b32.xlu0 %v795, 64
  %v1387 = vpop.permute.xlu0 %1386
  %1388 = vrot.lane.b32.xlu0 %v796, 64
  %v1389 = vpop.permute.xlu0 %1388
  %1406 = vmatprep.subr.bf16.mxu0 0
  %1407 = vmatpush1.bf16.msra.mxu0 %v1359
  %1408 = vmatprep.subr.bf16.mxu0 0
  %1409 = vmatpush1.bf16.msra.mxu0 %v1361
  %1410 = vmatprep.subr.bf16.mxu0 0
  %1411 = vmatpush1.bf16.msra.mxu0 %v1363
  %1412 = vmatprep.subr.bf16.mxu0 0
  %1413 = vmatpush1.bf16.msra.mxu0 %v1365
  %1414 = vmatprep.subr.bf16.mxu0 0
  %1415 = vmatpush1.bf16.msra.mxu0 %v1367
  %1416 = vmatprep.subr.bf16.mxu0 0
  %1417 = vmatpush1.bf16.msra.mxu0 %v1369
  %1418 = vmatprep.subr.bf16.mxu0 0
  %1419 = vmatpush1.bf16.msra.mxu0 %v1371
  %1420 = vmatprep.subr.bf16.mxu0 0
  %1421 = vmatpush1.bf16.msra.mxu0 %v1373
  %1422 = vmatprep.subr.bf16.mxu0 0
  %1423 = vmatpush1.bf16.msra.mxu0 %v1375
  %1424 = vmatprep.subr.bf16.mxu0 0
  %1425 = vmatpush1.bf16.msra.mxu0 %v1377
  %1426 = vmatprep.subr.bf16.mxu0 0
  %1427 = vmatpush1.bf16.msra.mxu0 %v1379
  %1428 = vmatprep.subr.bf16.mxu0 0
  %1429 = vmatpush1.bf16.msra.mxu0 %v1381
  %1430 = vmatprep.subr.bf16.mxu0 0
  %1431 = vmatpush1.bf16.msra.mxu0 %v1383
  %1432 = vmatprep.subr.bf16.mxu0 0
  %1433 = vmatpush1.bf16.msra.mxu0 %v1385
  %1434 = vmatprep.subr.bf16.mxu0 0
  %1435 = vmatpush1.bf16.msra.mxu0 %v1387
  %1436 = vmatprep.subr.bf16.mxu0 0
  %1437 = vmatpush1.bf16.msra.mxu0 %v1389
  %1438 = vmatprep.mubr.bf16.mxu0 %v1279
  %1439 = vmatmul.mubr.bf16.gmra.mrb[0].mxu0 %v1278
  %v1440 = vpop.f32.mrb[0].mxu0
  %v1441 = vadd.f32 0.0, %v1440
  %v1442 = vpop.f32.mrb[0].mxu0
  %v1443 = vpop.f32.mrb[0].mxu0
  %v1444 = vadd.f32 0.0, %v1443
  %v1445 = vpop.f32.mrb[0].mxu0
  %1446 = vmatprep.mubr.bf16.mxu0 %v1281
  %1447 = vmatmul.mubr.bf16.gmra.mrb[0].mxu0 %v1280
  %v1448 = vpop.f32.mrb[0].mxu0
  %v1449 = vadd.f32 0.0, %v1448
  %v1450 = vpop.f32.mrb[0].mxu0
  %v1451 = vpop.f32.mrb[0].mxu0
  %v1452 = vadd.f32 0.0, %v1451
  %v1453 = vpop.f32.mrb[0].mxu0
  %1454 = vmatprep.mubr.bf16.mxu0 %v1283
  %1455 = vmatmul.mubr.bf16.gmra.mrb[0].mxu0 %v1282
  %v1456 = vpop.f32.mrb[0].mxu0
  %v1457 = vadd.f32 0.0, %v1456
  %v1458 = vpop.f32.mrb[0].mxu0
  %v1459 = vpop.f32.mrb[0].mxu0
  %v1460 = vadd.f32 0.0, %v1459
  %v1461 = vpop.f32.mrb[0].mxu0
  %1462 = vmatprep.mubr.bf16.mxu0 %v1285
  %1463 = vmatmul.mubr.bf16.gmra.mrb[0].mxu0 %v1284
  %v1464 = vpop.f32.mrb[0].mxu0
  %v1465 = vadd.f32 0.0, %v1464
  %v1466 = vpop.f32.mrb[0].mxu0
  %v1467 = vpop.f32.mrb[0].mxu0
  %v1468 = vadd.f32 0.0, %v1467
  %v1469 = vpop.f32.mrb[0].mxu0
  %1470 = vmatprep.mubr.bf16.mxu0 %v1287
  %1471 = vmatmul.mubr.bf16.gmra.mrb[0].mxu0 %v1286
  %v1472 = vpop.f32.mrb[0].mxu0
  %v1473 = vadd.f32 0.0, %v1472
  %v1474 = vpop.f32.mrb[0].mxu0
  %v1475 = vpop.f32.mrb[0].mxu0
  %v1476 = vadd.f32 0.0, %v1475
  %v1477 = vpop.f32.mrb[0].mxu0
  %1478 = vmatprep.mubr.bf16.mxu0 %v1289
  %1479 = vmatmul.mubr.bf16.gmra.mrb[0].mxu0 %v1288
  %v1480 = vpop.f32.mrb[0].mxu0
  %v1481 = vadd.f32 0.0, %v1480
  %v1482 = vpop.f32.mrb[0].mxu0
  %v1483 = vpop.f32.mrb[0].mxu0
  %v1484 = vadd.f32 0.0, %v1483
  %v1485 = vpop.f32.mrb[0].mxu0
  %1486 = vmatprep.mubr.bf16.mxu0 %v1291
  %1487 = vmatmul.mubr.bf16.gmra.mrb[0].mxu0 %v1290
  %v1488 = vpop.f32.mrb[0].mxu0
  %v1489 = vadd.f32 0.0, %v1488
  %v1490 = vpop.f32.mrb[0].mxu0
  %v1491 = vpop.f32.mrb[0].mxu0
  %v1492 = vadd.f32 0.0, %v1491
  %v1493 = vpop.f32.mrb[0].mxu0
  %1494 = vmatprep.mubr.bf16.mxu0 %v1293
  %1495 = vmatmul.mubr.bf16.gmra.mrb[0].mxu0 %v1292
  %v1496 = vpop.f32.mrb[0].mxu0
  %v1497 = vadd.f32 0.0, %v1496
  %v1498 = vpop.f32.mrb[0].mxu0
  %v1499 = vpop.f32.mrb[0].mxu0
  %v1500 = vadd.f32 0.0, %v1499
  %v1501 = vpop.f32.mrb[0].mxu0
  %1502 = vmatprep.mubr.bf16.mxu0 %v1295
  %1503 = vmatmul.mubr.bf16.gmra.mrb[0].mxu0 %v1294
  %v1504 = vpop.f32.mrb[0].mxu0
  %v1505 = vadd.f32 0.0, %v1504
  %v1506 = vpop.f32.mrb[0].mxu0
  %v1507 = vpop.f32.mrb[0].mxu0
  %v1508 = vadd.f32 0.0, %v1507
  %v1509 = vpop.f32.mrb[0].mxu0
  %1510 = vmatprep.mubr.bf16.mxu0 %v1297
  %1511 = vmatmul.mubr.bf16.gmra.mrb[0].mxu0 %v1296
  %v1512 = vpop.f32.mrb[0].mxu0
  %v1513 = vadd.f32 0.0, %v1512
  %v1514 = vpop.f32.mrb[0].mxu0
  %v1515 = vpop.f32.mrb[0].mxu0
  %v1516 = vadd.f32 0.0, %v1515
  %v1517 = vpop.f32.mrb[0].mxu0
  %1518 = vmatprep.mubr.bf16.mxu0 %v1299
  %1519 = vmatmul.mubr.bf16.gmra.mrb[0].mxu0 %v1298
  %v1520 = vpop.f32.mrb[0].mxu0
  %v1521 = vadd.f32 0.0, %v1520
  %v1522 = vpop.f32.mrb[0].mxu0
  %v1523 = vpop.f32.mrb[0].mxu0
  %v1524 = vadd.f32 0.0, %v1523
  %v1525 = vpop.f32.mrb[0].mxu0
  %1526 = vmatprep.mubr.bf16.mxu0 %v1301
  %1527 = vmatmul.mubr.bf16.gmra.mrb[0].mxu0 %v1300
  %v1528 = vpop.f32.mrb[0].mxu0
  %v1529 = vadd.f32 0.0, %v1528
  %v1530 = vpop.f32.mrb[0].mxu0
  %v1531 = vpop.f32.mrb[0].mxu0
  %v1532 = vadd.f32 0.0, %v1531
  %v1533 = vpop.f32.mrb[0].mxu0
  %1534 = vmatprep.mubr.bf16.mxu0 %v1303
  %1535 = vmatmul.mubr.bf16.gmra.mrb[0].mxu0 %v1302
  %v1536 = vpop.f32.mrb[0].mxu0
  %v1537 = vadd.f32 0.0, %v1536
  %v1538 = vpop.f32.mrb[0].mxu0
  %v1539 = vpop.f32.mrb[0].mxu0
  %v1540 = vadd.f32 0.0, %v1539
  %v1541 = vpop.f32.mrb[0].mxu0
  %1542 = vmatprep.mubr.bf16.mxu0 %v1305
  %1543 = vmatmul.mubr.bf16.gmra.mrb[0].mxu0 %v1304
  %v1544 = vpop.f32.mrb[0].mxu0
  %v1545 = vadd.f32 0.0, %v1544
  %v1546 = vpop.f32.mrb[0].mxu0
  %v1547 = vpop.f32.mrb[0].mxu0
  %v1548 = vadd.f32 0.0, %v1547
  %v1549 = vpop.f32.mrb[0].mxu0
  %1550 = vmatprep.mubr.bf16.mxu0 %v1307
  %1551 = vmatmul.mubr.bf16.gmra.mrb[0].mxu0 %v1306
  %v1552 = vpop.f32.mrb[0].mxu0
  %v1553 = vadd.f32 0.0, %v1552
  %v1554 = vpop.f32.mrb[0].mxu0
  %v1555 = vpop.f32.mrb[0].mxu0
  %v1556 = vadd.f32 0.0, %v1555
  %v1557 = vpop.f32.mrb[0].mxu0
  %1558 = vmatprep.mubr.bf16.mxu0 %v1309
  %1559 = vmatmul.mubr.bf16.gmra.mrb[0].mxu0 %v1308
  %v1560 = vpop.f32.mrb[0].mxu0
  %v1561 = vadd.f32 0.0, %v1560
  %v1562 = vpop.f32.mrb[0].mxu0
  %v1563 = vpop.f32.mrb[0].mxu0
  %v1564 = vadd.f32 0.0, %v1563
  %v1565 = vpop.f32.mrb[0].mxu0
  %1566 = vdwg.mxu0
  %1599 = vrot.lane.b32.xlu0 %v1441, 64
  %v1600 = vpop.permute.xlu0 %1599
  %1601 = vrot.lane.b32.xlu0 %v1444, 64
  %v1602 = vpop.permute.xlu0 %1601
  %1603 = vrot.lane.b32.xlu0 %v1449, 64
  %v1604 = vpop.permute.xlu0 %1603
  %1605 = vrot.lane.b32.xlu0 %v1452, 64
  %v1606 = vpop.permute.xlu0 %1605
  %1607 = vrot.lane.b32.xlu0 %v1457, 64
  %v1608 = vpop.permute.xlu0 %1607
  %1609 = vrot.lane.b32.xlu0 %v1460, 64
  %v1610 = vpop.permute.xlu0 %1609
  %1611 = vrot.lane.b32.xlu0 %v1465, 64
  %v1612 = vpop.permute.xlu0 %1611
  %1613 = vrot.lane.b32.xlu0 %v1468, 64
  %v1614 = vpop.permute.xlu0 %1613
  %1615 = vrot.lane.b32.xlu0 %v1473, 64
  %v1616 = vpop.permute.xlu0 %1615
  %1617 = vrot.lane.b32.xlu0 %v1476, 64
  %v1618 = vpop.permute.xlu0 %1617
  %1619 = vrot.lane.b32.xlu0 %v1481, 64
  %v1620 = vpop.permute.xlu0 %1619
  %1621 = vrot.lane.b32.xlu0 %v1484, 64
  %v1622 = vpop.permute.xlu0 %1621
  %1623 = vrot.lane.b32.xlu0 %v1489, 64
  %v1624 = vpop.permute.xlu0 %1623
  %1625 = vrot.lane.b32.xlu0 %v1492, 64
  %v1626 = vpop.permute.xlu0 %1625
  %1627 = vrot.lane.b32.xlu0 %v1497, 64
  %v1628 = vpop.permute.xlu0 %1627
  %1629 = vrot.lane.b32.xlu0 %v1500, 64
  %v1630 = vpop.permute.xlu0 %1629
  %1631 = vrot.lane.b32.xlu0 %v1505, 64
  %v1632 = vpop.permute.xlu0 %1631
  %1633 = vrot.lane.b32.xlu0 %v1508, 64
  %v1634 = vpop.permute.xlu0 %1633
  %1635 = vrot.lane.b32.xlu0 %v1513, 64
  %v1636 = vpop.permute.xlu0 %1635
  %1637 = vrot.lane.b32.xlu0 %v1516, 64
  %v1638 = vpop.permute.xlu0 %1637
  %1639 = vrot.lane.b32.xlu0 %v1521, 64
  %v1640 = vpop.permute.xlu0 %1639
  %1641 = vrot.lane.b32.xlu0 %v1524, 64
  %v1642 = vpop.permute.xlu0 %1641
  %1643 = vrot.lane.b32.xlu0 %v1529, 64
  %v1644 = vpop.permute.xlu0 %1643
  %1645 = vrot.lane.b32.xlu0 %v1532, 64
  %v1646 = vpop.permute.xlu0 %1645
  %1647 = vrot.lane.b32.xlu0 %v1537, 64
  %v1648 = vpop.permute.xlu0 %1647
  %1649 = vrot.lane.b32.xlu0 %v1540, 64
  %v1650 = vpop.permute.xlu0 %1649
  %1651 = vrot.lane.b32.xlu0 %v1545, 64
  %v1652 = vpop.permute.xlu0 %1651
  %1653 = vrot.lane.b32.xlu0 %v1548, 64
  %v1654 = vpop.permute.xlu0 %1653
  %1655 = vrot.lane.b32.xlu0 %v1553, 64
  %v1656 = vpop.permute.xlu0 %1655
  %1657 = vrot.lane.b32.xlu0 %v1556, 64
  %v1658 = vpop.permute.xlu0 %1657
  %1659 = vrot.lane.b32.xlu0 %v1561, 64
  %v1660 = vpop.permute.xlu0 %1659
  %1661 = vrot.lane.b32.xlu0 %v1564, 64
  %v1662 = vpop.permute.xlu0 %1661
  %v1695 = vsel %vm459, %v1024, %v1600
  %v1696 = vsel %vm459, %v1027, %v1602
  %v1697 = vsel %vm459, %v1032, %v1604
  %v1698 = vsel %vm459, %v1035, %v1606
  %v1699 = vsel %vm459, %v1040, %v1608
  %v1700 = vsel %vm459, %v1043, %v1610
  %v1701 = vsel %vm459, %v1048, %v1612
  %v1702 = vsel %vm459, %v1051, %v1614
  %v1703 = vsel %vm459, %v1056, %v1616
  %v1704 = vsel %vm459, %v1059, %v1618
  %v1705 = vsel %vm459, %v1064, %v1620
  %v1706 = vsel %vm459, %v1067, %v1622
  %v1707 = vsel %vm459, %v1072, %v1624
  %v1708 = vsel %vm459, %v1075, %v1626
  %v1709 = vsel %vm459, %v1080, %v1628
  %v1710 = vsel %vm459, %v1083, %v1630
  %v1711 = vsel %vm459, %v1088, %v1632
  %v1712 = vsel %vm459, %v1091, %v1634
  %v1713 = vsel %vm459, %v1096, %v1636
  %v1714 = vsel %vm459, %v1099, %v1638
  %v1715 = vsel %vm459, %v1104, %v1640
  %v1716 = vsel %vm459, %v1107, %v1642
  %v1717 = vsel %vm459, %v1112, %v1644
  %v1718 = vsel %vm459, %v1115, %v1646
  %v1719 = vsel %vm459, %v1120, %v1648
  %v1720 = vsel %vm459, %v1123, %v1650
  %v1721 = vsel %vm459, %v1128, %v1652
  %v1722 = vsel %vm459, %v1131, %v1654
  %v1723 = vsel %vm459, %v1136, %v1656
  %v1724 = vsel %vm459, %v1139, %v1658
  %v1725 = vsel %vm459, %v1144, %v1660
  %v1726 = vsel %vm459, %v1147, %v1662
  %v1727 = vld [vmem:[%s6] sm:$0x1]
  %v1729 = vlaneseq
  %v1730 = vshrl.u32 %v1729, 7
  %v1731 = vsub.s32 0, %v1730
  %v1732 = vrot.slane %v1727, %v1731
  %v1734 = vadd.f32 %v1695, %v1732
  %v1735 = vadd.f32 %v1696, %v1732
  %v1736 = vadd.f32 %v1697, %v1732
  %v1737 = vadd.f32 %v1698, %v1732
  %v1738 = vadd.f32 %v1699, %v1732
  %v1739 = vadd.f32 %v1700, %v1732
  %v1740 = vadd.f32 %v1701, %v1732
  %v1741 = vadd.f32 %v1702, %v1732
  %v1742 = vadd.f32 %v1703, %v1732
  %v1743 = vadd.f32 %v1704, %v1732
  %v1744 = vadd.f32 %v1705, %v1732
  %v1745 = vadd.f32 %v1706, %v1732
  %v1746 = vadd.f32 %v1707, %v1732
  %v1747 = vadd.f32 %v1708, %v1732
  %v1748 = vadd.f32 %v1709, %v1732
  %v1749 = vadd.f32 %v1710, %v1732
  %v1750 = vadd.f32 %v1711, %v1732
  %v1751 = vadd.f32 %v1712, %v1732
  %v1752 = vadd.f32 %v1713, %v1732
  %v1753 = vadd.f32 %v1714, %v1732
  %v1754 = vadd.f32 %v1715, %v1732
  %v1755 = vadd.f32 %v1716, %v1732
  %v1756 = vadd.f32 %v1717, %v1732
  %v1757 = vadd.f32 %v1718, %v1732
  %v1758 = vadd.f32 %v1719, %v1732
  %v1759 = vadd.f32 %v1720, %v1732
  %v1760 = vadd.f32 %v1721, %v1732
  %v1761 = vadd.f32 %v1722, %v1732
  %v1762 = vadd.f32 %v1723, %v1732
  %v1763 = vadd.f32 %v1724, %v1732
  %v1764 = vadd.f32 %v1725, %v1732
  %v1765 = vadd.f32 %v1726, %v1732
  %v1766 = vld [vmem:[%s7] sm:$0xff]
  %v1767 = vld [vmem:[%s7 + $0x8] sm:$0xff]
  %v1768 = vld [vmem:[%s7 + $0x10] sm:$0xff]
  %v1769 = vld [vmem:[%s7 + $0x18] sm:$0xff]
  %v1770 = vld [vmem:[%s7 + $0x20] sm:$0xff]
  %v1771 = vld [vmem:[%s7 + $0x28] sm:$0xff]
  %v1772 = vld [vmem:[%s7 + $0x30] sm:$0xff]
  %v1773 = vld [vmem:[%s7 + $0x38] sm:$0xff]
  %v1774 = vld [vmem:[%s7 + $0x40] sm:$0xff]
  %v1775 = vld [vmem:[%s7 + $0x48] sm:$0xff]
  %v1776 = vld [vmem:[%s7 + $0x50] sm:$0xff]
  %v1777 = vld [vmem:[%s7 + $0x58] sm:$0xff]
  %v1778 = vld [vmem:[%s7 + $0x60] sm:$0xff]
  %v1779 = vld [vmem:[%s7 + $0x68] sm:$0xff]
  %v1780 = vld [vmem:[%s7 + $0x70] sm:$0xff]
  %v1781 = vld [vmem:[%s7 + $0x78] sm:$0xff]
  %1782 = vmatprep.subr.mxu0 0.0
  %1783 = vmatpush1.msra.mxu0 %v1766
  %1784 = vmatprep.subr.mxu0 0.0
  %1785 = vmatpush1.msra.mxu0 %v1767
  %1786 = vmatprep.subr.mxu0 0.0
  %1787 = vmatpush1.msra.mxu0 %v1768
  %1788 = vmatprep.subr.mxu0 0.0
  %1789 = vmatpush1.msra.mxu0 %v1769
  %1790 = vmatprep.subr.mxu0 0.0
  %1791 = vmatpush1.msra.mxu0 %v1770
  %1792 = vmatprep.subr.mxu0 0.0
  %1793 = vmatpush1.msra.mxu0 %v1771
  %1794 = vmatprep.subr.mxu0 0.0
  %1795 = vmatpush1.msra.mxu0 %v1772
  %1796 = vmatprep.subr.mxu0 0.0
  %1797 = vmatpush1.msra.mxu0 %v1773
  %1798 = vmatprep.subr.mxu0 0.0
  %1799 = vmatpush1.msra.mxu0 %v1774
  %1800 = vmatprep.subr.mxu0 0.0
  %1801 = vmatpush1.msra.mxu0 %v1775
  %1802 = vmatprep.subr.mxu0 0.0
  %1803 = vmatpush1.msra.mxu0 %v1776
  %1804 = vmatprep.subr.mxu0 0.0
  %1805 = vmatpush1.msra.mxu0 %v1777
  %1806 = vmatprep.subr.mxu0 0.0
  %1807 = vmatpush1.msra.mxu0 %v1778
  %1808 = vmatprep.subr.mxu0 0.0
  %1809 = vmatpush1.msra.mxu0 %v1779
  %1810 = vmatprep.subr.mxu0 0.0
  %1811 = vmatpush1.msra.mxu0 %v1780
  %1812 = vmatprep.subr.mxu0 0.0
  %1813 = vmatpush1.msra.mxu0 %v1781
  %1814 = vmatprep.subr.mxu0 0.0
  %1815 = vmatpush1.msra.mxu0 0.0
  %1816 = vmatprep.subr.mxu0 0.0
  %1817 = vmatpush1.msra.mxu0 0.0
  %1818 = vmatprep.subr.mxu0 0.0
  %1819 = vmatpush1.msra.mxu0 0.0
  %1820 = vmatprep.subr.mxu0 0.0
  %1821 = vmatpush1.msra.mxu0 0.0
  %1822 = vmatprep.subr.mxu0 0.0
  %1823 = vmatpush1.msra.mxu0 0.0
  %1824 = vmatprep.subr.mxu0 0.0
  %1825 = vmatpush1.msra.mxu0 0.0
  %1826 = vmatprep.subr.mxu0 0.0
  %1827 = vmatpush1.msra.mxu0 0.0
  %1828 = vmatprep.subr.mxu0 0.0
  %1829 = vmatpush1.msra.mxu0 0.0
  %1830 = vmatprep.subr.mxu0 0.0
  %1831 = vmatpush1.msra.mxu0 0.0
  %1832 = vmatprep.subr.mxu0 0.0
  %1833 = vmatpush1.msra.mxu0 0.0
  %1834 = vmatprep.subr.mxu0 0.0
  %1835 = vmatpush1.msra.mxu0 0.0
  %1836 = vmatprep.subr.mxu0 0.0
  %1837 = vmatpush1.msra.mxu0 0.0
  %1838 = vmatprep.subr.mxu0 0.0
  %1839 = vmatpush1.msra.mxu0 0.0
  %1840 = vmatprep.subr.mxu0 0.0
  %1841 = vmatpush1.msra.mxu0 0.0
  %1842 = vmatprep.subr.mxu0 0.0
  %1843 = vmatpush1.msra.mxu0 0.0
  %1844 = vmatprep.subr.mxu0 0.0
  %1845 = vmatpush1.msra.mxu0 0.0
  %1846 = vmatprep.mubr.f32.mxu0 0.0
  %1847 = vmatmul.mubr.f32.gmra.mrb[0].mxu0 %v1734
  %v1848 = vpop.f32.mrb[0].mxu0
  %v1849 = vadd.f32 0.0, %v1848
  %v1850 = vpop.f32.mrb[0].mxu0
  %1851 = vmatprep.mubr.f32.mxu0 0.0
  %1852 = vmatmul.mubr.f32.gmra.mrb[0].mxu0 %v1735
  %v1853 = vpop.f32.mrb[0].mxu0
  %v1854 = vadd.f32 0.0, %v1853
  %v1855 = vpop.f32.mrb[0].mxu0
  %1856 = vmatprep.mubr.f32.mxu0 0.0
  %1857 = vmatmul.mubr.f32.gmra.mrb[0].mxu0 %v1736
  %v1858 = vpop.f32.mrb[0].mxu0
  %v1859 = vadd.f32 0.0, %v1858
  %v1860 = vpop.f32.mrb[0].mxu0
  %1861 = vmatprep.mubr.f32.mxu0 0.0
  %1862 = vmatmul.mubr.f32.gmra.mrb[0].mxu0 %v1737
  %v1863 = vpop.f32.mrb[0].mxu0
  %v1864 = vadd.f32 0.0, %v1863
  %v1865 = vpop.f32.mrb[0].mxu0
  %1866 = vmatprep.mubr.f32.mxu0 0.0
  %1867 = vmatmul.mubr.f32.gmra.mrb[0].mxu0 %v1738
  %v1868 = vpop.f32.mrb[0].mxu0
  %v1869 = vadd.f32 0.0, %v1868
  %v1870 = vpop.f32.mrb[0].mxu0
  %1871 = vmatprep.mubr.f32.mxu0 0.0
  %1872 = vmatmul.mubr.f32.gmra.mrb[0].mxu0 %v1739
  %v1873 = vpop.f32.mrb[0].mxu0
  %v1874 = vadd.f32 0.0, %v1873
  %v1875 = vpop.f32.mrb[0].mxu0
  %1876 = vmatprep.mubr.f32.mxu0 0.0
  %1877 = vmatmul.mubr.f32.gmra.mrb[0].mxu0 %v1740
  %v1878 = vpop.f32.mrb[0].mxu0
  %v1879 = vadd.f32 0.0, %v1878
  %v1880 = vpop.f32.mrb[0].mxu0
  %1881 = vmatprep.mubr.f32.mxu0 0.0
  %1882 = vmatmul.mubr.f32.gmra.mrb[0].mxu0 %v1741
  %v1883 = vpop.f32.mrb[0].mxu0
  %v1884 = vadd.f32 0.0, %v1883
  %v1885 = vpop.f32.mrb[0].mxu0
  %1886 = vmatprep.mubr.f32.mxu0 0.0
  %1887 = vmatmul.mubr.f32.gmra.mrb[0].mxu0 %v1742
  %v1888 = vpop.f32.mrb[0].mxu0
  %v1889 = vadd.f32 0.0, %v1888
  %v1890 = vpop.f32.mrb[0].mxu0
  %1891 = vmatprep.mubr.f32.mxu0 0.0
  %1892 = vmatmul.mubr.f32.gmra.mrb[0].mxu0 %v1743
  %v1893 = vpop.f32.mrb[0].mxu0
  %v1894 = vadd.f32 0.0, %v1893
  %v1895 = vpop.f32.mrb[0].mxu0
  %1896 = vmatprep.mubr.f32.mxu0 0.0
  %1897 = vmatmul.mubr.f32.gmra.mrb[0].mxu0 %v1744
  %v1898 = vpop.f32.mrb[0].mxu0
  %v1899 = vadd.f32 0.0, %v1898
  %v1900 = vpop.f32.mrb[0].mxu0
  %1901 = vmatprep.mubr.f32.mxu0 0.0
  %1902 = vmatmul.mubr.f32.gmra.mrb[0].mxu0 %v1745
  %v1903 = vpop.f32.mrb[0].mxu0
  %v1904 = vadd.f32 0.0, %v1903
  %v1905 = vpop.f32.mrb[0].mxu0
  %1906 = vmatprep.mubr.f32.mxu0 0.0
  %1907 = vmatmul.mubr.f32.gmra.mrb[0].mxu0 %v1746
  %v1908 = vpop.f32.mrb[0].mxu0
  %v1909 = vadd.f32 0.0, %v1908
  %v1910 = vpop.f32.mrb[0].mxu0
  %1911 = vmatprep.mubr.f32.mxu0 0.0
  %1912 = vmatmul.mubr.f32.gmra.mrb[0].mxu0 %v1747
  %v1913 = vpop.f32.mrb[0].mxu0
  %v1914 = vadd.f32 0.0, %v1913
  %v1915 = vpop.f32.mrb[0].mxu0
  %1916 = vmatprep.mubr.f32.mxu0 0.0
  %1917 = vmatmul.mubr.f32.gmra.mrb[0].mxu0 %v1748
  %v1918 = vpop.f32.mrb[0].mxu0
  %v1919 = vadd.f32 0.0, %v1918
  %v1920 = vpop.f32.mrb[0].mxu0
  %1921 = vmatprep.mubr.f32.mxu0 0.0
  %1922 = vmatmul.mubr.f32.gmra.mrb[0].mxu0 %v1749
  %v1923 = vpop.f32.mrb[0].mxu0
  %v1924 = vadd.f32 0.0, %v1923
  %v1925 = vpop.f32.mrb[0].mxu0
  %1926 = vmatprep.mubr.f32.mxu0 0.0
  %1927 = vmatmul.mubr.f32.gmra.mrb[0].mxu0 %v1750
  %v1928 = vpop.f32.mrb[0].mxu0
  %v1929 = vadd.f32 0.0, %v1928
  %v1930 = vpop.f32.mrb[0].mxu0
  %1931 = vmatprep.mubr.f32.mxu0 0.0
  %1932 = vmatmul.mubr.f32.gmra.mrb[0].mxu0 %v1751
  %v1933 = vpop.f32.mrb[0].mxu0
  %v1934 = vadd.f32 0.0, %v1933
  %v1935 = vpop.f32.mrb[0].mxu0
  %1936 = vmatprep.mubr.f32.mxu0 0.0
  %1937 = vmatmul.mubr.f32.gmra.mrb[0].mxu0 %v1752
  %v1938 = vpop.f32.mrb[0].mxu0
  %v1939 = vadd.f32 0.0, %v1938
  %v1940 = vpop.f32.mrb[0].mxu0
  %1941 = vmatprep.mubr.f32.mxu0 0.0
  %1942 = vmatmul.mubr.f32.gmra.mrb[0].mxu0 %v1753
  %v1943 = vpop.f32.mrb[0].mxu0
  %v1944 = vadd.f32 0.0, %v1943
  %v1945 = vpop.f32.mrb[0].mxu0
  %1946 = vmatprep.mubr.f32.mxu0 0.0
  %1947 = vmatmul.mubr.f32.gmra.mrb[0].mxu0 %v1754
  %v1948 = vpop.f32.mrb[0].mxu0
  %v1949 = vadd.f32 0.0, %v1948
  %v1950 = vpop.f32.mrb[0].mxu0
  %1951 = vmatprep.mubr.f32.mxu0 0.0
  %1952 = vmatmul.mubr.f32.gmra.mrb[0].mxu0 %v1755
  %v1953 = vpop.f32.mrb[0].mxu0
  %v1954 = vadd.f32 0.0, %v1953
  %v1955 = vpop.f32.mrb[0].mxu0
  %1956 = vmatprep.mubr.f32.mxu0 0.0
  %1957 = vmatmul.mubr.f32.gmra.mrb[0].mxu0 %v1756
  %v1958 = vpop.f32.mrb[0].mxu0
  %v1959 = vadd.f32 0.0, %v1958
  %v1960 = vpop.f32.mrb[0].mxu0
  %1961 = vmatprep.mubr.f32.mxu0 0.0
  %1962 = vmatmul.mubr.f32.gmra.mrb[0].mxu0 %v1757
  %v1963 = vpop.f32.mrb[0].mxu0
  %v1964 = vadd.f32 0.0, %v1963
  %v1965 = vpop.f32.mrb[0].mxu0
  %1966 = vmatprep.mubr.f32.mxu0 0.0
  %1967 = vmatmul.mubr.f32.gmra.mrb[0].mxu0 %v1758
  %v1968 = vpop.f32.mrb[0].mxu0
  %v1969 = vadd.f32 0.0, %v1968
  %v1970 = vpop.f32.mrb[0].mxu0
  %1971 = vmatprep.mubr.f32.mxu0 0.0
  %1972 = vmatmul.mubr.f32.gmra.mrb[0].mxu0 %v1759
  %v1973 = vpop.f32.mrb[0].mxu0
  %v1974 = vadd.f32 0.0, %v1973
  %v1975 = vpop.f32.mrb[0].mxu0
  %1976 = vmatprep.mubr.f32.mxu0 0.0
  %1977 = vmatmul.mubr.f32.gmra.mrb[0].mxu0 %v1760
  %v1978 = vpop.f32.mrb[0].mxu0
  %v1979 = vadd.f32 0.0, %v1978
  %v1980 = vpop.f32.mrb[0].mxu0
  %1981 = vmatprep.mubr.f32.mxu0 0.0
  %1982 = vmatmul.mubr.f32.gmra.mrb[0].mxu0 %v1761
  %v1983 = vpop.f32.mrb[0].mxu0
  %v1984 = vadd.f32 0.0, %v1983
  %v1985 = vpop.f32.mrb[0].mxu0
  %1986 = vmatprep.mubr.f32.mxu0 0.0
  %1987 = vmatmul.mubr.f32.gmra.mrb[0].mxu0 %v1762
  %v1988 = vpop.f32.mrb[0].mxu0
  %v1989 = vadd.f32 0.0, %v1988
  %v1990 = vpop.f32.mrb[0].mxu0
  %1991 = vmatprep.mubr.f32.mxu0 0.0
  %1992 = vmatmul.mubr.f32.gmra.mrb[0].mxu0 %v1763
  %v1993 = vpop.f32.mrb[0].mxu0
  %v1994 = vadd.f32 0.0, %v1993
  %v1995 = vpop.f32.mrb[0].mxu0
  %1996 = vmatprep.mubr.f32.mxu0 0.0
  %1997 = vmatmul.mubr.f32.gmra.mrb[0].mxu0 %v1764
  %v1998 = vpop.f32.mrb[0].mxu0
  %v1999 = vadd.f32 0.0, %v1998
  %v2000 = vpop.f32.mrb[0].mxu0
  %2001 = vmatprep.mubr.f32.mxu0 0.0
  %2002 = vmatmul.mubr.f32.gmra.mrb[0].mxu0 %v1765
  %v2003 = vpop.f32.mrb[0].mxu0
  %v2004 = vadd.f32 0.0, %v2003
  %v2005 = vpop.f32.mrb[0].mxu0
  %2006 = vdwg.mxu0
  %v2007 = vpack.c.bf16 %v1854, %v1849
  %v2008 = vpack.c.bf16 %v1864, %v1859
  %v2009 = vpack.c.bf16 %v1874, %v1869
  %v2010 = vpack.c.bf16 %v1884, %v1879
  %v2011 = vpack.c.bf16 %v1894, %v1889
  %v2012 = vpack.c.bf16 %v1904, %v1899
  %v2013 = vpack.c.bf16 %v1914, %v1909
  %v2014 = vpack.c.bf16 %v1924, %v1919
  %v2015 = vpack.c.bf16 %v1934, %v1929
  %v2016 = vpack.c.bf16 %v1944, %v1939
  %v2017 = vpack.c.bf16 %v1954, %v1949
  %v2018 = vpack.c.bf16 %v1964, %v1959
  %v2019 = vpack.c.bf16 %v1974, %v1969
  %v2020 = vpack.c.bf16 %v1984, %v1979
  %v2021 = vpack.c.bf16 %v1994, %v1989
  %v2022 = vpack.c.bf16 %v2004, %v1999
  %2023 = vmatprep.subr.bf16.mxu0 0
  %2024 = vmatpush1.bf16.msra.mxu0 %v2007
  %2025 = vmatprep.subr.bf16.mxu0 0
  %2026 = vmatpush1.bf16.msra.mxu0 %v2008
  %2027 = vmatprep.subr.bf16.mxu0 0
  %2028 = vmatpush1.bf16.msra.mxu0 %v2009
  %2029 = vmatprep.subr.bf16.mxu0 0
  %2030 = vmatpush1.bf16.msra.mxu0 %v2010
  %2031 = vmatprep.subr.bf16.mxu0 0
  %2032 = vmatpush1.bf16.msra.mxu0 %v2011
  %2033 = vmatprep.subr.bf16.mxu0 0
  %2034 = vmatpush1.bf16.msra.mxu0 %v2012
  %2035 = vmatprep.subr.bf16.mxu0 0
  %2036 = vmatpush1.bf16.msra.mxu0 %v2013
  %2037 = vmatprep.subr.bf16.mxu0 0
  %2038 = vmatpush1.bf16.msra.mxu0 %v2014
  %2039 = vmatprep.subr.bf16.mxu0 0
  %2040 = vmatpush1.bf16.msra.mxu0 %v2015
  %2041 = vmatprep.subr.bf16.mxu0 0
  %2042 = vmatpush1.bf16.msra.mxu0 %v2016
  %2043 = vmatprep.subr.bf16.mxu0 0
  %2044 = vmatpush1.bf16.msra.mxu0 %v2017
  %2045 = vmatprep.subr.bf16.mxu0 0
  %2046 = vmatpush1.bf16.msra.mxu0 %v2018
  %2047 = vmatprep.subr.bf16.mxu0 0
  %2048 = vmatpush1.bf16.msra.mxu0 %v2019
  %2049 = vmatprep.subr.bf16.mxu0 0
  %2050 = vmatpush1.bf16.msra.mxu0 %v2020
  %2051 = vmatprep.subr.bf16.mxu0 0
  %2052 = vmatpush1.bf16.msra.mxu0 %v2021
  %2053 = vmatprep.subr.bf16.mxu0 0
  %2054 = vmatpush1.bf16.msra.mxu0 %v2022
  %2055 = vmatprep.mubr.bf16.mxu0 %v926
  %2056 = vmatmul.mubr.bf16.gmra.mrb[0].mxu0 %v925
  %v2057 = vpop.f32.mrb[0].mxu0
  %v2058 = vadd.f32 0.0, %v2057
  %v2059 = vpop.f32.mrb[0].mxu0
  %v2060 = vpop.f32.mrb[0].mxu0
  %v2061 = vadd.f32 0.0, %v2060
  %v2062 = vpop.f32.mrb[0].mxu0
  %2063 = vmatprep.mubr.bf16.mxu0 %v928
  %2064 = vmatmul.mubr.bf16.gmra.mrb[0].mxu0 %v927
  %v2065 = vpop.f32.mrb[0].mxu0
  %v2066 = vadd.f32 0.0, %v2065
  %v2067 = vpop.f32.mrb[0].mxu0
  %v2068 = vpop.f32.mrb[0].mxu0
  %v2069 = vadd.f32 0.0, %v2068
  %v2070 = vpop.f32.mrb[0].mxu0
  %2071 = vmatprep.mubr.bf16.mxu0 %v930
  %2072 = vmatmul.mubr.bf16.gmra.mrb[0].mxu0 %v929
  %v2073 = vpop.f32.mrb[0].mxu0
  %v2074 = vadd.f32 0.0, %v2073
  %v2075 = vpop.f32.mrb[0].mxu0
  %v2076 = vpop.f32.mrb[0].mxu0
  %v2077 = vadd.f32 0.0, %v2076
  %v2078 = vpop.f32.mrb[0].mxu0
  %2079 = vmatprep.mubr.bf16.mxu0 %v932
  %2080 = vmatmul.mubr.bf16.gmra.mrb[0].mxu0 %v931
  %v2081 = vpop.f32.mrb[0].mxu0
  %v2082 = vadd.f32 0.0, %v2081
  %v2083 = vpop.f32.mrb[0].mxu0
  %v2084 = vpop.f32.mrb[0].mxu0
  %v2085 = vadd.f32 0.0, %v2084
  %v2086 = vpop.f32.mrb[0].mxu0
  %2087 = vmatprep.mubr.bf16.mxu0 %v934
  %2088 = vmatmul.mubr.bf16.gmra.mrb[0].mxu0 %v933
  %v2089 = vpop.f32.mrb[0].mxu0
  %v2090 = vadd.f32 0.0, %v2089
  %v2091 = vpop.f32.mrb[0].mxu0
  %v2092 = vpop.f32.mrb[0].mxu0
  %v2093 = vadd.f32 0.0, %v2092
  %v2094 = vpop.f32.mrb[0].mxu0
  %2095 = vmatprep.mubr.bf16.mxu0 %v936
  %2096 = vmatmul.mubr.bf16.gmra.mrb[0].mxu0 %v935
  %v2097 = vpop.f32.mrb[0].mxu0
  %v2098 = vadd.f32 0.0, %v2097
  %v2099 = vpop.f32.mrb[0].mxu0
  %v2100 = vpop.f32.mrb[0].mxu0
  %v2101 = vadd.f32 0.0, %v2100
  %v2102 = vpop.f32.mrb[0].mxu0
  %2103 = vmatprep.mubr.bf16.mxu0 %v938
  %2104 = vmatmul.mubr.bf16.gmra.mrb[0].mxu0 %v937
  %v2105 = vpop.f32.mrb[0].mxu0
  %v2106 = vadd.f32 0.0, %v2105
  %v2107 = vpop.f32.mrb[0].mxu0
  %v2108 = vpop.f32.mrb[0].mxu0
  %v2109 = vadd.f32 0.0, %v2108
  %v2110 = vpop.f32.mrb[0].mxu0
  %2111 = vmatprep.mubr.bf16.mxu0 %v940
  %2112 = vmatmul.mubr.bf16.gmra.mrb[0].mxu0 %v939
  %v2113 = vpop.f32.mrb[0].mxu0
  %v2114 = vadd.f32 0.0, %v2113
  %v2115 = vpop.f32.mrb[0].mxu0
  %v2116 = vpop.f32.mrb[0].mxu0
  %v2117 = vadd.f32 0.0, %v2116
  %v2118 = vpop.f32.mrb[0].mxu0
  %2119 = vmatprep.mubr.bf16.mxu0 %v942
  %2120 = vmatmul.mubr.bf16.gmra.mrb[0].mxu0 %v941
  %v2121 = vpop.f32.mrb[0].mxu0
  %v2122 = vadd.f32 0.0, %v2121
  %v2123 = vpop.f32.mrb[0].mxu0
  %v2124 = vpop.f32.mrb[0].mxu0
  %v2125 = vadd.f32 0.0, %v2124
  %v2126 = vpop.f32.mrb[0].mxu0
  %2127 = vmatprep.mubr.bf16.mxu0 %v944
  %2128 = vmatmul.mubr.bf16.gmra.mrb[0].mxu0 %v943
  %v2129 = vpop.f32.mrb[0].mxu0
  %v2130 = vadd.f32 0.0, %v2129
  %v2131 = vpop.f32.mrb[0].mxu0
  %v2132 = vpop.f32.mrb[0].mxu0
  %v2133 = vadd.f32 0.0, %v2132
  %v2134 = vpop.f32.mrb[0].mxu0
  %2135 = vmatprep.mubr.bf16.mxu0 %v946
  %2136 = vmatmul.mubr.bf16.gmra.mrb[0].mxu0 %v945
  %v2137 = vpop.f32.mrb[0].mxu0
  %v2138 = vadd.f32 0.0, %v2137
  %v2139 = vpop.f32.mrb[0].mxu0
  %v2140 = vpop.f32.mrb[0].mxu0
  %v2141 = vadd.f32 0.0, %v2140
  %v2142 = vpop.f32.mrb[0].mxu0
  %2143 = vmatprep.mubr.bf16.mxu0 %v948
  %2144 = vmatmul.mubr.bf16.gmra.mrb[0].mxu0 %v947
  %v2145 = vpop.f32.mrb[0].mxu0
  %v2146 = vadd.f32 0.0, %v2145
  %v2147 = vpop.f32.mrb[0].mxu0
  %v2148 = vpop.f32.mrb[0].mxu0
  %v2149 = vadd.f32 0.0, %v2148
  %v2150 = vpop.f32.mrb[0].mxu0
  %2151 = vmatprep.mubr.bf16.mxu0 %v950
  %2152 = vmatmul.mubr.bf16.gmra.mrb[0].mxu0 %v949
  %v2153 = vpop.f32.mrb[0].mxu0
  %v2154 = vadd.f32 0.0, %v2153
  %v2155 = vpop.f32.mrb[0].mxu0
  %v2156 = vpop.f32.mrb[0].mxu0
  %v2157 = vadd.f32 0.0, %v2156
  %v2158 = vpop.f32.mrb[0].mxu0
  %2159 = vmatprep.mubr.bf16.mxu0 %v952
  %2160 = vmatmul.mubr.bf16.gmra.mrb[0].mxu0 %v951
  %v2161 = vpop.f32.mrb[0].mxu0
  %v2162 = vadd.f32 0.0, %v2161
  %v2163 = vpop.f32.mrb[0].mxu0
  %v2164 = vpop.f32.mrb[0].mxu0
  %v2165 = vadd.f32 0.0, %v2164
  %v2166 = vpop.f32.mrb[0].mxu0
  %2167 = vmatprep.mubr.bf16.mxu0 %v954
  %2168 = vmatmul.mubr.bf16.gmra.mrb[0].mxu0 %v953
  %v2169 = vpop.f32.mrb[0].mxu0
  %v2170 = vadd.f32 0.0, %v2169
  %v2171 = vpop.f32.mrb[0].mxu0
  %v2172 = vpop.f32.mrb[0].mxu0
  %v2173 = vadd.f32 0.0, %v2172
  %v2174 = vpop.f32.mrb[0].mxu0
  %2175 = vmatprep.mubr.bf16.mxu0 %v956
  %2176 = vmatmul.mubr.bf16.gmra.mrb[0].mxu0 %v955
  %v2177 = vpop.f32.mrb[0].mxu0
  %v2178 = vadd.f32 0.0, %v2177
  %v2179 = vpop.f32.mrb[0].mxu0
  %v2180 = vpop.f32.mrb[0].mxu0
  %v2181 = vadd.f32 0.0, %v2180
  %v2182 = vpop.f32.mrb[0].mxu0
  %2183 = vdwg.mxu0
  %2200 = vrot.lane.b32.xlu0 %v2007, 64
  %v2201 = vpop.permute.xlu0 %2200
  %2202 = vrot.lane.b32.xlu0 %v2008, 64
  %v2203 = vpop.permute.xlu0 %2202
  %2204 = vrot.lane.b32.xlu0 %v2009, 64
  %v2205 = vpop.permute.xlu0 %2204
  %2206 = vrot.lane.b32.xlu0 %v2010, 64
  %v2207 = vpop.permute.xlu0 %2206
  %2208 = vrot.lane.b32.xlu0 %v2011, 64
  %v2209 = vpop.permute.xlu0 %2208
  %2210 = vrot.lane.b32.xlu0 %v2012, 64
  %v2211 = vpop.permute.xlu0 %2210
  %2212 = vrot.lane.b32.xlu0 %v2013, 64
  %v2213 = vpop.permute.xlu0 %2212
  %2214 = vrot.lane.b32.xlu0 %v2014, 64
  %v2215 = vpop.permute.xlu0 %2214
  %2216 = vrot.lane.b32.xlu0 %v2015, 64
  %v2217 = vpop.permute.xlu0 %2216
  %2218 = vrot.lane.b32.xlu0 %v2016, 64
  %v2219 = vpop.permute.xlu0 %2218
  %2220 = vrot.lane.b32.xlu0 %v2017, 64
  %v2221 = vpop.permute.xlu0 %2220
  %2222 = vrot.lane.b32.xlu0 %v2018, 64
  %v2223 = vpop.permute.xlu0 %2222
  %2224 = vrot.lane.b32.xlu0 %v2019, 64
  %v2225 = vpop.permute.xlu0 %2224
  %2226 = vrot.lane.b32.xlu0 %v2020, 64
  %v2227 = vpop.permute.xlu0 %2226
  %2228 = vrot.lane.b32.xlu0 %v2021, 64
  %v2229 = vpop.permute.xlu0 %2228
  %2230 = vrot.lane.b32.xlu0 %v2022, 64
  %v2231 = vpop.permute.xlu0 %2230
  %2248 = vmatprep.subr.bf16.mxu0 0
  %2249 = vmatpush1.bf16.msra.mxu0 %v2201
  %2250 = vmatprep.subr.bf16.mxu0 0
  %2251 = vmatpush1.bf16.msra.mxu0 %v2203
  %2252 = vmatprep.subr.bf16.mxu0 0
  %2253 = vmatpush1.bf16.msra.mxu0 %v2205
  %2254 = vmatprep.subr.bf16.mxu0 0
  %2255 = vmatpush1.bf16.msra.mxu0 %v2207
  %2256 = vmatprep.subr.bf16.mxu0 0
  %2257 = vmatpush1.bf16.msra.mxu0 %v2209
  %2258 = vmatprep.subr.bf16.mxu0 0
  %2259 = vmatpush1.bf16.msra.mxu0 %v2211
  %2260 = vmatprep.subr.bf16.mxu0 0
  %2261 = vmatpush1.bf16.msra.mxu0 %v2213
  %2262 = vmatprep.subr.bf16.mxu0 0
  %2263 = vmatpush1.bf16.msra.mxu0 %v2215
  %2264 = vmatprep.subr.bf16.mxu0 0
  %2265 = vmatpush1.bf16.msra.mxu0 %v2217
  %2266 = vmatprep.subr.bf16.mxu0 0
  %2267 = vmatpush1.bf16.msra.mxu0 %v2219
  %2268 = vmatprep.subr.bf16.mxu0 0
  %2269 = vmatpush1.bf16.msra.mxu0 %v2221
  %2270 = vmatprep.subr.bf16.mxu0 0
  %2271 = vmatpush1.bf16.msra.mxu0 %v2223
  %2272 = vmatprep.subr.bf16.mxu0 0
  %2273 = vmatpush1.bf16.msra.mxu0 %v2225
  %2274 = vmatprep.subr.bf16.mxu0 0
  %2275 = vmatpush1.bf16.msra.mxu0 %v2227
  %2276 = vmatprep.subr.bf16.mxu0 0
  %2277 = vmatpush1.bf16.msra.mxu0 %v2229
  %2278 = vmatprep.subr.bf16.mxu0 0
  %2279 = vmatpush1.bf16.msra.mxu0 %v2231
  %2280 = vmatprep.mubr.bf16.mxu0 %v1279
  %2281 = vmatmul.mubr.bf16.gmra.mrb[0].mxu0 %v1278
  %v2282 = vpop.f32.mrb[0].mxu0
  %v2283 = vadd.f32 0.0, %v2282
  %v2284 = vpop.f32.mrb[0].mxu0
  %v2285 = vpop.f32.mrb[0].mxu0
  %v2286 = vadd.f32 0.0, %v2285
  %v2287 = vpop.f32.mrb[0].mxu0
  %2288 = vmatprep.mubr.bf16.mxu0 %v1281
  %2289 = vmatmul.mubr.bf16.gmra.mrb[0].mxu0 %v1280
  %v2290 = vpop.f32.mrb[0].mxu0
  %v2291 = vadd.f32 0.0, %v2290
  %v2292 = vpop.f32.mrb[0].mxu0
  %v2293 = vpop.f32.mrb[0].mxu0
  %v2294 = vadd.f32 0.0, %v2293
  %v2295 = vpop.f32.mrb[0].mxu0
  %2296 = vmatprep.mubr.bf16.mxu0 %v1283
  %2297 = vmatmul.mubr.bf16.gmra.mrb[0].mxu0 %v1282
  %v2298 = vpop.f32.mrb[0].mxu0
  %v2299 = vadd.f32 0.0, %v2298
  %v2300 = vpop.f32.mrb[0].mxu0
  %v2301 = vpop.f32.mrb[0].mxu0
  %v2302 = vadd.f32 0.0, %v2301
  %v2303 = vpop.f32.mrb[0].mxu0
  %2304 = vmatprep.mubr.bf16.mxu0 %v1285
  %2305 = vmatmul.mubr.bf16.gmra.mrb[0].mxu0 %v1284
  %v2306 = vpop.f32.mrb[0].mxu0
  %v2307 = vadd.f32 0.0, %v2306
  %v2308 = vpop.f32.mrb[0].mxu0
  %v2309 = vpop.f32.mrb[0].mxu0
  %v2310 = vadd.f32 0.0, %v2309
  %v2311 = vpop.f32.mrb[0].mxu0
  %2312 = vmatprep.mubr.bf16.mxu0 %v1287
  %2313 = vmatmul.mubr.bf16.gmra.mrb[0].mxu0 %v1286
  %v2314 = vpop.f32.mrb[0].mxu0
  %v2315 = vadd.f32 0.0, %v2314
  %v2316 = vpop.f32.mrb[0].mxu0
  %v2317 = vpop.f32.mrb[0].mxu0
  %v2318 = vadd.f32 0.0, %v2317
  %v2319 = vpop.f32.mrb[0].mxu0
  %2320 = vmatprep.mubr.bf16.mxu0 %v1289
  %2321 = vmatmul.mubr.bf16.gmra.mrb[0].mxu0 %v1288
  %v2322 = vpop.f32.mrb[0].mxu0
  %v2323 = vadd.f32 0.0, %v2322
  %v2324 = vpop.f32.mrb[0].mxu0
  %v2325 = vpop.f32.mrb[0].mxu0
  %v2326 = vadd.f32 0.0, %v2325
  %v2327 = vpop.f32.mrb[0].mxu0
  %2328 = vmatprep.mubr.bf16.mxu0 %v1291
  %2329 = vmatmul.mubr.bf16.gmra.mrb[0].mxu0 %v1290
  %v2330 = vpop.f32.mrb[0].mxu0
  %v2331 = vadd.f32 0.0, %v2330
  %v2332 = vpop.f32.mrb[0].mxu0
  %v2333 = vpop.f32.mrb[0].mxu0
  %v2334 = vadd.f32 0.0, %v2333
  %v2335 = vpop.f32.mrb[0].mxu0
  %2336 = vmatprep.mubr.bf16.mxu0 %v1293
  %2337 = vmatmul.mubr.bf16.gmra.mrb[0].mxu0 %v1292
  %v2338 = vpop.f32.mrb[0].mxu0
  %v2339 = vadd.f32 0.0, %v2338
  %v2340 = vpop.f32.mrb[0].mxu0
  %v2341 = vpop.f32.mrb[0].mxu0
  %v2342 = vadd.f32 0.0, %v2341
  %v2343 = vpop.f32.mrb[0].mxu0
  %2344 = vmatprep.mubr.bf16.mxu0 %v1295
  %2345 = vmatmul.mubr.bf16.gmra.mrb[0].mxu0 %v1294
  %v2346 = vpop.f32.mrb[0].mxu0
  %v2347 = vadd.f32 0.0, %v2346
  %v2348 = vpop.f32.mrb[0].mxu0
  %v2349 = vpop.f32.mrb[0].mxu0
  %v2350 = vadd.f32 0.0, %v2349
  %v2351 = vpop.f32.mrb[0].mxu0
  %2352 = vmatprep.mubr.bf16.mxu0 %v1297
  %2353 = vmatmul.mubr.bf16.gmra.mrb[0].mxu0 %v1296
  %v2354 = vpop.f32.mrb[0].mxu0
  %v2355 = vadd.f32 0.0, %v2354
  %v2356 = vpop.f32.mrb[0].mxu0
  %v2357 = vpop.f32.mrb[0].mxu0
  %v2358 = vadd.f32 0.0, %v2357
  %v2359 = vpop.f32.mrb[0].mxu0
  %2360 = vmatprep.mubr.bf16.mxu0 %v1299
  %2361 = vmatmul.mubr.bf16.gmra.mrb[0].mxu0 %v1298
  %v2362 = vpop.f32.mrb[0].mxu0
  %v2363 = vadd.f32 0.0, %v2362
  %v2364 = vpop.f32.mrb[0].mxu0
  %v2365 = vpop.f32.mrb[0].mxu0
  %v2366 = vadd.f32 0.0, %v2365
  %v2367 = vpop.f32.mrb[0].mxu0
  %2368 = vmatprep.mubr.bf16.mxu0 %v1301
  %2369 = vmatmul.mubr.bf16.gmra.mrb[0].mxu0 %v1300
  %v2370 = vpop.f32.mrb[0].mxu0
  %v2371 = vadd.f32 0.0, %v2370
  %v2372 = vpop.f32.mrb[0].mxu0
  %v2373 = vpop.f32.mrb[0].mxu0
  %v2374 = vadd.f32 0.0, %v2373
  %v2375 = vpop.f32.mrb[0].mxu0
  %2376 = vmatprep.mubr.bf16.mxu0 %v1303
  %2377 = vmatmul.mubr.bf16.gmra.mrb[0].mxu0 %v1302
  %v2378 = vpop.f32.mrb[0].mxu0
  %v2379 = vadd.f32 0.0, %v2378
  %v2380 = vpop.f32.mrb[0].mxu0
  %v2381 = vpop.f32.mrb[0].mxu0
  %v2382 = vadd.f32 0.0, %v2381
  %v2383 = vpop.f32.mrb[0].mxu0
  %2384 = vmatprep.mubr.bf16.mxu0 %v1305
  %2385 = vmatmul.mubr.bf16.gmra.mrb[0].mxu0 %v1304
  %v2386 = vpop.f32.mrb[0].mxu0
  %v2387 = vadd.f32 0.0, %v2386
  %v2388 = vpop.f32.mrb[0].mxu0
  %v2389 = vpop.f32.mrb[0].mxu0
  %v2390 = vadd.f32 0.0, %v2389
  %v2391 = vpop.f32.mrb[0].mxu0
  %2392 = vmatprep.mubr.bf16.mxu0 %v1307
  %2393 = vmatmul.mubr.bf16.gmra.mrb[0].mxu0 %v1306
  %v2394 = vpop.f32.mrb[0].mxu0
  %v2395 = vadd.f32 0.0, %v2394
  %v2396 = vpop.f32.mrb[0].mxu0
  %v2397 = vpop.f32.mrb[0].mxu0
  %v2398 = vadd.f32 0.0, %v2397
  %v2399 = vpop.f32.mrb[0].mxu0
  %2400 = vmatprep.mubr.bf16.mxu0 %v1309
  %2401 = vmatmul.mubr.bf16.gmra.mrb[0].mxu0 %v1308
  %v2402 = vpop.f32.mrb[0].mxu0
  %v2403 = vadd.f32 0.0, %v2402
  %v2404 = vpop.f32.mrb[0].mxu0
  %v2405 = vpop.f32.mrb[0].mxu0
  %v2406 = vadd.f32 0.0, %v2405
  %v2407 = vpop.f32.mrb[0].mxu0
  %2408 = vdwg.mxu0
  %2441 = vrot.lane.b32.xlu0 %v2283, 64
  %v2442 = vpop.permute.xlu0 %2441
  %2443 = vrot.lane.b32.xlu0 %v2286, 64
  %v2444 = vpop.permute.xlu0 %2443
  %2445 = vrot.lane.b32.xlu0 %v2291, 64
  %v2446 = vpop.permute.xlu0 %2445
  %2447 = vrot.lane.b32.xlu0 %v2294, 64
  %v2448 = vpop.permute.xlu0 %2447
  %2449 = vrot.lane.b32.xlu0 %v2299, 64
  %v2450 = vpop.permute.xlu0 %2449
  %2451 = vrot.lane.b32.xlu0 %v2302, 64
  %v2452 = vpop.permute.xlu0 %2451
  %2453 = vrot.lane.b32.xlu0 %v2307, 64
  %v2454 = vpop.permute.xlu0 %2453
  %2455 = vrot.lane.b32.xlu0 %v2310, 64
  %v2456 = vpop.permute.xlu0 %2455
  %2457 = vrot.lane.b32.xlu0 %v2315, 64
  %v2458 = vpop.permute.xlu0 %2457
  %2459 = vrot.lane.b32.xlu0 %v2318, 64
  %v2460 = vpop.permute.xlu0 %2459
  %2461 = vrot.lane.b32.xlu0 %v2323, 64
  %v2462 = vpop.permute.xlu0 %2461
  %2463 = vrot.lane.b32.xlu0 %v2326, 64
  %v2464 = vpop.permute.xlu0 %2463
  %2465 = vrot.lane.b32.xlu0 %v2331, 64
  %v2466 = vpop.permute.xlu0 %2465
  %2467 = vrot.lane.b32.xlu0 %v2334, 64
  %v2468 = vpop.permute.xlu0 %2467
  %2469 = vrot.lane.b32.xlu0 %v2339, 64
  %v2470 = vpop.permute.xlu0 %2469
  %2471 = vrot.lane.b32.xlu0 %v2342, 64
  %v2472 = vpop.permute.xlu0 %2471
  %2473 = vrot.lane.b32.xlu0 %v2347, 64
  %v2474 = vpop.permute.xlu0 %2473
  %2475 = vrot.lane.b32.xlu0 %v2350, 64
  %v2476 = vpop.permute.xlu0 %2475
  %2477 = vrot.lane.b32.xlu0 %v2355, 64
  %v2478 = vpop.permute.xlu0 %2477
  %2479 = vrot.lane.b32.xlu0 %v2358, 64
  %v2480 = vpop.permute.xlu0 %2479
  %2481 = vrot.lane.b32.xlu0 %v2363, 64
  %v2482 = vpop.permute.xlu0 %2481
  %2483 = vrot.lane.b32.xlu0 %v2366, 64
  %v2484 = vpop.permute.xlu0 %2483
  %2485 = vrot.lane.b32.xlu0 %v2371, 64
  %v2486 = vpop.permute.xlu0 %2485
  %2487 = vrot.lane.b32.xlu0 %v2374, 64
  %v2488 = vpop.permute.xlu0 %2487
  %2489 = vrot.lane.b32.xlu0 %v2379, 64
  %v2490 = vpop.permute.xlu0 %2489
  %2491 = vrot.lane.b32.xlu0 %v2382, 64
  %v2492 = vpop.permute.xlu0 %2491
  %2493 = vrot.lane.b32.xlu0 %v2387, 64
  %v2494 = vpop.permute.xlu0 %2493
  %2495 = vrot.lane.b32.xlu0 %v2390, 64
  %v2496 = vpop.permute.xlu0 %2495
  %2497 = vrot.lane.b32.xlu0 %v2395, 64
  %v2498 = vpop.permute.xlu0 %2497
  %2499 = vrot.lane.b32.xlu0 %v2398, 64
  %v2500 = vpop.permute.xlu0 %2499
  %2501 = vrot.lane.b32.xlu0 %v2403, 64
  %v2502 = vpop.permute.xlu0 %2501
  %2503 = vrot.lane.b32.xlu0 %v2406, 64
  %v2504 = vpop.permute.xlu0 %2503
  %v2537 = vsel %vm459, %v2058, %v2442
  %v2538 = vsel %vm459, %v2061, %v2444
  %v2539 = vsel %vm459, %v2066, %v2446
  %v2540 = vsel %vm459, %v2069, %v2448
  %v2541 = vsel %vm459, %v2074, %v2450
  %v2542 = vsel %vm459, %v2077, %v2452
  %v2543 = vsel %vm459, %v2082, %v2454
  %v2544 = vsel %vm459, %v2085, %v2456
  %v2545 = vsel %vm459, %v2090, %v2458
  %v2546 = vsel %vm459, %v2093, %v2460
  %v2547 = vsel %vm459, %v2098, %v2462
  %v2548 = vsel %vm459, %v2101, %v2464
  %v2549 = vsel %vm459, %v2106, %v2466
  %v2550 = vsel %vm459, %v2109, %v2468
  %v2551 = vsel %vm459, %v2114, %v2470
  %v2552 = vsel %vm459, %v2117, %v2472
  %v2553 = vsel %vm459, %v2122, %v2474
  %v2554 = vsel %vm459, %v2125, %v2476
  %v2555 = vsel %vm459, %v2130, %v2478
  %v2556 = vsel %vm459, %v2133, %v2480
  %v2557 = vsel %vm459, %v2138, %v2482
  %v2558 = vsel %vm459, %v2141, %v2484
  %v2559 = vsel %vm459, %v2146, %v2486
  %v2560 = vsel %vm459, %v2149, %v2488
  %v2561 = vsel %vm459, %v2154, %v2490
  %v2562 = vsel %vm459, %v2157, %v2492
  %v2563 = vsel %vm459, %v2162, %v2494
  %v2564 = vsel %vm459, %v2165, %v2496
  %v2565 = vsel %vm459, %v2170, %v2498
  %v2566 = vsel %vm459, %v2173, %v2500
  %v2567 = vsel %vm459, %v2178, %v2502
  %v2568 = vsel %vm459, %v2181, %v2504
  %v2569 = vld [vmem:[%s8] sm:$0x1]
  %v2571 = vlaneseq
  %v2572 = vshrl.u32 %v2571, 7
  %v2573 = vsub.s32 0, %v2572
  %v2574 = vrot.slane %v2569, %v2573
  %v2576 = vadd.f32 %v2537, %v2574
  %v2577 = vadd.f32 %v2538, %v2574
  %v2578 = vadd.f32 %v2539, %v2574
  %v2579 = vadd.f32 %v2540, %v2574
  %v2580 = vadd.f32 %v2541, %v2574
  %v2581 = vadd.f32 %v2542, %v2574
  %v2582 = vadd.f32 %v2543, %v2574
  %v2583 = vadd.f32 %v2544, %v2574
  %v2584 = vadd.f32 %v2545, %v2574
  %v2585 = vadd.f32 %v2546, %v2574
  %v2586 = vadd.f32 %v2547, %v2574
  %v2587 = vadd.f32 %v2548, %v2574
  %v2588 = vadd.f32 %v2549, %v2574
  %v2589 = vadd.f32 %v2550, %v2574
  %v2590 = vadd.f32 %v2551, %v2574
  %v2591 = vadd.f32 %v2552, %v2574
  %v2592 = vadd.f32 %v2553, %v2574
  %v2593 = vadd.f32 %v2554, %v2574
  %v2594 = vadd.f32 %v2555, %v2574
  %v2595 = vadd.f32 %v2556, %v2574
  %v2596 = vadd.f32 %v2557, %v2574
  %v2597 = vadd.f32 %v2558, %v2574
  %v2598 = vadd.f32 %v2559, %v2574
  %v2599 = vadd.f32 %v2560, %v2574
  %v2600 = vadd.f32 %v2561, %v2574
  %v2601 = vadd.f32 %v2562, %v2574
  %v2602 = vadd.f32 %v2563, %v2574
  %v2603 = vadd.f32 %v2564, %v2574
  %v2604 = vadd.f32 %v2565, %v2574
  %v2605 = vadd.f32 %v2566, %v2574
  %v2606 = vadd.f32 %v2567, %v2574
  %v2607 = vadd.f32 %v2568, %v2574
  %v2608 = vld [vmem:[%s9] sm:$0xff]
  %v2609 = vld [vmem:[%s9 + $0x8] sm:$0xff]
  %v2610 = vld [vmem:[%s9 + $0x10] sm:$0xff]
  %v2611 = vld [vmem:[%s9 + $0x18] sm:$0xff]
  %v2612 = vld [vmem:[%s9 + $0x20] sm:$0xff]
  %v2613 = vld [vmem:[%s9 + $0x28] sm:$0xff]
  %v2614 = vld [vmem:[%s9 + $0x30] sm:$0xff]
  %v2615 = vld [vmem:[%s9 + $0x38] sm:$0xff]
  %v2616 = vld [vmem:[%s9 + $0x40] sm:$0xff]
  %v2617 = vld [vmem:[%s9 + $0x48] sm:$0xff]
  %v2618 = vld [vmem:[%s9 + $0x50] sm:$0xff]
  %v2619 = vld [vmem:[%s9 + $0x58] sm:$0xff]
  %v2620 = vld [vmem:[%s9 + $0x60] sm:$0xff]
  %v2621 = vld [vmem:[%s9 + $0x68] sm:$0xff]
  %v2622 = vld [vmem:[%s9 + $0x70] sm:$0xff]
  %v2623 = vld [vmem:[%s9 + $0x78] sm:$0xff]
  %2624 = vmatprep.subr.mxu0 0.0
  %2625 = vmatpush1.msra.mxu0 %v2608
  %2626 = vmatprep.subr.mxu0 0.0
  %2627 = vmatpush1.msra.mxu0 %v2609
  %2628 = vmatprep.subr.mxu0 0.0
  %2629 = vmatpush1.msra.mxu0 %v2610
  %2630 = vmatprep.subr.mxu0 0.0
  %2631 = vmatpush1.msra.mxu0 %v2611
  %2632 = vmatprep.subr.mxu0 0.0
  %2633 = vmatpush1.msra.mxu0 %v2612
  %2634 = vmatprep.subr.mxu0 0.0
  %2635 = vmatpush1.msra.mxu0 %v2613
  %2636 = vmatprep.subr.mxu0 0.0
  %2637 = vmatpush1.msra.mxu0 %v2614
  %2638 = vmatprep.subr.mxu0 0.0
  %2639 = vmatpush1.msra.mxu0 %v2615
  %2640 = vmatprep.subr.mxu0 0.0
  %2641 = vmatpush1.msra.mxu0 %v2616
  %2642 = vmatprep.subr.mxu0 0.0
  %2643 = vmatpush1.msra.mxu0 %v2617
  %2644 = vmatprep.subr.mxu0 0.0
  %2645 = vmatpush1.msra.mxu0 %v2618
  %2646 = vmatprep.subr.mxu0 0.0
  %2647 = vmatpush1.msra.mxu0 %v2619
  %2648 = vmatprep.subr.mxu0 0.0
  %2649 = vmatpush1.msra.mxu0 %v2620
  %2650 = vmatprep.subr.mxu0 0.0
  %2651 = vmatpush1.msra.mxu0 %v2621
  %2652 = vmatprep.subr.mxu0 0.0
  %2653 = vmatpush1.msra.mxu0 %v2622
  %2654 = vmatprep.subr.mxu0 0.0
  %2655 = vmatpush1.msra.mxu0 %v2623
  %2656 = vmatprep.subr.mxu0 0.0
  %2657 = vmatpush1.msra.mxu0 0.0
  %2658 = vmatprep.subr.mxu0 0.0
  %2659 = vmatpush1.msra.mxu0 0.0
  %2660 = vmatprep.subr.mxu0 0.0
  %2661 = vmatpush1.msra.mxu0 0.0
  %2662 = vmatprep.subr.mxu0 0.0
  %2663 = vmatpush1.msra.mxu0 0.0
  %2664 = vmatprep.subr.mxu0 0.0
  %2665 = vmatpush1.msra.mxu0 0.0
  %2666 = vmatprep.subr.mxu0 0.0
  %2667 = vmatpush1.msra.mxu0 0.0
  %2668 = vmatprep.subr.mxu0 0.0
  %2669 = vmatpush1.msra.mxu0 0.0
  %2670 = vmatprep.subr.mxu0 0.0
  %2671 = vmatpush1.msra.mxu0 0.0
  %2672 = vmatprep.subr.mxu0 0.0
  %2673 = vmatpush1.msra.mxu0 0.0
  %2674 = vmatprep.subr.mxu0 0.0
  %2675 = vmatpush1.msra.mxu0 0.0
  %2676 = vmatprep.subr.mxu0 0.0
  %2677 = vmatpush1.msra.mxu0 0.0
  %2678 = vmatprep.subr.mxu0 0.0
  %2679 = vmatpush1.msra.mxu0 0.0
  %2680 = vmatprep.subr.mxu0 0.0
  %2681 = vmatpush1.msra.mxu0 0.0
  %2682 = vmatprep.subr.mxu0 0.0
  %2683 = vmatpush1.msra.mxu0 0.0
  %2684 = vmatprep.subr.mxu0 0.0
  %2685 = vmatpush1.msra.mxu0 0.0
  %2686 = vmatprep.subr.mxu0 0.0
  %2687 = vmatpush1.msra.mxu0 0.0
  %2688 = vmatprep.mubr.f32.mxu0 0.0
  %2689 = vmatmul.mubr.f32.gmra.mrb[0].mxu0 %v2576
  %v2690 = vpop.f32.mrb[0].mxu0
  %v2691 = vadd.f32 0.0, %v2690
  %v2692 = vpop.f32.mrb[0].mxu0
  %2693 = vmatprep.mubr.f32.mxu0 0.0
  %2694 = vmatmul.mubr.f32.gmra.mrb[0].mxu0 %v2577
  %v2695 = vpop.f32.mrb[0].mxu0
  %v2696 = vadd.f32 0.0, %v2695
  %v2697 = vpop.f32.mrb[0].mxu0
  %2698 = vmatprep.mubr.f32.mxu0 0.0
  %2699 = vmatmul.mubr.f32.gmra.mrb[0].mxu0 %v2578
  %v2700 = vpop.f32.mrb[0].mxu0
  %v2701 = vadd.f32 0.0, %v2700
  %v2702 = vpop.f32.mrb[0].mxu0
  %2703 = vmatprep.mubr.f32.mxu0 0.0
  %2704 = vmatmul.mubr.f32.gmra.mrb[0].mxu0 %v2579
  %v2705 = vpop.f32.mrb[0].mxu0
  %v2706 = vadd.f32 0.0, %v2705
  %v2707 = vpop.f32.mrb[0].mxu0
  %2708 = vmatprep.mubr.f32.mxu0 0.0
  %2709 = vmatmul.mubr.f32.gmra.mrb[0].mxu0 %v2580
  %v2710 = vpop.f32.mrb[0].mxu0
  %v2711 = vadd.f32 0.0, %v2710
  %v2712 = vpop.f32.mrb[0].mxu0
  %2713 = vmatprep.mubr.f32.mxu0 0.0
  %2714 = vmatmul.mubr.f32.gmra.mrb[0].mxu0 %v2581
  %v2715 = vpop.f32.mrb[0].mxu0
  %v2716 = vadd.f32 0.0, %v2715
  %v2717 = vpop.f32.mrb[0].mxu0
  %2718 = vmatprep.mubr.f32.mxu0 0.0
  %2719 = vmatmul.mubr.f32.gmra.mrb[0].mxu0 %v2582
  %v2720 = vpop.f32.mrb[0].mxu0
  %v2721 = vadd.f32 0.0, %v2720
  %v2722 = vpop.f32.mrb[0].mxu0
  %2723 = vmatprep.mubr.f32.mxu0 0.0
  %2724 = vmatmul.mubr.f32.gmra.mrb[0].mxu0 %v2583
  %v2725 = vpop.f32.mrb[0].mxu0
  %v2726 = vadd.f32 0.0, %v2725
  %v2727 = vpop.f32.mrb[0].mxu0
  %2728 = vmatprep.mubr.f32.mxu0 0.0
  %2729 = vmatmul.mubr.f32.gmra.mrb[0].mxu0 %v2584
  %v2730 = vpop.f32.mrb[0].mxu0
  %v2731 = vadd.f32 0.0, %v2730
  %v2732 = vpop.f32.mrb[0].mxu0
  %2733 = vmatprep.mubr.f32.mxu0 0.0
  %2734 = vmatmul.mubr.f32.gmra.mrb[0].mxu0 %v2585
  %v2735 = vpop.f32.mrb[0].mxu0
  %v2736 = vadd.f32 0.0, %v2735
  %v2737 = vpop.f32.mrb[0].mxu0
  %2738 = vmatprep.mubr.f32.mxu0 0.0
  %2739 = vmatmul.mubr.f32.gmra.mrb[0].mxu0 %v2586
  %v2740 = vpop.f32.mrb[0].mxu0
  %v2741 = vadd.f32 0.0, %v2740
  %v2742 = vpop.f32.mrb[0].mxu0
  %2743 = vmatprep.mubr.f32.mxu0 0.0
  %2744 = vmatmul.mubr.f32.gmra.mrb[0].mxu0 %v2587
  %v2745 = vpop.f32.mrb[0].mxu0
  %v2746 = vadd.f32 0.0, %v2745
  %v2747 = vpop.f32.mrb[0].mxu0
  %2748 = vmatprep.mubr.f32.mxu0 0.0
  %2749 = vmatmul.mubr.f32.gmra.mrb[0].mxu0 %v2588
  %v2750 = vpop.f32.mrb[0].mxu0
  %v2751 = vadd.f32 0.0, %v2750
  %v2752 = vpop.f32.mrb[0].mxu0
  %2753 = vmatprep.mubr.f32.mxu0 0.0
  %2754 = vmatmul.mubr.f32.gmra.mrb[0].mxu0 %v2589
  %v2755 = vpop.f32.mrb[0].mxu0
  %v2756 = vadd.f32 0.0, %v2755
  %v2757 = vpop.f32.mrb[0].mxu0
  %2758 = vmatprep.mubr.f32.mxu0 0.0
  %2759 = vmatmul.mubr.f32.gmra.mrb[0].mxu0 %v2590
  %v2760 = vpop.f32.mrb[0].mxu0
  %v2761 = vadd.f32 0.0, %v2760
  %v2762 = vpop.f32.mrb[0].mxu0
  %2763 = vmatprep.mubr.f32.mxu0 0.0
  %2764 = vmatmul.mubr.f32.gmra.mrb[0].mxu0 %v2591
  %v2765 = vpop.f32.mrb[0].mxu0
  %v2766 = vadd.f32 0.0, %v2765
  %v2767 = vpop.f32.mrb[0].mxu0
  %2768 = vmatprep.mubr.f32.mxu0 0.0
  %2769 = vmatmul.mubr.f32.gmra.mrb[0].mxu0 %v2592
  %v2770 = vpop.f32.mrb[0].mxu0
  %v2771 = vadd.f32 0.0, %v2770
  %v2772 = vpop.f32.mrb[0].mxu0
  %2773 = vmatprep.mubr.f32.mxu0 0.0
  %2774 = vmatmul.mubr.f32.gmra.mrb[0].mxu0 %v2593
  %v2775 = vpop.f32.mrb[0].mxu0
  %v2776 = vadd.f32 0.0, %v2775
  %v2777 = vpop.f32.mrb[0].mxu0
  %2778 = vmatprep.mubr.f32.mxu0 0.0
  %2779 = vmatmul.mubr.f32.gmra.mrb[0].mxu0 %v2594
  %v2780 = vpop.f32.mrb[0].mxu0
  %v2781 = vadd.f32 0.0, %v2780
  %v2782 = vpop.f32.mrb[0].mxu0
  %2783 = vmatprep.mubr.f32.mxu0 0.0
  %2784 = vmatmul.mubr.f32.gmra.mrb[0].mxu0 %v2595
  %v2785 = vpop.f32.mrb[0].mxu0
  %v2786 = vadd.f32 0.0, %v2785
  %v2787 = vpop.f32.mrb[0].mxu0
  %2788 = vmatprep.mubr.f32.mxu0 0.0
  %2789 = vmatmul.mubr.f32.gmra.mrb[0].mxu0 %v2596
  %v2790 = vpop.f32.mrb[0].mxu0
  %v2791 = vadd.f32 0.0, %v2790
  %v2792 = vpop.f32.mrb[0].mxu0
  %2793 = vmatprep.mubr.f32.mxu0 0.0
  %2794 = vmatmul.mubr.f32.gmra.mrb[0].mxu0 %v2597
  %v2795 = vpop.f32.mrb[0].mxu0
  %v2796 = vadd.f32 0.0, %v2795
  %v2797 = vpop.f32.mrb[0].mxu0
  %2798 = vmatprep.mubr.f32.mxu0 0.0
  %2799 = vmatmul.mubr.f32.gmra.mrb[0].mxu0 %v2598
  %v2800 = vpop.f32.mrb[0].mxu0
  %v2801 = vadd.f32 0.0, %v2800
  %v2802 = vpop.f32.mrb[0].mxu0
  %2803 = vmatprep.mubr.f32.mxu0 0.0
  %2804 = vmatmul.mubr.f32.gmra.mrb[0].mxu0 %v2599
  %v2805 = vpop.f32.mrb[0].mxu0
  %v2806 = vadd.f32 0.0, %v2805
  %v2807 = vpop.f32.mrb[0].mxu0
  %2808 = vmatprep.mubr.f32.mxu0 0.0
  %2809 = vmatmul.mubr.f32.gmra.mrb[0].mxu0 %v2600
  %v2810 = vpop.f32.mrb[0].mxu0
  %v2811 = vadd.f32 0.0, %v2810
  %v2812 = vpop.f32.mrb[0].mxu0
  %2813 = vmatprep.mubr.f32.mxu0 0.0
  %2814 = vmatmul.mubr.f32.gmra.mrb[0].mxu0 %v2601
  %v2815 = vpop.f32.mrb[0].mxu0
  %v2816 = vadd.f32 0.0, %v2815
  %v2817 = vpop.f32.mrb[0].mxu0
  %2818 = vmatprep.mubr.f32.mxu0 0.0
  %2819 = vmatmul.mubr.f32.gmra.mrb[0].mxu0 %v2602
  %v2820 = vpop.f32.mrb[0].mxu0
  %v2821 = vadd.f32 0.0, %v2820
  %v2822 = vpop.f32.mrb[0].mxu0
  %2823 = vmatprep.mubr.f32.mxu0 0.0
  %2824 = vmatmul.mubr.f32.gmra.mrb[0].mxu0 %v2603
  %v2825 = vpop.f32.mrb[0].mxu0
  %v2826 = vadd.f32 0.0, %v2825
  %v2827 = vpop.f32.mrb[0].mxu0
  %2828 = vmatprep.mubr.f32.mxu0 0.0
  %2829 = vmatmul.mubr.f32.gmra.mrb[0].mxu0 %v2604
  %v2830 = vpop.f32.mrb[0].mxu0
  %v2831 = vadd.f32 0.0, %v2830
  %v2832 = vpop.f32.mrb[0].mxu0
  %2833 = vmatprep.mubr.f32.mxu0 0.0
  %2834 = vmatmul.mubr.f32.gmra.mrb[0].mxu0 %v2605
  %v2835 = vpop.f32.mrb[0].mxu0
  %v2836 = vadd.f32 0.0, %v2835
  %v2837 = vpop.f32.mrb[0].mxu0
  %2838 = vmatprep.mubr.f32.mxu0 0.0
  %2839 = vmatmul.mubr.f32.gmra.mrb[0].mxu0 %v2606
  %v2840 = vpop.f32.mrb[0].mxu0
  %v2841 = vadd.f32 0.0, %v2840
  %v2842 = vpop.f32.mrb[0].mxu0
  %2843 = vmatprep.mubr.f32.mxu0 0.0
  %2844 = vmatmul.mubr.f32.gmra.mrb[0].mxu0 %v2607
  %v2845 = vpop.f32.mrb[0].mxu0
  %v2846 = vadd.f32 0.0, %v2845
  %v2847 = vpop.f32.mrb[0].mxu0
  %2848 = vdwg.mxu0
  %v2849 = vpack.c.bf16 %v2696, %v2691
  %v2850 = vpack.c.bf16 %v2706, %v2701
  %v2851 = vpack.c.bf16 %v2716, %v2711
  %v2852 = vpack.c.bf16 %v2726, %v2721
  %v2853 = vpack.c.bf16 %v2736, %v2731
  %v2854 = vpack.c.bf16 %v2746, %v2741
  %v2855 = vpack.c.bf16 %v2756, %v2751
  %v2856 = vpack.c.bf16 %v2766, %v2761
  %v2857 = vpack.c.bf16 %v2776, %v2771
  %v2858 = vpack.c.bf16 %v2786, %v2781
  %v2859 = vpack.c.bf16 %v2796, %v2791
  %v2860 = vpack.c.bf16 %v2806, %v2801
  %v2861 = vpack.c.bf16 %v2816, %v2811
  %v2862 = vpack.c.bf16 %v2826, %v2821
  %v2863 = vpack.c.bf16 %v2836, %v2831
  %v2864 = vpack.c.bf16 %v2846, %v2841
  %2865 = vmatprep.subr.bf16.mxu0 0
  %2866 = vmatpush1.bf16.msra.mxu0 %v2849
  %2867 = vmatprep.subr.bf16.mxu0 0
  %2868 = vmatpush1.bf16.msra.mxu0 %v2850
  %2869 = vmatprep.subr.bf16.mxu0 0
  %2870 = vmatpush1.bf16.msra.mxu0 %v2851
  %2871 = vmatprep.subr.bf16.mxu0 0
  %2872 = vmatpush1.bf16.msra.mxu0 %v2852
  %2873 = vmatprep.subr.bf16.mxu0 0
  %2874 = vmatpush1.bf16.msra.mxu0 %v2853
  %2875 = vmatprep.subr.bf16.mxu0 0
  %2876 = vmatpush1.bf16.msra.mxu0 %v2854
  %2877 = vmatprep.subr.bf16.mxu0 0
  %2878 = vmatpush1.bf16.msra.mxu0 %v2855
  %2879 = vmatprep.subr.bf16.mxu0 0
  %2880 = vmatpush1.bf16.msra.mxu0 %v2856
  %2881 = vmatprep.subr.bf16.mxu0 0
  %2882 = vmatpush1.bf16.msra.mxu0 %v2857
  %2883 = vmatprep.subr.bf16.mxu0 0
  %2884 = vmatpush1.bf16.msra.mxu0 %v2858
  %2885 = vmatprep.subr.bf16.mxu0 0
  %2886 = vmatpush1.bf16.msra.mxu0 %v2859
  %2887 = vmatprep.subr.bf16.mxu0 0
  %2888 = vmatpush1.bf16.msra.mxu0 %v2860
  %2889 = vmatprep.subr.bf16.mxu0 0
  %2890 = vmatpush1.bf16.msra.mxu0 %v2861
  %2891 = vmatprep.subr.bf16.mxu0 0
  %2892 = vmatpush1.bf16.msra.mxu0 %v2862
  %2893 = vmatprep.subr.bf16.mxu0 0
  %2894 = vmatpush1.bf16.msra.mxu0 %v2863
  %2895 = vmatprep.subr.bf16.mxu0 0
  %2896 = vmatpush1.bf16.msra.mxu0 %v2864
  %2897 = vmatprep.mubr.bf16.mxu0 %v926
  %2898 = vmatmul.mubr.bf16.gmra.mrb[0].mxu0 %v925
  %v2899 = vpop.f32.mrb[0].mxu0
  %v2900 = vadd.f32 0.0, %v2899
  %v2901 = vpop.f32.mrb[0].mxu0
  %v2902 = vpop.f32.mrb[0].mxu0
  %v2903 = vadd.f32 0.0, %v2902
  %v2904 = vpop.f32.mrb[0].mxu0
  %2905 = vmatprep.mubr.bf16.mxu0 %v928
  %2906 = vmatmul.mubr.bf16.gmra.mrb[0].mxu0 %v927
  %v2907 = vpop.f32.mrb[0].mxu0
  %v2908 = vadd.f32 0.0, %v2907
  %v2909 = vpop.f32.mrb[0].mxu0
  %v2910 = vpop.f32.mrb[0].mxu0
  %v2911 = vadd.f32 0.0, %v2910
  %v2912 = vpop.f32.mrb[0].mxu0
  %2913 = vmatprep.mubr.bf16.mxu0 %v930
  %2914 = vmatmul.mubr.bf16.gmra.mrb[0].mxu0 %v929
  %v2915 = vpop.f32.mrb[0].mxu0
  %v2916 = vadd.f32 0.0, %v2915
  %v2917 = vpop.f32.mrb[0].mxu0
  %v2918 = vpop.f32.mrb[0].mxu0
  %v2919 = vadd.f32 0.0, %v2918
  %v2920 = vpop.f32.mrb[0].mxu0
  %2921 = vmatprep.mubr.bf16.mxu0 %v932
  %2922 = vmatmul.mubr.bf16.gmra.mrb[0].mxu0 %v931
  %v2923 = vpop.f32.mrb[0].mxu0
  %v2924 = vadd.f32 0.0, %v2923
  %v2925 = vpop.f32.mrb[0].mxu0
  %v2926 = vpop.f32.mrb[0].mxu0
  %v2927 = vadd.f32 0.0, %v2926
  %v2928 = vpop.f32.mrb[0].mxu0
  %2929 = vmatprep.mubr.bf16.mxu0 %v934
  %2930 = vmatmul.mubr.bf16.gmra.mrb[0].mxu0 %v933
  %v2931 = vpop.f32.mrb[0].mxu0
  %v2932 = vadd.f32 0.0, %v2931
  %v2933 = vpop.f32.mrb[0].mxu0
  %v2934 = vpop.f32.mrb[0].mxu0
  %v2935 = vadd.f32 0.0, %v2934
  %v2936 = vpop.f32.mrb[0].mxu0
  %2937 = vmatprep.mubr.bf16.mxu0 %v936
  %2938 = vmatmul.mubr.bf16.gmra.mrb[0].mxu0 %v935
  %v2939 = vpop.f32.mrb[0].mxu0
  %v2940 = vadd.f32 0.0, %v2939
  %v2941 = vpop.f32.mrb[0].mxu0
  %v2942 = vpop.f32.mrb[0].mxu0
  %v2943 = vadd.f32 0.0, %v2942
  %v2944 = vpop.f32.mrb[0].mxu0
  %2945 = vmatprep.mubr.bf16.mxu0 %v938
  %2946 = vmatmul.mubr.bf16.gmra.mrb[0].mxu0 %v937
  %v2947 = vpop.f32.mrb[0].mxu0
  %v2948 = vadd.f32 0.0, %v2947
  %v2949 = vpop.f32.mrb[0].mxu0
  %v2950 = vpop.f32.mrb[0].mxu0
  %v2951 = vadd.f32 0.0, %v2950
  %v2952 = vpop.f32.mrb[0].mxu0
  %2953 = vmatprep.mubr.bf16.mxu0 %v940
  %2954 = vmatmul.mubr.bf16.gmra.mrb[0].mxu0 %v939
  %v2955 = vpop.f32.mrb[0].mxu0
  %v2956 = vadd.f32 0.0, %v2955
  %v2957 = vpop.f32.mrb[0].mxu0
  %v2958 = vpop.f32.mrb[0].mxu0
  %v2959 = vadd.f32 0.0, %v2958
  %v2960 = vpop.f32.mrb[0].mxu0
  %2961 = vmatprep.mubr.bf16.mxu0 %v942
  %2962 = vmatmul.mubr.bf16.gmra.mrb[0].mxu0 %v941
  %v2963 = vpop.f32.mrb[0].mxu0
  %v2964 = vadd.f32 0.0, %v2963
  %v2965 = vpop.f32.mrb[0].mxu0
  %v2966 = vpop.f32.mrb[0].mxu0
  %v2967 = vadd.f32 0.0, %v2966
  %v2968 = vpop.f32.mrb[0].mxu0
  %2969 = vmatprep.mubr.bf16.mxu0 %v944
  %2970 = vmatmul.mubr.bf16.gmra.mrb[0].mxu0 %v943
  %v2971 = vpop.f32.mrb[0].mxu0
  %v2972 = vadd.f32 0.0, %v2971
  %v2973 = vpop.f32.mrb[0].mxu0
  %v2974 = vpop.f32.mrb[0].mxu0
  %v2975 = vadd.f32 0.0, %v2974
  %v2976 = vpop.f32.mrb[0].mxu0
  %2977 = vmatprep.mubr.bf16.mxu0 %v946
  %2978 = vmatmul.mubr.bf16.gmra.mrb[0].mxu0 %v945
  %v2979 = vpop.f32.mrb[0].mxu0
  %v2980 = vadd.f32 0.0, %v2979
  %v2981 = vpop.f32.mrb[0].mxu0
  %v2982 = vpop.f32.mrb[0].mxu0
  %v2983 = vadd.f32 0.0, %v2982
  %v2984 = vpop.f32.mrb[0].mxu0
  %2985 = vmatprep.mubr.bf16.mxu0 %v948
  %2986 = vmatmul.mubr.bf16.gmra.mrb[0].mxu0 %v947
  %v2987 = vpop.f32.mrb[0].mxu0
  %v2988 = vadd.f32 0.0, %v2987
  %v2989 = vpop.f32.mrb[0].mxu0
  %v2990 = vpop.f32.mrb[0].mxu0
  %v2991 = vadd.f32 0.0, %v2990
  %v2992 = vpop.f32.mrb[0].mxu0
  %2993 = vmatprep.mubr.bf16.mxu0 %v950
  %2994 = vmatmul.mubr.bf16.gmra.mrb[0].mxu0 %v949
  %v2995 = vpop.f32.mrb[0].mxu0
  %v2996 = vadd.f32 0.0, %v2995
  %v2997 = vpop.f32.mrb[0].mxu0
  %v2998 = vpop.f32.mrb[0].mxu0
  %v2999 = vadd.f32 0.0, %v2998
  %v3000 = vpop.f32.mrb[0].mxu0
  %3001 = vmatprep.mubr.bf16.mxu0 %v952
  %3002 = vmatmul.mubr.bf16.gmra.mrb[0].mxu0 %v951
  %v3003 = vpop.f32.mrb[0].mxu0
  %v3004 = vadd.f32 0.0, %v3003
  %v3005 = vpop.f32.mrb[0].mxu0
  %v3006 = vpop.f32.mrb[0].mxu0
  %v3007 = vadd.f32 0.0, %v3006
  %v3008 = vpop.f32.mrb[0].mxu0
  %3009 = vmatprep.mubr.bf16.mxu0 %v954
  %3010 = vmatmul.mubr.bf16.gmra.mrb[0].mxu0 %v953
  %v3011 = vpop.f32.mrb[0].mxu0
  %v3012 = vadd.f32 0.0, %v3011
  %v3013 = vpop.f32.mrb[0].mxu0
  %v3014 = vpop.f32.mrb[0].mxu0
  %v3015 = vadd.f32 0.0, %v3014
  %v3016 = vpop.f32.mrb[0].mxu0
  %3017 = vmatprep.mubr.bf16.mxu0 %v956
  %3018 = vmatmul.mubr.bf16.gmra.mrb[0].mxu0 %v955
  %v3019 = vpop.f32.mrb[0].mxu0
  %v3020 = vadd.f32 0.0, %v3019
  %v3021 = vpop.f32.mrb[0].mxu0
  %v3022 = vpop.f32.mrb[0].mxu0
  %v3023 = vadd.f32 0.0, %v3022
  %v3024 = vpop.f32.mrb[0].mxu0
  %3025 = vdwg.mxu0
  %3042 = vrot.lane.b32.xlu0 %v2849, 64
  %v3043 = vpop.permute.xlu0 %3042
  %3044 = vrot.lane.b32.xlu0 %v2850, 64
  %v3045 = vpop.permute.xlu0 %3044
  %3046 = vrot.lane.b32.xlu0 %v2851, 64
  %v3047 = vpop.permute.xlu0 %3046
  %3048 = vrot.lane.b32.xlu0 %v2852, 64
  %v3049 = vpop.permute.xlu0 %3048
  %3050 = vrot.lane.b32.xlu0 %v2853, 64
  %v3051 = vpop.permute.xlu0 %3050
  %3052 = vrot.lane.b32.xlu0 %v2854, 64
  %v3053 = vpop.permute.xlu0 %3052
  %3054 = vrot.lane.b32.xlu0 %v2855, 64
  %v3055 = vpop.permute.xlu0 %3054
  %3056 = vrot.lane.b32.xlu0 %v2856, 64
  %v3057 = vpop.permute.xlu0 %3056
  %3058 = vrot.lane.b32.xlu0 %v2857, 64
  %v3059 = vpop.permute.xlu0 %3058
  %3060 = vrot.lane.b32.xlu0 %v2858, 64
  %v3061 = vpop.permute.xlu0 %3060
  %3062 = vrot.lane.b32.xlu0 %v2859, 64
  %v3063 = vpop.permute.xlu0 %3062
  %3064 = vrot.lane.b32.xlu0 %v2860, 64
  %v3065 = vpop.permute.xlu0 %3064
  %3066 = vrot.lane.b32.xlu0 %v2861, 64
  %v3067 = vpop.permute.xlu0 %3066
  %3068 = vrot.lane.b32.xlu0 %v2862, 64
  %v3069 = vpop.permute.xlu0 %3068
  %3070 = vrot.lane.b32.xlu0 %v2863, 64
  %v3071 = vpop.permute.xlu0 %3070
  %3072 = vrot.lane.b32.xlu0 %v2864, 64
  %v3073 = vpop.permute.xlu0 %3072
  %3090 = vmatprep.subr.bf16.mxu0 0
  %3091 = vmatpush1.bf16.msra.mxu0 %v3043
  %3092 = vmatprep.subr.bf16.mxu0 0
  %3093 = vmatpush1.bf16.msra.mxu0 %v3045
  %3094 = vmatprep.subr.bf16.mxu0 0
  %3095 = vmatpush1.bf16.msra.mxu0 %v3047
  %3096 = vmatprep.subr.bf16.mxu0 0
  %3097 = vmatpush1.bf16.msra.mxu0 %v3049
  %3098 = vmatprep.subr.bf16.mxu0 0
  %3099 = vmatpush1.bf16.msra.mxu0 %v3051
  %3100 = vmatprep.subr.bf16.mxu0 0
  %3101 = vmatpush1.bf16.msra.mxu0 %v3053
  %3102 = vmatprep.subr.bf16.mxu0 0
  %3103 = vmatpush1.bf16.msra.mxu0 %v3055
  %3104 = vmatprep.subr.bf16.mxu0 0
  %3105 = vmatpush1.bf16.msra.mxu0 %v3057
  %3106 = vmatprep.subr.bf16.mxu0 0
  %3107 = vmatpush1.bf16.msra.mxu0 %v3059
  %3108 = vmatprep.subr.bf16.mxu0 0
  %3109 = vmatpush1.bf16.msra.mxu0 %v3061
  %3110 = vmatprep.subr.bf16.mxu0 0
  %3111 = vmatpush1.bf16.msra.mxu0 %v3063
  %3112 = vmatprep.subr.bf16.mxu0 0
  %3113 = vmatpush1.bf16.msra.mxu0 %v3065
  %3114 = vmatprep.subr.bf16.mxu0 0
  %3115 = vmatpush1.bf16.msra.mxu0 %v3067
  %3116 = vmatprep.subr.bf16.mxu0 0
  %3117 = vmatpush1.bf16.msra.mxu0 %v3069
  %3118 = vmatprep.subr.bf16.mxu0 0
  %3119 = vmatpush1.bf16.msra.mxu0 %v3071
  %3120 = vmatprep.subr.bf16.mxu0 0
  %3121 = vmatpush1.bf16.msra.mxu0 %v3073
  %3122 = vmatprep.mubr.bf16.mxu0 %v1279
  %3123 = vmatmul.mubr.bf16.gmra.mrb[0].mxu0 %v1278
  %v3124 = vpop.f32.mrb[0].mxu0
  %v3125 = vadd.f32 0.0, %v3124
  %v3126 = vpop.f32.mrb[0].mxu0
  %v3127 = vpop.f32.mrb[0].mxu0
  %v3128 = vadd.f32 0.0, %v3127
  %v3129 = vpop.f32.mrb[0].mxu0
  %3130 = vmatprep.mubr.bf16.mxu0 %v1281
  %3131 = vmatmul.mubr.bf16.gmra.mrb[0].mxu0 %v1280
  %v3132 = vpop.f32.mrb[0].mxu0
  %v3133 = vadd.f32 0.0, %v3132
  %v3134 = vpop.f32.mrb[0].mxu0
  %v3135 = vpop.f32.mrb[0].mxu0
  %v3136 = vadd.f32 0.0, %v3135
  %v3137 = vpop.f32.mrb[0].mxu0
  %3138 = vmatprep.mubr.bf16.mxu0 %v1283
  %3139 = vmatmul.mubr.bf16.gmra.mrb[0].mxu0 %v1282
  %v3140 = vpop.f32.mrb[0].mxu0
  %v3141 = vadd.f32 0.0, %v3140
  %v3142 = vpop.f32.mrb[0].mxu0
  %v3143 = vpop.f32.mrb[0].mxu0
  %v3144 = vadd.f32 0.0, %v3143
  %v3145 = vpop.f32.mrb[0].mxu0
  %3146 = vmatprep.mubr.bf16.mxu0 %v1285
  %3147 = vmatmul.mubr.bf16.gmra.mrb[0].mxu0 %v1284
  %v3148 = vpop.f32.mrb[0].mxu0
  %v3149 = vadd.f32 0.0, %v3148
  %v3150 = vpop.f32.mrb[0].mxu0
  %v3151 = vpop.f32.mrb[0].mxu0
  %v3152 = vadd.f32 0.0, %v3151
  %v3153 = vpop.f32.mrb[0].mxu0
  %3154 = vmatprep.mubr.bf16.mxu0 %v1287
  %3155 = vmatmul.mubr.bf16.gmra.mrb[0].mxu0 %v1286
  %v3156 = vpop.f32.mrb[0].mxu0
  %v3157 = vadd.f32 0.0, %v3156
  %v3158 = vpop.f32.mrb[0].mxu0
  %v3159 = vpop.f32.mrb[0].mxu0
  %v3160 = vadd.f32 0.0, %v3159
  %v3161 = vpop.f32.mrb[0].mxu0
  %3162 = vmatprep.mubr.bf16.mxu0 %v1289
  %3163 = vmatmul.mubr.bf16.gmra.mrb[0].mxu0 %v1288
  %v3164 = vpop.f32.mrb[0].mxu0
  %v3165 = vadd.f32 0.0, %v3164
  %v3166 = vpop.f32.mrb[0].mxu0
  %v3167 = vpop.f32.mrb[0].mxu0
  %v3168 = vadd.f32 0.0, %v3167
  %v3169 = vpop.f32.mrb[0].mxu0
  %3170 = vmatprep.mubr.bf16.mxu0 %v1291
  %3171 = vmatmul.mubr.bf16.gmra.mrb[0].mxu0 %v1290
  %v3172 = vpop.f32.mrb[0].mxu0
  %v3173 = vadd.f32 0.0, %v3172
  %v3174 = vpop.f32.mrb[0].mxu0
  %v3175 = vpop.f32.mrb[0].mxu0
  %v3176 = vadd.f32 0.0, %v3175
  %v3177 = vpop.f32.mrb[0].mxu0
  %3178 = vmatprep.mubr.bf16.mxu0 %v1293
  %3179 = vmatmul.mubr.bf16.gmra.mrb[0].mxu0 %v1292
  %v3180 = vpop.f32.mrb[0].mxu0
  %v3181 = vadd.f32 0.0, %v3180
  %v3182 = vpop.f32.mrb[0].mxu0
  %v3183 = vpop.f32.mrb[0].mxu0
  %v3184 = vadd.f32 0.0, %v3183
  %v3185 = vpop.f32.mrb[0].mxu0
  %3186 = vmatprep.mubr.bf16.mxu0 %v1295
  %3187 = vmatmul.mubr.bf16.gmra.mrb[0].mxu0 %v1294
  %v3188 = vpop.f32.mrb[0].mxu0
  %v3189 = vadd.f32 0.0, %v3188
  %v3190 = vpop.f32.mrb[0].mxu0
  %v3191 = vpop.f32.mrb[0].mxu0
  %v3192 = vadd.f32 0.0, %v3191
  %v3193 = vpop.f32.mrb[0].mxu0
  %3194 = vmatprep.mubr.bf16.mxu0 %v1297
  %3195 = vmatmul.mubr.bf16.gmra.mrb[0].mxu0 %v1296
  %v3196 = vpop.f32.mrb[0].mxu0
  %v3197 = vadd.f32 0.0, %v3196
  %v3198 = vpop.f32.mrb[0].mxu0
  %v3199 = vpop.f32.mrb[0].mxu0
  %v3200 = vadd.f32 0.0, %v3199
  %v3201 = vpop.f32.mrb[0].mxu0
  %3202 = vmatprep.mubr.bf16.mxu0 %v1299
  %3203 = vmatmul.mubr.bf16.gmra.mrb[0].mxu0 %v1298
  %v3204 = vpop.f32.mrb[0].mxu0
  %v3205 = vadd.f32 0.0, %v3204
  %v3206 = vpop.f32.mrb[0].mxu0
  %v3207 = vpop.f32.mrb[0].mxu0
  %v3208 = vadd.f32 0.0, %v3207
  %v3209 = vpop.f32.mrb[0].mxu0
  %3210 = vmatprep.mubr.bf16.mxu0 %v1301
  %3211 = vmatmul.mubr.bf16.gmra.mrb[0].mxu0 %v1300
  %v3212 = vpop.f32.mrb[0].mxu0
  %v3213 = vadd.f32 0.0, %v3212
  %v3214 = vpop.f32.mrb[0].mxu0
  %v3215 = vpop.f32.mrb[0].mxu0
  %v3216 = vadd.f32 0.0, %v3215
  %v3217 = vpop.f32.mrb[0].mxu0
  %3218 = vmatprep.mubr.bf16.mxu0 %v1303
  %3219 = vmatmul.mubr.bf16.gmra.mrb[0].mxu0 %v1302
  %v3220 = vpop.f32.mrb[0].mxu0
  %v3221 = vadd.f32 0.0, %v3220
  %v3222 = vpop.f32.mrb[0].mxu0
  %v3223 = vpop.f32.mrb[0].mxu0
  %v3224 = vadd.f32 0.0, %v3223
  %v3225 = vpop.f32.mrb[0].mxu0
  %3226 = vmatprep.mubr.bf16.mxu0 %v1305
  %3227 = vmatmul.mubr.bf16.gmra.mrb[0].mxu0 %v1304
  %v3228 = vpop.f32.mrb[0].mxu0
  %v3229 = vadd.f32 0.0, %v3228
  %v3230 = vpop.f32.mrb[0].mxu0
  %v3231 = vpop.f32.mrb[0].mxu0
  %v3232 = vadd.f32 0.0, %v3231
  %v3233 = vpop.f32.mrb[0].mxu0
  %3234 = vmatprep.mubr.bf16.mxu0 %v1307
  %3235 = vmatmul.mubr.bf16.gmra.mrb[0].mxu0 %v1306
  %v3236 = vpop.f32.mrb[0].mxu0
  %v3237 = vadd.f32 0.0, %v3236
  %v3238 = vpop.f32.mrb[0].mxu0
  %v3239 = vpop.f32.mrb[0].mxu0
  %v3240 = vadd.f32 0.0, %v3239
  %v3241 = vpop.f32.mrb[0].mxu0
  %3242 = vmatprep.mubr.bf16.mxu0 %v1309
  %3243 = vmatmul.mubr.bf16.gmra.mrb[0].mxu0 %v1308
  %v3244 = vpop.f32.mrb[0].mxu0
  %v3245 = vadd.f32 0.0, %v3244
  %v3246 = vpop.f32.mrb[0].mxu0
  %v3247 = vpop.f32.mrb[0].mxu0
  %v3248 = vadd.f32 0.0, %v3247
  %v3249 = vpop.f32.mrb[0].mxu0
  %3250 = vdwg.mxu0
  %3283 = vrot.lane.b32.xlu0 %v3125, 64
  %v3284 = vpop.permute.xlu0 %3283
  %3285 = vrot.lane.b32.xlu0 %v3128, 64
  %v3286 = vpop.permute.xlu0 %3285
  %3287 = vrot.lane.b32.xlu0 %v3133, 64
  %v3288 = vpop.permute.xlu0 %3287
  %3289 = vrot.lane.b32.xlu0 %v3136, 64
  %v3290 = vpop.permute.xlu0 %3289
  %3291 = vrot.lane.b32.xlu0 %v3141, 64
  %v3292 = vpop.permute.xlu0 %3291
  %3293 = vrot.lane.b32.xlu0 %v3144, 64
  %v3294 = vpop.permute.xlu0 %3293
  %3295 = vrot.lane.b32.xlu0 %v3149, 64
  %v3296 = vpop.permute.xlu0 %3295
  %3297 = vrot.lane.b32.xlu0 %v3152, 64
  %v3298 = vpop.permute.xlu0 %3297
  %3299 = vrot.lane.b32.xlu0 %v3157, 64
  %v3300 = vpop.permute.xlu0 %3299
  %3301 = vrot.lane.b32.xlu0 %v3160, 64
  %v3302 = vpop.permute.xlu0 %3301
  %3303 = vrot.lane.b32.xlu0 %v3165, 64
  %v3304 = vpop.permute.xlu0 %3303
  %3305 = vrot.lane.b32.xlu0 %v3168, 64
  %v3306 = vpop.permute.xlu0 %3305
  %3307 = vrot.lane.b32.xlu0 %v3173, 64
  %v3308 = vpop.permute.xlu0 %3307
  %3309 = vrot.lane.b32.xlu0 %v3176, 64
  %v3310 = vpop.permute.xlu0 %3309
  %3311 = vrot.lane.b32.xlu0 %v3181, 64
  %v3312 = vpop.permute.xlu0 %3311
  %3313 = vrot.lane.b32.xlu0 %v3184, 64
  %v3314 = vpop.permute.xlu0 %3313
  %3315 = vrot.lane.b32.xlu0 %v3189, 64
  %v3316 = vpop.permute.xlu0 %3315
  %3317 = vrot.lane.b32.xlu0 %v3192, 64
  %v3318 = vpop.permute.xlu0 %3317
  %3319 = vrot.lane.b32.xlu0 %v3197, 64
  %v3320 = vpop.permute.xlu0 %3319
  %3321 = vrot.lane.b32.xlu0 %v3200, 64
  %v3322 = vpop.permute.xlu0 %3321
  %3323 = vrot.lane.b32.xlu0 %v3205, 64
  %v3324 = vpop.permute.xlu0 %3323
  %3325 = vrot.lane.b32.xlu0 %v3208, 64
  %v3326 = vpop.permute.xlu0 %3325
  %3327 = vrot.lane.b32.xlu0 %v3213, 64
  %v3328 = vpop.permute.xlu0 %3327
  %3329 = vrot.lane.b32.xlu0 %v3216, 64
  %v3330 = vpop.permute.xlu0 %3329
  %3331 = vrot.lane.b32.xlu0 %v3221, 64
  %v3332 = vpop.permute.xlu0 %3331
  %3333 = vrot.lane.b32.xlu0 %v3224, 64
  %v3334 = vpop.permute.xlu0 %3333
  %3335 = vrot.lane.b32.xlu0 %v3229, 64
  %v3336 = vpop.permute.xlu0 %3335
  %3337 = vrot.lane.b32.xlu0 %v3232, 64
  %v3338 = vpop.permute.xlu0 %3337
  %3339 = vrot.lane.b32.xlu0 %v3237, 64
  %v3340 = vpop.permute.xlu0 %3339
  %3341 = vrot.lane.b32.xlu0 %v3240, 64
  %v3342 = vpop.permute.xlu0 %3341
  %3343 = vrot.lane.b32.xlu0 %v3245, 64
  %v3344 = vpop.permute.xlu0 %3343
  %3345 = vrot.lane.b32.xlu0 %v3248, 64
  %v3346 = vpop.permute.xlu0 %3345
  %v3379 = vsel %vm459, %v2900, %v3284
  %v3380 = vsel %vm459, %v2903, %v3286
  %v3381 = vsel %vm459, %v2908, %v3288
  %v3382 = vsel %vm459, %v2911, %v3290
  %v3383 = vsel %vm459, %v2916, %v3292
  %v3384 = vsel %vm459, %v2919, %v3294
  %v3385 = vsel %vm459, %v2924, %v3296
  %v3386 = vsel %vm459, %v2927, %v3298
  %v3387 = vsel %vm459, %v2932, %v3300
  %v3388 = vsel %vm459, %v2935, %v3302
  %v3389 = vsel %vm459, %v2940, %v3304
  %v3390 = vsel %vm459, %v2943, %v3306
  %v3391 = vsel %vm459, %v2948, %v3308
  %v3392 = vsel %vm459, %v2951, %v3310
  %v3393 = vsel %vm459, %v2956, %v3312
  %v3394 = vsel %vm459, %v2959, %v3314
  %v3395 = vsel %vm459, %v2964, %v3316
  %v3396 = vsel %vm459, %v2967, %v3318
  %v3397 = vsel %vm459, %v2972, %v3320
  %v3398 = vsel %vm459, %v2975, %v3322
  %v3399 = vsel %vm459, %v2980, %v3324
  %v3400 = vsel %vm459, %v2983, %v3326
  %v3401 = vsel %vm459, %v2988, %v3328
  %v3402 = vsel %vm459, %v2991, %v3330
  %v3403 = vsel %vm459, %v2996, %v3332
  %v3404 = vsel %vm459, %v2999, %v3334
  %v3405 = vsel %vm459, %v3004, %v3336
  %v3406 = vsel %vm459, %v3007, %v3338
  %v3407 = vsel %vm459, %v3012, %v3340
  %v3408 = vsel %vm459, %v3015, %v3342
  %v3409 = vsel %vm459, %v3020, %v3344
  %v3410 = vsel %vm459, %v3023, %v3346
  %v3411 = vld [vmem:[%s10] sm:$0x1]
  %v3413 = vlaneseq
  %v3414 = vshrl.u32 %v3413, 7
  %v3415 = vsub.s32 0, %v3414
  %v3416 = vrot.slane %v3411, %v3415
  %v3418 = vadd.f32 %v3379, %v3416
  %v3419 = vadd.f32 %v3380, %v3416
  %v3420 = vadd.f32 %v3381, %v3416
  %v3421 = vadd.f32 %v3382, %v3416
  %v3422 = vadd.f32 %v3383, %v3416
  %v3423 = vadd.f32 %v3384, %v3416
  %v3424 = vadd.f32 %v3385, %v3416
  %v3425 = vadd.f32 %v3386, %v3416
  %v3426 = vadd.f32 %v3387, %v3416
  %v3427 = vadd.f32 %v3388, %v3416
  %v3428 = vadd.f32 %v3389, %v3416
  %v3429 = vadd.f32 %v3390, %v3416
  %v3430 = vadd.f32 %v3391, %v3416
  %v3431 = vadd.f32 %v3392, %v3416
  %v3432 = vadd.f32 %v3393, %v3416
  %v3433 = vadd.f32 %v3394, %v3416
  %v3434 = vadd.f32 %v3395, %v3416
  %v3435 = vadd.f32 %v3396, %v3416
  %v3436 = vadd.f32 %v3397, %v3416
  %v3437 = vadd.f32 %v3398, %v3416
  %v3438 = vadd.f32 %v3399, %v3416
  %v3439 = vadd.f32 %v3400, %v3416
  %v3440 = vadd.f32 %v3401, %v3416
  %v3441 = vadd.f32 %v3402, %v3416
  %v3442 = vadd.f32 %v3403, %v3416
  %v3443 = vadd.f32 %v3404, %v3416
  %v3444 = vadd.f32 %v3405, %v3416
  %v3445 = vadd.f32 %v3406, %v3416
  %v3446 = vadd.f32 %v3407, %v3416
  %v3447 = vadd.f32 %v3408, %v3416
  %v3448 = vadd.f32 %v3409, %v3416
  %v3449 = vadd.f32 %v3410, %v3416
  %v3450 = vld [vmem:[%s11] sm:$0xff]
  %v3451 = vld [vmem:[%s12] sm:$0xff]
  %3452 = vmatprep.subr.mxu0 0.0
  %3453 = vmatpush1.xpose.msra.mxu0 %v1734
  %3454 = vmatprep.subr.mxu0 0.0
  %3455 = vmatpush1.xpose.msra.mxu0 %v1735
  %3456 = vmatprep.subr.mxu0 0.0
  %3457 = vmatpush1.xpose.msra.mxu0 %v1736
  %3458 = vmatprep.subr.mxu0 0.0
  %3459 = vmatpush1.xpose.msra.mxu0 %v1737
  %3460 = vmatprep.subr.mxu0 0.0
  %3461 = vmatpush1.xpose.msra.mxu0 %v1738
  %3462 = vmatprep.subr.mxu0 0.0
  %3463 = vmatpush1.xpose.msra.mxu0 %v1739
  %3464 = vmatprep.subr.mxu0 0.0
  %3465 = vmatpush1.xpose.msra.mxu0 %v1740
  %3466 = vmatprep.subr.mxu0 0.0
  %3467 = vmatpush1.xpose.msra.mxu0 %v1741
  %3468 = vmatprep.subr.mxu0 0.0
  %3469 = vmatpush1.xpose.msra.mxu0 %v1742
  %3470 = vmatprep.subr.mxu0 0.0
  %3471 = vmatpush1.xpose.msra.mxu0 %v1743
  %3472 = vmatprep.subr.mxu0 0.0
  %3473 = vmatpush1.xpose.msra.mxu0 %v1744
  %3474 = vmatprep.subr.mxu0 0.0
  %3475 = vmatpush1.xpose.msra.mxu0 %v1745
  %3476 = vmatprep.subr.mxu0 0.0
  %3477 = vmatpush1.xpose.msra.mxu0 %v1746
  %3478 = vmatprep.subr.mxu0 0.0
  %3479 = vmatpush1.xpose.msra.mxu0 %v1747
  %3480 = vmatprep.subr.mxu0 0.0
  %3481 = vmatpush1.xpose.msra.mxu0 %v1748
  %3482 = vmatprep.subr.mxu0 0.0
  %3483 = vmatpush1.xpose.msra.mxu0 %v1749
  %3484 = vmatprep.subr.mxu0 0.0
  %3485 = vmatpush1.xpose.msra.mxu0 %v1750
  %3486 = vmatprep.subr.mxu0 0.0
  %3487 = vmatpush1.xpose.msra.mxu0 %v1751
  %3488 = vmatprep.subr.mxu0 0.0
  %3489 = vmatpush1.xpose.msra.mxu0 %v1752
  %3490 = vmatprep.subr.mxu0 0.0
  %3491 = vmatpush1.xpose.msra.mxu0 %v1753
  %3492 = vmatprep.subr.mxu0 0.0
  %3493 = vmatpush1.xpose.msra.mxu0 %v1754
  %3494 = vmatprep.subr.mxu0 0.0
  %3495 = vmatpush1.xpose.msra.mxu0 %v1755
  %3496 = vmatprep.subr.mxu0 0.0
  %3497 = vmatpush1.xpose.msra.mxu0 %v1756
  %3498 = vmatprep.subr.mxu0 0.0
  %3499 = vmatpush1.xpose.msra.mxu0 %v1757
  %3500 = vmatprep.subr.mxu0 0.0
  %3501 = vmatpush1.xpose.msra.mxu0 %v1758
  %3502 = vmatprep.subr.mxu0 0.0
  %3503 = vmatpush1.xpose.msra.mxu0 %v1759
  %3504 = vmatprep.subr.mxu0 0.0
  %3505 = vmatpush1.xpose.msra.mxu0 %v1760
  %3506 = vmatprep.subr.mxu0 0.0
  %3507 = vmatpush1.xpose.msra.mxu0 %v1761
  %3508 = vmatprep.subr.mxu0 0.0
  %3509 = vmatpush1.xpose.msra.mxu0 %v1762
  %3510 = vmatprep.subr.mxu0 0.0
  %3511 = vmatpush1.xpose.msra.mxu0 %v1763
  %3512 = vmatprep.subr.mxu0 0.0
  %3513 = vmatpush1.xpose.msra.mxu0 %v1764
  %3514 = vmatprep.subr.mxu0 0.0
  %3515 = vmatpush1.xpose.msra.mxu0 %v1765
  %3516 = vmatprep.mubr.f32.mxu0 0.0
  %3517 = vmatmul.mubr.f32.gmra.mrb[0].mxu0 %v3451
  %v3518 = vpop.f32.mrb[0].mxu0
  %v3519 = vadd.f32 0.0, %v3518
  %v3520 = vpop.f32.mrb[0].mxu0
  %v3521 = vadd.f32 0.0, %v3520
  %3522 = vdwg.mxu0
  %v3524 = vsel %vm459, %v3450, 0
  %3526 = vmatprep.subr.mxu0 0.0
  %3527 = vmatpush1.xpose.msra.mxu0 %v461
  %3528 = vmatprep.subr.mxu0 0.0
  %3529 = vmatpush1.xpose.msra.mxu0 %v464
  %3530 = vmatprep.subr.mxu0 0.0
  %3531 = vmatpush1.xpose.msra.mxu0 %v467
  %3532 = vmatprep.subr.mxu0 0.0
  %3533 = vmatpush1.xpose.msra.mxu0 %v470
  %3534 = vmatprep.subr.mxu0 0.0
  %3535 = vmatpush1.xpose.msra.mxu0 %v473
  %3536 = vmatprep.subr.mxu0 0.0
  %3537 = vmatpush1.xpose.msra.mxu0 %v476
  %3538 = vmatprep.subr.mxu0 0.0
  %3539 = vmatpush1.xpose.msra.mxu0 %v479
  %3540 = vmatprep.subr.mxu0 0.0
  %3541 = vmatpush1.xpose.msra.mxu0 %v482
  %3542 = vmatprep.subr.mxu0 0.0
  %3543 = vmatpush1.xpose.msra.mxu0 %v485
  %3544 = vmatprep.subr.mxu0 0.0
  %3545 = vmatpush1.xpose.msra.mxu0 %v488
  %3546 = vmatprep.subr.mxu0 0.0
  %3547 = vmatpush1.xpose.msra.mxu0 %v491
  %3548 = vmatprep.subr.mxu0 0.0
  %3549 = vmatpush1.xpose.msra.mxu0 %v494
  %3550 = vmatprep.subr.mxu0 0.0
  %3551 = vmatpush1.xpose.msra.mxu0 %v497
  %3552 = vmatprep.subr.mxu0 0.0
  %3553 = vmatpush1.xpose.msra.mxu0 %v500
  %3554 = vmatprep.subr.mxu0 0.0
  %3555 = vmatpush1.xpose.msra.mxu0 %v503
  %3556 = vmatprep.subr.mxu0 0.0
  %3557 = vmatpush1.xpose.msra.mxu0 %v506
  %3558 = vmatprep.subr.mxu0 0.0
  %3559 = vmatpush1.xpose.msra.mxu0 %v509
  %3560 = vmatprep.subr.mxu0 0.0
  %3561 = vmatpush1.xpose.msra.mxu0 %v512
  %3562 = vmatprep.subr.mxu0 0.0
  %3563 = vmatpush1.xpose.msra.mxu0 %v515
  %3564 = vmatprep.subr.mxu0 0.0
  %3565 = vmatpush1.xpose.msra.mxu0 %v518
  %3566 = vmatprep.subr.mxu0 0.0
  %3567 = vmatpush1.xpose.msra.mxu0 %v521
  %3568 = vmatprep.subr.mxu0 0.0
  %3569 = vmatpush1.xpose.msra.mxu0 %v524
  %3570 = vmatprep.subr.mxu0 0.0
  %3571 = vmatpush1.xpose.msra.mxu0 %v527
  %3572 = vmatprep.subr.mxu0 0.0
  %3573 = vmatpush1.xpose.msra.mxu0 %v530
  %3574 = vmatprep.subr.mxu0 0.0
  %3575 = vmatpush1.xpose.msra.mxu0 %v533
  %3576 = vmatprep.subr.mxu0 0.0
  %3577 = vmatpush1.xpose.msra.mxu0 %v536
  %3578 = vmatprep.subr.mxu0 0.0
  %3579 = vmatpush1.xpose.msra.mxu0 %v539
  %3580 = vmatprep.subr.mxu0 0.0
  %3581 = vmatpush1.xpose.msra.mxu0 %v542
  %3582 = vmatprep.subr.mxu0 0.0
  %3583 = vmatpush1.xpose.msra.mxu0 %v545
  %3584 = vmatprep.subr.mxu0 0.0
  %3585 = vmatpush1.xpose.msra.mxu0 %v548
  %3586 = vmatprep.subr.mxu0 0.0
  %3587 = vmatpush1.xpose.msra.mxu0 %v551
  %3588 = vmatprep.subr.mxu0 0.0
  %3589 = vmatpush1.xpose.msra.mxu0 %v554
  %3590 = vmatprep.mubr.f32.mxu0 0.0
  %3591 = vmatmul.mubr.f32.gmra.mrb[0].mxu0 %v3524
  %v3592 = vpop.f32.mrb[0].mxu0
  %v3593 = vadd.f32 %v3519, %v3592
  %v3594 = vpop.f32.mrb[0].mxu0
  %v3595 = vadd.f32 %v3521, %v3594
  %3596 = vdwg.mxu0
  %v3597 = vld [vmem:[%s13] sm:$0xff]
  %3598 = vmatprep.subr.mxu0 0.0
  %3599 = vmatpush1.xpose.msra.mxu0 %v2576
  %3600 = vmatprep.subr.mxu0 0.0
  %3601 = vmatpush1.xpose.msra.mxu0 %v2577
  %3602 = vmatprep.subr.mxu0 0.0
  %3603 = vmatpush1.xpose.msra.mxu0 %v2578
  %3604 = vmatprep.subr.mxu0 0.0
  %3605 = vmatpush1.xpose.msra.mxu0 %v2579
  %3606 = vmatprep.subr.mxu0 0.0
  %3607 = vmatpush1.xpose.msra.mxu0 %v2580
  %3608 = vmatprep.subr.mxu0 0.0
  %3609 = vmatpush1.xpose.msra.mxu0 %v2581
  %3610 = vmatprep.subr.mxu0 0.0
  %3611 = vmatpush1.xpose.msra.mxu0 %v2582
  %3612 = vmatprep.subr.mxu0 0.0
  %3613 = vmatpush1.xpose.msra.mxu0 %v2583
  %3614 = vmatprep.subr.mxu0 0.0
  %3615 = vmatpush1.xpose.msra.mxu0 %v2584
  %3616 = vmatprep.subr.mxu0 0.0
  %3617 = vmatpush1.xpose.msra.mxu0 %v2585
  %3618 = vmatprep.subr.mxu0 0.0
  %3619 = vmatpush1.xpose.msra.mxu0 %v2586
  %3620 = vmatprep.subr.mxu0 0.0
  %3621 = vmatpush1.xpose.msra.mxu0 %v2587
  %3622 = vmatprep.subr.mxu0 0.0
  %3623 = vmatpush1.xpose.msra.mxu0 %v2588
  %3624 = vmatprep.subr.mxu0 0.0
  %3625 = vmatpush1.xpose.msra.mxu0 %v2589
  %3626 = vmatprep.subr.mxu0 0.0
  %3627 = vmatpush1.xpose.msra.mxu0 %v2590
  %3628 = vmatprep.subr.mxu0 0.0
  %3629 = vmatpush1.xpose.msra.mxu0 %v2591
  %3630 = vmatprep.subr.mxu0 0.0
  %3631 = vmatpush1.xpose.msra.mxu0 %v2592
  %3632 = vmatprep.subr.mxu0 0.0
  %3633 = vmatpush1.xpose.msra.mxu0 %v2593
  %3634 = vmatprep.subr.mxu0 0.0
  %3635 = vmatpush1.xpose.msra.mxu0 %v2594
  %3636 = vmatprep.subr.mxu0 0.0
  %3637 = vmatpush1.xpose.msra.mxu0 %v2595
  %3638 = vmatprep.subr.mxu0 0.0
  %3639 = vmatpush1.xpose.msra.mxu0 %v2596
  %3640 = vmatprep.subr.mxu0 0.0
  %3641 = vmatpush1.xpose.msra.mxu0 %v2597
  %3642 = vmatprep.subr.mxu0 0.0
  %3643 = vmatpush1.xpose.msra.mxu0 %v2598
  %3644 = vmatprep.subr.mxu0 0.0
  %3645 = vmatpush1.xpose.msra.mxu0 %v2599
  %3646 = vmatprep.subr.mxu0 0.0
  %3647 = vmatpush1.xpose.msra.mxu0 %v2600
  %3648 = vmatprep.subr.mxu0 0.0
  %3649 = vmatpush1.xpose.msra.mxu0 %v2601
  %3650 = vmatprep.subr.mxu0 0.0
  %3651 = vmatpush1.xpose.msra.mxu0 %v2602
  %3652 = vmatprep.subr.mxu0 0.0
  %3653 = vmatpush1.xpose.msra.mxu0 %v2603
  %3654 = vmatprep.subr.mxu0 0.0
  %3655 = vmatpush1.xpose.msra.mxu0 %v2604
  %3656 = vmatprep.subr.mxu0 0.0
  %3657 = vmatpush1.xpose.msra.mxu0 %v2605
  %3658 = vmatprep.subr.mxu0 0.0
  %3659 = vmatpush1.xpose.msra.mxu0 %v2606
  %3660 = vmatprep.subr.mxu0 0.0
  %3661 = vmatpush1.xpose.msra.mxu0 %v2607
  %3662 = vmatprep.mubr.f32.mxu0 0.0
  %3663 = vmatmul.mubr.f32.gmra.mrb[0].mxu0 %v3597
  %v3664 = vpop.f32.mrb[0].mxu0
  %v3665 = vadd.f32 0.0, %v3664
  %v3666 = vpop.f32.mrb[0].mxu0
  %v3667 = vadd.f32 0.0, %v3666
  %3668 = vdwg.mxu0
  %v3669 = vadd.f32 %v3593, %v3665
  %v3670 = vadd.f32 %v3595, %v3667
  %v3671 = vld [vmem:[%s14] sm:$0xff]
  %3672 = vmatprep.subr.mxu0 0.0
  %3673 = vmatpush1.xpose.msra.mxu0 %v3418
  %3674 = vmatprep.subr.mxu0 0.0
  %3675 = vmatpush1.xpose.msra.mxu0 %v3419
  %3676 = vmatprep.subr.mxu0 0.0
  %3677 = vmatpush1.xpose.msra.mxu0 %v3420
  %3678 = vmatprep.subr.mxu0 0.0
  %3679 = vmatpush1.xpose.msra.mxu0 %v3421
  %3680 = vmatprep.subr.mxu0 0.0
  %3681 = vmatpush1.xpose.msra.mxu0 %v3422
  %3682 = vmatprep.subr.mxu0 0.0
  %3683 = vmatpush1.xpose.msra.mxu0 %v3423
  %3684 = vmatprep.subr.mxu0 0.0
  %3685 = vmatpush1.xpose.msra.mxu0 %v3424
  %3686 = vmatprep.subr.mxu0 0.0
  %3687 = vmatpush1.xpose.msra.mxu0 %v3425
  %3688 = vmatprep.subr.mxu0 0.0
  %3689 = vmatpush1.xpose.msra.mxu0 %v3426
  %3690 = vmatprep.subr.mxu0 0.0
  %3691 = vmatpush1.xpose.msra.mxu0 %v3427
  %3692 = vmatprep.subr.mxu0 0.0
  %3693 = vmatpush1.xpose.msra.mxu0 %v3428
  %3694 = vmatprep.subr.mxu0 0.0
  %3695 = vmatpush1.xpose.msra.mxu0 %v3429
  %3696 = vmatprep.subr.mxu0 0.0
  %3697 = vmatpush1.xpose.msra.mxu0 %v3430
  %3698 = vmatprep.subr.mxu0 0.0
  %3699 = vmatpush1.xpose.msra.mxu0 %v3431
  %3700 = vmatprep.subr.mxu0 0.0
  %3701 = vmatpush1.xpose.msra.mxu0 %v3432
  %3702 = vmatprep.subr.mxu0 0.0
  %3703 = vmatpush1.xpose.msra.mxu0 %v3433
  %3704 = vmatprep.subr.mxu0 0.0
  %3705 = vmatpush1.xpose.msra.mxu0 %v3434
  %3706 = vmatprep.subr.mxu0 0.0
  %3707 = vmatpush1.xpose.msra.mxu0 %v3435
  %3708 = vmatprep.subr.mxu0 0.0
  %3709 = vmatpush1.xpose.msra.mxu0 %v3436
  %3710 = vmatprep.subr.mxu0 0.0
  %3711 = vmatpush1.xpose.msra.mxu0 %v3437
  %3712 = vmatprep.subr.mxu0 0.0
  %3713 = vmatpush1.xpose.msra.mxu0 %v3438
  %3714 = vmatprep.subr.mxu0 0.0
  %3715 = vmatpush1.xpose.msra.mxu0 %v3439
  %3716 = vmatprep.subr.mxu0 0.0
  %3717 = vmatpush1.xpose.msra.mxu0 %v3440
  %3718 = vmatprep.subr.mxu0 0.0
  %3719 = vmatpush1.xpose.msra.mxu0 %v3441
  %3720 = vmatprep.subr.mxu0 0.0
  %3721 = vmatpush1.xpose.msra.mxu0 %v3442
  %3722 = vmatprep.subr.mxu0 0.0
  %3723 = vmatpush1.xpose.msra.mxu0 %v3443
  %3724 = vmatprep.subr.mxu0 0.0
  %3725 = vmatpush1.xpose.msra.mxu0 %v3444
  %3726 = vmatprep.subr.mxu0 0.0
  %3727 = vmatpush1.xpose.msra.mxu0 %v3445
  %3728 = vmatprep.subr.mxu0 0.0
  %3729 = vmatpush1.xpose.msra.mxu0 %v3446
  %3730 = vmatprep.subr.mxu0 0.0
  %3731 = vmatpush1.xpose.msra.mxu0 %v3447
  %3732 = vmatprep.subr.mxu0 0.0
  %3733 = vmatpush1.xpose.msra.mxu0 %v3448
  %3734 = vmatprep.subr.mxu0 0.0
  %3735 = vmatpush1.xpose.msra.mxu0 %v3449
  %3736 = vmatprep.mubr.f32.mxu0 0.0
  %3737 = vmatmul.mubr.f32.gmra.mrb[0].mxu0 %v3671
  %v3738 = vpop.f32.mrb[0].mxu0
  %v3739 = vadd.f32 0.0, %v3738
  %v3740 = vpop.f32.mrb[0].mxu0
  %v3741 = vadd.f32 0.0, %v3740
  %3742 = vdwg.mxu0
  %v3743 = vadd.f32 %v3669, %v3739
  %v3744 = vadd.f32 %v3670, %v3741
  %v3745 = vld [vmem:[#allocation2] sm:$0x1]
  %3747 = vset.pattern.permute.xlu0 0
  %3748 = vperm.xlu0 %3747, %v3745
  %v3749 = vpop.permute.xlu0 %3748
  %v3751 = vlaneseq
  %v3752 = vshrl.u32 %v3751, 7
  %v3753 = vsub.s32 0, %v3752
  %v3754 = vrot.slane %v3749, %v3753
  %v3755 = vadd.f32 %v3743, %v3754
  %v3756 = vadd.f32 %v3744, %v3754
  %v3759 = vcombine.low %v3755, %v3756
  %v3761 = vunpack.c.l.s4 1966171168
  %v3762 = vunpack.c.0.s8 %v3761
  %v3763 = vlaneseq
  %v3764 = vshrl.u32 %v3763, 7
  %v3765 = vsub.s32 %v3762, %v3764
  %v3766 = vrot.slane %v3759, %v3765
  %v3768 = vunpack.c.l.s4 1966171168
  %v3769 = vunpack.c.0.s8 %v3768
  %v3770 = vlaneseq
  %v3771 = vshrl.u32 %v3770, 7
  %v3772 = vsub.s32 %v3769, %v3771
  %v3773 = vrot.slane %v3766, %v3772
  %v3775 = vlaneseq
  %vm3776 = vcmp.ge.s32.totalorder %v3775, 0
  %vm3777 = vcmp.lt.s32.totalorder %v3775, 256
  %vm3778 = vmand %vm3776, %vm3777
  %3779 = vst.msk [vmem:[%s16] sm:$0x3] %vm3778, %v3773
  // Predicated region
  $region66: #{hgdc_forward.1} parent=0 // pred_check
    _
  $region67: #{hgdc_forward.1} parent=0 // pred_check_branch
    %3781 = sbr.rel (0) target = $region69
  $region68: #{hgdc_forward.1} parent=0 // pred_region
    _
  $region69: #{hgdc_forward.1} parent=0 // pred_fallthru
    _
  // Predicated region
  $region70: #{hgdc_forward.1} parent=0 // pred_check
    _
  $region71: #{hgdc_forward.1} parent=0 // pred_check_branch
    %3783 = sbr.rel (0) target = $region73
  $region72: #{hgdc_forward.1} parent=0 // pred_region
    _
  $region73: #{hgdc_forward.1} parent=0 // pred_fallthru
    _

</llo_original>
